<compile_context>
chip_gen: v6e
topology: v6e:2x2x1
jax: 0.10.0
libtpu: 0.0.40
codegen_flags: <defaults>
</compile_context>

<pallas_src>
import functools
import math

import jax
import jax.numpy as jnp
import numpy as np
from jax.experimental import pallas as pl
from jax.experimental.pallas import tpu as pltpu

VMEM_LIMIT_BYTES = 48 * 1024 * 1024   # > 16/32 MiB defaults, < 64 MiB v7x physical
Y_RESIDENT_BYTES = 8 * 1024 * 1024    # Y kept fully VMEM-resident below this size


def _round_up(v, m):
    return ((v + m - 1) // m) * m


# ---------------------------------------------------------------------------
# Kernel 1: premix  --  Y0 = concat(X @ W0, Xperm @ W0) along the lane axis.
# (DMA-bound on X; f_in is kept unpadded so no zero bytes are streamed.)
# ---------------------------------------------------------------------------
def premix_kernel(x_ref, xp_ref, w_ref, o_ref, *, hp):
    w = w_ref[...]
    o_ref[:, :hp] = jnp.dot(
        x_ref[...], w, preferred_element_type=jnp.float32).astype(o_ref.dtype)
    o_ref[:, hp:] = jnp.dot(
        xp_ref[...], w, preferred_element_type=jnp.float32).astype(o_ref.dtype)


def premix(x, xp, w0, *, blk_m):
    n_pad, f_in = x.shape
    hp = w0.shape[1]
    return pl.pallas_call(
        functools.partial(premix_kernel, hp=hp),
        out_shape=jax.ShapeDtypeStruct((n_pad, 2 * hp), jnp.bfloat16),
        grid=(n_pad // blk_m,),
        in_specs=[
            pl.BlockSpec((blk_m, f_in), lambda i: (i, 0)),
            pl.BlockSpec((blk_m, f_in), lambda i: (i, 0)),
            pl.BlockSpec((f_in, hp), lambda i: (0, 0)),
        ],
        out_specs=pl.BlockSpec((blk_m, 2 * hp), lambda i: (i, 0)),
        compiler_params=pltpu.CompilerParams(
            dimension_semantics=("parallel",),
            vmem_limit_bytes=VMEM_LIMIT_BYTES),
    )(x, xp, w0)


# ---------------------------------------------------------------------------
# Kernel 2: K-tiled GCN propagation  out = act(A @ Y) [@ blockdiag(W1,W1)].
# Y has 2*Hp lanes: [pos | neg].  Y is either streamed as K-stripes or kept
# fully VMEM-resident (constant block index) and sliced in-kernel.
# ---------------------------------------------------------------------------
def _load_y_stripe(y_ref, *, blk_k, y_resident):
    if y_resident:
        k0 = pl.multiple_of(pl.program_id(1) * blk_k, blk_k)
        return y_ref[pl.ds(k0, blk_k), :]
    return y_ref[...]


def _accumulate(a_ref, y_stripe, acc_ref):
    @pl.when(pl.program_id(1) == 0)
    def _():
        acc_ref[...] = jnp.zeros_like(acc_ref)

    acc_ref[...] += jnp.dot(a_ref[...], y_stripe,
                            preferred_element_type=jnp.float32)


def gcn_layer1_kernel(a_ref, y_ref, wbd_ref, o_ref, acc_ref, *, blk_k, y_resident):
    """out = relu(A @ Y) @ blockdiag(W1, W1)  (one 2Hp-wide matmul + store)."""
    _accumulate(a_ref,
                _load_y_stripe(y_ref, blk_k=blk_k, y_resident=y_resident),
                acc_ref)

    @pl.when(pl.program_id(1) == pl.num_programs(1) - 1)
    def _():
        h = jnp.maximum(acc_ref[...], 0.0).astype(jnp.bfloat16)
        o_ref[...] = jnp.dot(h, wbd_ref[...],
                             preferred_element_type=jnp.float32).astype(o_ref.dtype)


def gcn_layer2_kernel(a_ref, y_ref, o_ref, psum_ref, acc_ref, *,
                      blk_k, hp, y_resident):
    """out = A @ Y (bf16) + per-row-block column sums of the positive half."""
    _accumulate(a_ref,
                _load_y_stripe(y_ref, blk_k=blk_k, y_resident=y_resident),
                acc_ref)

    @pl.when(pl.program_id(1) == pl.num_programs(1) - 1)
    def _():
        o_ref[...] = acc_ref[...].astype(o_ref.dtype)
        col_sum = jnp.sum(acc_ref[:, :hp], axis=0, keepdims=True)   # [1, Hp] f32
        psum_ref[...] = col_sum.reshape(1, 1, hp)


def gcn_propagate(a, y, w_bd=None, *, blk_m, blk_k, hp, y_resident):
    n_pad = a.shape[0]
    f = y.shape[1]                       # 2 * Hp
    grid = (n_pad // blk_m, n_pad // blk_k)

    a_spec = pl.BlockSpec((blk_m, blk_k), lambda i, k: (i, k))
    if y_resident:
        # Whole Y in VMEM, constant block index -> DMA'd once; only A streams.
        y_spec = pl.BlockSpec((n_pad, f), lambda i, k: (0, 0))
    else:
        y_spec = pl.BlockSpec((blk_k, f), lambda i, k: (k, 0))

    in_specs = [a_spec, y_spec]
    operands = [a, y]
    if w_bd is not None:
        in_specs.append(pl.BlockSpec((f, f), lambda i, k: (0, 0)))
        operands.append(w_bd)
        kernel = functools.partial(gcn_layer1_kernel,
                                   blk_k=blk_k, y_resident=y_resident)
        out_shape = jax.ShapeDtypeStruct((n_pad, f), jnp.bfloat16)
        out_specs = pl.BlockSpec((blk_m, f), lambda i, k: (i, 0))
    else:
        kernel = functools.partial(gcn_layer2_kernel,
                                   blk_k=blk_k, hp=hp, y_resident=y_resident)
        out_shape = (jax.ShapeDtypeStruct((n_pad, f), jnp.bfloat16),
                     jax.ShapeDtypeStruct((n_pad // blk_m, 1, hp), jnp.float32))
        out_specs = (pl.BlockSpec((blk_m, f), lambda i, k: (i, 0)),
                     pl.BlockSpec((1, 1, hp), lambda i, k: (i, 0, 0)))

    return pl.pallas_call(
        kernel,
        out_shape=out_shape,
        grid=grid,
        in_specs=in_specs,
        out_specs=out_specs,
        scratch_shapes=[pltpu.VMEM((blk_m, f), jnp.float32)],
        compiler_params=pltpu.CompilerParams(
            dimension_semantics=("parallel", "arbitrary"),
            vmem_limit_bytes=VMEM_LIMIT_BYTES),
    )(*operands)


# ---------------------------------------------------------------------------
# Kernel 3: tiled DGI head.  ws = W_d @ mean(pos) is an Hp-vector computed from
# the layer-2 partial sums; the head streams h2 in row blocks, computes
# [-pos·ws, neg·ws] via one MXU matmul against precomputed ±ws columns, and
# accumulates the masked BCE-with-logits loss into an SMEM scalar.
# ---------------------------------------------------------------------------
def dgi_head_kernel(h2_ref, wcols_ref, loss_ref, *, blk_m, n_valid):
    i = pl.program_id(0)

    @pl.when(i == 0)
    def _():
        loss_ref[0, 0] = jnp.float32(0.0)

    h2 = h2_ref[...].astype(jnp.float32)                              # [blk, 2Hp]
    # col 0 = [-ws; 0] -> -pos_logits ; col 1 = [0; ws] -> neg_logits
    logits = jnp.dot(h2, wcols_ref[...],
                     preferred_element_type=jnp.float32)              # [blk, 128]

    sp = jnp.maximum(logits, 0.0) + jnp.log1p(jnp.exp(-jnp.abs(logits)))

    lane = jax.lax.broadcasted_iota(jnp.int32, (blk_m, 128), 1)
    row = jax.lax.broadcasted_iota(jnp.int32, (blk_m, 128), 0) + i * blk_m
    mask = jnp.logical_and(lane < 2, row < n_valid).astype(jnp.float32)

    contrib = jnp.sum(sp * mask)
    loss_ref[0, 0] += contrib * (1.0 / float(n_valid))


def dgi_head(h2, wcols, *, blk_m, n_valid):
    n_pad, f = h2.shape
    return pl.pallas_call(
        functools.partial(dgi_head_kernel, blk_m=blk_m, n_valid=n_valid),
        out_shape=jax.ShapeDtypeStruct((1, 1), jnp.float32),
        grid=(n_pad // blk_m,),
        in_specs=[
            pl.BlockSpec((blk_m, f), lambda i: (i, 0)),
            pl.BlockSpec((f, 128), lambda i: (0, 0)),
        ],
        out_specs=pl.BlockSpec((1, 1), lambda i: (0, 0),
                               memory_space=pltpu.MemorySpace.SMEM),
        compiler_params=pltpu.CompilerParams(
            dimension_semantics=("arbitrary",),
            vmem_limit_bytes=VMEM_LIMIT_BYTES),
    )(h2, wcols)


# ---------------------------------------------------------------------------
# Parameter / graph preparation (done once, outside the per-step forward).
# ---------------------------------------------------------------------------
def choose_blocks(n):
    blk = min(512, _round_up(n, 128))
    n_pad = _round_up(n, blk)
    return blk, n_pad


def prepare_params(w0, w1, w_disc):
    f_in, h = w0.shape
    hp = _round_up(h, 128)
    w0p = jnp.zeros((f_in, hp), jnp.bfloat16).at[:, :h].set(w0.astype(jnp.bfloat16))
    w1b = w1.astype(jnp.bfloat16)
    w1bd = jnp.zeros((2 * hp, 2 * hp), jnp.bfloat16)
    w1bd = w1bd.at[:h, :h].set(w1b).at[hp:hp + h, hp:hp + h].set(w1b)
    wdp = jnp.zeros((hp, hp), jnp.float32).at[:h, :h].set(w_disc)
    return w0p, w1bd, wdp, hp


def prepare_adjacency(a_hat, n_pad):
    # Pad + cast A once; it is reused by both GCN layers and across steps.
    n = a_hat.shape[0]
    return jnp.zeros((n_pad, n_pad), jnp.bfloat16).at[:n, :n].set(
        a_hat.astype(jnp.bfloat16))


# ---------------------------------------------------------------------------
# Forward pass.
# ---------------------------------------------------------------------------
def dgi_forward(ab, x, perm, w0p, w1bd, wdp, *, n, h, hp, blk):
    n_pad = ab.shape[0]
    f_in = x.shape[1]

    # corruption branch: permute node-feature rows (torch.randperm analogue)
    # TODO(synk): the NodeFlow edge-feature permutation has no equivalent here
    # (this dense GCN path consumes no edge features).
    xp = x[perm]

    xb = jnp.zeros((n_pad, f_in), jnp.bfloat16).at[:n].set(x.astype(jnp.bfloat16))
    xpb = jnp.zeros((n_pad, f_in), jnp.bfloat16).at[:n].set(xp.astype(jnp.bfloat16))

    y_resident = (n_pad * 2 * hp * 2) <= Y_RESIDENT_BYTES

    y0 = premix(xb, xpb, w0p, blk_m=blk)                       # [Np, 2Hp] bf16
    y1 = gcn_propagate(ab, y0, w1bd, blk_m=blk, blk_k=blk,
                       hp=hp, y_resident=y_resident)           # relu(A@Y0)@blockdiag(W1)
    h2, psum = gcn_propagate(ab, y1, None, blk_m=blk, blk_k=blk,
                             hp=hp, y_resident=y_resident)     # A@Y1 (bf16) + pos col-sums

    # summary / ws are Hp-sized vectors: negligible glue done in plain jnp.
    s = jnp.sum(psum[:, 0, :], axis=0) * (1.0 / n)             # mean of pos rows, f32
    ws = wdp @ s                                               # W_d @ summary
    wcols = jnp.zeros((2 * hp, 128), jnp.float32)
    wcols = wcols.at[:hp, 0].set(-ws).at[hp:, 1].set(ws)       # [-ws;0] | [0;ws]

    loss = dgi_head(h2, wcols, blk_m=blk, n_valid=n)[0, 0]

    positive = h2[:n, :h].astype(jnp.float32)
    negative = h2[:n, hp:hp + h].astype(jnp.float32)
    return loss, positive, negative


# ---------------------------------------------------------------------------
# Pure-JAX f32 reference (silent sanity check)
# ---------------------------------------------------------------------------
def reference(a_hat, x, w0, w1, w_disc, perm):
    def enc(xx):
        h1 = jnp.maximum(a_hat @ (xx @ w0), 0.0)
        return a_hat @ (h1 @ w1)

    pos = enc(x)
    neg = enc(x[perm])
    s = pos.mean(axis=0)
    pos_logits = pos @ (w_disc @ s)
    neg_logits = neg @ (w_disc @ s)
    sp = lambda z: jnp.maximum(z, 0.0) + jnp.log1p(jnp.exp(-jnp.abs(z)))
    return jnp.mean(sp(-pos_logits)) + jnp.mean(sp(neg_logits))


if __name__ == "__main__":
    N = 200          # nodes in the minibatch (deliberately not a 128 multiple)
    IN_FEATS = 64    # input node-feature dim
    N_HIDDEN = 32    # hidden dim (n_hidden == n_classes in DGI)

    key = jax.random.PRNGKey(0)
    k_x, k_a, k_w0, k_w1, k_wd, k_perm = jax.random.split(key, 6)

    # node features
    x = jax.random.normal(k_x, (N, IN_FEATS), dtype=jnp.float32)

    # synthetic graph: random symmetric adjacency + self loops, sym-normalised
    adj = (jax.random.uniform(k_a, (N, N)) < 0.1).astype(jnp.float32)
    adj = jnp.maximum(adj, adj.T)
    adj = adj + jnp.eye(N, dtype=jnp.float32)
    deg = adj.sum(axis=1)
    d_inv_sqrt = 1.0 / jnp.sqrt(deg)
    a_hat = adj * d_inv_sqrt[:, None] * d_inv_sqrt[None, :]

    # encoder weights (glorot-ish), discriminator weight like reset_parameters
    w0 = jax.random.normal(k_w0, (IN_FEATS, N_HIDDEN), jnp.float32) / math.sqrt(IN_FEATS)
    w1 = jax.random.normal(k_w1, (N_HIDDEN, N_HIDDEN), jnp.float32) / math.sqrt(N_HIDDEN)
    bound = 1.0 / math.sqrt(N_HIDDEN)
    w_disc = jax.random.uniform(k_wd, (N_HIDDEN, N_HIDDEN),
                                minval=-bound, maxval=bound, dtype=jnp.float32)

    # deterministic "corruption" permutation (torch.randperm analogue)
    perm = jax.random.permutation(k_perm, N)

    # one-time preparation (padded bf16 A is reused across training steps)
    blk, n_pad = choose_blocks(N)
    w0p, w1bd, wdp, hp = prepare_params(w0, w1, w_disc)
    ab = prepare_adjacency(a_hat, n_pad)

    fwd = jax.jit(functools.partial(dgi_forward, n=N, h=N_HIDDEN, hp=hp, blk=blk))
    loss, pos, neg = fwd(ab, x, perm, w0p, w1bd, wdp)
    loss = jax.block_until_ready(loss)

    ref = reference(a_hat, x, w0, w1, w_disc, perm)
    assert np.isfinite(float(loss)), float(loss)
    assert np.allclose(float(loss), float(ref), rtol=5e-2, atol=5e-2), (
        float(loss), float(ref))
    assert pos.shape == (N, N_HIDDEN) and neg.shape == (N, N_HIDDEN)

    print("KERNEL_OK")
</pallas_src>

<mosaic_0001>
module attributes {stable_mosaic.version = 11 : i64} {
  func.func @premix_kernel(%arg0: i32, %arg1: memref<256x64xbf16, #tpu.memory_space<vmem>>, %arg2: memref<256x64xbf16, #tpu.memory_space<vmem>>, %arg3: memref<64x128xbf16, #tpu.memory_space<vmem>>, %arg4: memref<256x256xbf16, #tpu.memory_space<vmem>>) attributes {dimension_semantics = [#tpu.dimension_semantics<parallel>], iteration_bounds = array<i64: 1>, scalar_prefetch = 0 : i64, scratch_operands = 0 : i64, tpu.core_type = #tpu.core_type<tc>, window_params = [{transform_indices = @transform_0, window_bounds = array<i64: 256, 64>}, {transform_indices = @transform_1, window_bounds = array<i64: 256, 64>}, {pipeline_mode = #tpu.pipeline_mode<synchronous>, transform_indices = @transform_2, window_bounds = array<i64: 64, 128>}, {transform_indices = @transform_3, window_bounds = array<i64: 256, 256>}]} {
    %c0 = arith.constant 0 : index
    %c0_0 = arith.constant 0 : index
    %0 = vector.load %arg3[%c0, %c0_0] : memref<64x128xbf16, #tpu.memory_space<vmem>>, vector<64x128xbf16>
    %c0_1 = arith.constant 0 : index
    %c0_2 = arith.constant 0 : index
    %1 = vector.load %arg1[%c0_1, %c0_2] : memref<256x64xbf16, #tpu.memory_space<vmem>>, vector<256x64xbf16>
    %cst = arith.constant dense<0.000000e+00> : vector<256x128xf32>
    %2 = tpu.matmul %1, %0, %cst {dimension_numbers = #tpu.dot_dimension_numbers<[1], [0], [0], [1], [0, 0, 1, 1], [], []>} : vector<256x64xbf16>, vector<64x128xbf16>, vector<256x128xf32> -> vector<256x128xf32>
    %3 = arith.truncf %2 : vector<256x128xf32> to vector<256x128xbf16>
    %c0_3 = arith.constant 0 : index
    %c0_4 = arith.constant 0 : index
    %4 = vector.load %arg4[%c0_3, %c0_4] : memref<256x256xbf16, #tpu.memory_space<vmem>>, vector<256x128xbf16>
    tpu.vector_store %arg4[%c0_3, %c0_4], %3 {strides = array<i32>} : memref<256x256xbf16, #tpu.memory_space<vmem>>, vector<256x128xbf16>,
    %c0_5 = arith.constant 0 : index
    %c0_6 = arith.constant 0 : index
    %5 = vector.load %arg2[%c0_5, %c0_6] : memref<256x64xbf16, #tpu.memory_space<vmem>>, vector<256x64xbf16>
    %cst_7 = arith.constant dense<0.000000e+00> : vector<256x128xf32>
    %6 = tpu.matmul %5, %0, %cst_7 {dimension_numbers = #tpu.dot_dimension_numbers<[1], [0], [0], [1], [0, 0, 1, 1], [], []>} : vector<256x64xbf16>, vector<64x128xbf16>, vector<256x128xf32> -> vector<256x128xf32>
    %7 = arith.truncf %6 : vector<256x128xf32> to vector<256x128xbf16>
    %c0_8 = arith.constant 0 : index
    %c128 = arith.constant 128 : index
    %8 = vector.load %arg4[%c0_8, %c128] : memref<256x256xbf16, #tpu.memory_space<vmem>>, vector<256x128xbf16>
    tpu.vector_store %arg4[%c0_8, %c128], %7 {strides = array<i32>} : memref<256x256xbf16, #tpu.memory_space<vmem>>, vector<256x128xbf16>,
    return
  }
  func.func @transform_0(%arg0: i32) -> (i32, i32) {
    %c0_i32 = arith.constant 0 : i32
    %c0_i32_0 = arith.constant 0 : i32
    return %arg0, %c0_i32 : i32, i32
  }
  func.func @transform_1(%arg0: i32) -> (i32, i32) {
    %c0_i32 = arith.constant 0 : i32
    %c0_i32_0 = arith.constant 0 : i32
    return %arg0, %c0_i32 : i32, i32
  }
  func.func @transform_2(%arg0: i32) -> (i32, i32) {
    %c0_i32 = arith.constant 0 : i32
    %c0_i32_0 = arith.constant 0 : i32
    %c0_i32_1 = arith.constant 0 : i32
    return %c0_i32, %c0_i32_0 : i32, i32
  }
  func.func @transform_3(%arg0: i32) -> (i32, i32) {
    %c0_i32 = arith.constant 0 : i32
    %c0_i32_0 = arith.constant 0 : i32
    return %arg0, %c0_i32 : i32, i32
  }
}

module attributes {stable_mosaic.version = 11 : i64} {
  func.func @gcn_layer1_kernel(%arg0: i32, %arg1: i32, %arg2: memref<256x256xbf16, #tpu.memory_space<vmem>>, %arg3: memref<256x256xbf16, #tpu.memory_space<vmem>>, %arg4: memref<256x256xbf16, #tpu.memory_space<vmem>>, %arg5: memref<256x256xbf16, #tpu.memory_space<vmem>>, %arg6: memref<256x256xf32, #tpu.memory_space<vmem>>) attributes {dimension_semantics = [#tpu.dimension_semantics<parallel>, #tpu.dimension_semantics<arbitrary>], iteration_bounds = array<i64: 1, 1>, scalar_prefetch = 0 : i64, scratch_operands = 1 : i64, tpu.core_type = #tpu.core_type<tc>, window_params = [{transform_indices = @transform_0, window_bounds = array<i64: 256, 256>}, {pipeline_mode = #tpu.pipeline_mode<synchronous>, transform_indices = @transform_1, window_bounds = array<i64: 256, 256>}, {pipeline_mode = #tpu.pipeline_mode<synchronous>, transform_indices = @transform_2, window_bounds = array<i64: 256, 256>}, {transform_indices = @transform_3, window_bounds = array<i64: 256, 256>}]} {
    %c256_i32 = arith.constant 256 : i32
    %0 = arith.muli %arg1, %c256_i32 : i32
    %1 = tpu.assume_multiple %0, 256 : i32
    %2 = arith.index_cast %1 : i32 to index
    %c0 = arith.constant 0 : index
    %3 = vector.load %arg3[%2, %c0] : memref<256x256xbf16, #tpu.memory_space<vmem>>, vector<256x256xbf16>
    %c0_i32 = arith.constant 0 : i32
    %4 = arith.cmpi eq, %arg1, %c0_i32 : i32
    %5 = arith.extui %4 : i1 to i32
    %c0_i32_0 = arith.constant 0 : i32
    %6 = arith.cmpi ne, %5, %c0_i32_0 : i32
    scf.if %6 {
      %cst_9 = arith.constant 0.000000e+00 : f32
      %15 = vector.broadcast %cst_9 : f32 to vector<256x256xf32>
      %c0_10 = arith.constant 0 : index
      %c0_11 = arith.constant 0 : index
      %16 = vector.load %arg6[%c0_10, %c0_11] : memref<256x256xf32, #tpu.memory_space<vmem>>, vector<256x256xf32>
      tpu.vector_store %arg6[%c0_10, %c0_11], %15 {strides = array<i32>} : memref<256x256xf32, #tpu.memory_space<vmem>>, vector<256x256xf32>,
    } else {
    }
    %c0_1 = arith.constant 0 : index
    %c0_2 = arith.constant 0 : index
    %7 = vector.load %arg6[%c0_1, %c0_2] : memref<256x256xf32, #tpu.memory_space<vmem>>, vector<256x256xf32>
    %c0_3 = arith.constant 0 : index
    %c0_4 = arith.constant 0 : index
    %8 = vector.load %arg2[%c0_3, %c0_4] : memref<256x256xbf16, #tpu.memory_space<vmem>>, vector<256x256xbf16>
    %cst = arith.constant dense<0.000000e+00> : vector<256x256xf32>
    %9 = tpu.matmul %8, %3, %cst {dimension_numbers = #tpu.dot_dimension_numbers<[1], [0], [0], [1], [0, 0, 1, 1], [], []>} : vector<256x256xbf16>, vector<256x256xbf16>, vector<256x256xf32> -> vector<256x256xf32>
    %10 = arith.addf %7, %9 : vector<256x256xf32>
    %c0_5 = arith.constant 0 : index
    %c0_6 = arith.constant 0 : index
    %11 = vector.load %arg6[%c0_5, %c0_6] : memref<256x256xf32, #tpu.memory_space<vmem>>, vector<256x256xf32>
    tpu.vector_store %arg6[%c0_5, %c0_6], %10 {strides = array<i32>} : memref<256x256xf32, #tpu.memory_space<vmem>>, vector<256x256xf32>,
    %c0_i32_7 = arith.constant 0 : i32
    %12 = arith.cmpi eq, %arg1, %c0_i32_7 : i32
    %13 = arith.extui %12 : i1 to i32
    %c0_i32_8 = arith.constant 0 : i32
    %14 = arith.cmpi ne, %13, %c0_i32_8 : i32
    scf.if %14 {
      %c0_9 = arith.constant 0 : index
      %c0_10 = arith.constant 0 : index
      %15 = vector.load %arg6[%c0_9, %c0_10] : memref<256x256xf32, #tpu.memory_space<vmem>>, vector<256x256xf32>
      %cst_11 = arith.constant 0.000000e+00 : f32
      %16 = vector.broadcast %cst_11 : f32 to vector<256x256xf32>
      %17 = arith.maximumf %15, %16 : vector<256x256xf32>
      %18 = arith.truncf %17 : vector<256x256xf32> to vector<256x256xbf16>
      %c0_12 = arith.constant 0 : index
      %c0_13 = arith.constant 0 : index
      %19 = vector.load %arg4[%c0_12, %c0_13] : memref<256x256xbf16, #tpu.memory_space<vmem>>, vector<256x256xbf16>
      %cst_14 = arith.constant dense<0.000000e+00> : vector<256x256xf32>
      %20 = tpu.matmul %18, %19, %cst_14 {dimension_numbers = #tpu.dot_dimension_numbers<[1], [0], [0], [1], [0, 0, 1, 1], [], []>} : vector<256x256xbf16>, vector<256x256xbf16>, vector<256x256xf32> -> vector<256x256xf32>
      %21 = arith.truncf %20 : vector<256x256xf32> to vector<256x256xbf16>
      %c0_15 = arith.constant 0 : index
      %c0_16 = arith.constant 0 : index
      %22 = vector.load %arg5[%c0_15, %c0_16] : memref<256x256xbf16, #tpu.memory_space<vmem>>, vector<256x256xbf16>
      tpu.vector_store %arg5[%c0_15, %c0_16], %21 {strides = array<i32>} : memref<256x256xbf16, #tpu.memory_space<vmem>>, vector<256x256xbf16>,
    } else {
    }
    return
  }
  func.func @transform_0(%arg0: i32, %arg1: i32) -> (i32, i32) {
    %c0_i32 = arith.constant 0 : i32
    return %arg0, %arg1 : i32, i32
  }
  func.func @transform_1(%arg0: i32, %arg1: i32) -> (i32, i32) {
    %c0_i32 = arith.constant 0 : i32
    %c0_i32_0 = arith.constant 0 : i32
    %c0_i32_1 = arith.constant 0 : i32
    return %c0_i32, %c0_i32_0 : i32, i32
  }
  func.func @transform_2(%arg0: i32, %arg1: i32) -> (i32, i32) {
    %c0_i32 = arith.constant 0 : i32
    %c0_i32_0 = arith.constant 0 : i32
    %c0_i32_1 = arith.constant 0 : i32
    return %c0_i32, %c0_i32_0 : i32, i32
  }
  func.func @transform_3(%arg0: i32, %arg1: i32) -> (i32, i32) {
    %c0_i32 = arith.constant 0 : i32
    %c0_i32_0 = arith.constant 0 : i32
    return %arg0, %c0_i32 : i32, i32
  }
}

module attributes {stable_mosaic.version = 11 : i64} {
  func.func @gcn_layer2_kernel(%arg0: i32, %arg1: i32, %arg2: memref<256x256xbf16, #tpu.memory_space<vmem>>, %arg3: memref<256x256xbf16, #tpu.memory_space<vmem>>, %arg4: memref<256x256xbf16, #tpu.memory_space<vmem>>, %arg5: memref<1x1x128xf32, #tpu.memory_space<vmem>>, %arg6: memref<256x256xf32, #tpu.memory_space<vmem>>) attributes {dimension_semantics = [#tpu.dimension_semantics<parallel>, #tpu.dimension_semantics<arbitrary>], iteration_bounds = array<i64: 1, 1>, scalar_prefetch = 0 : i64, scratch_operands = 1 : i64, tpu.core_type = #tpu.core_type<tc>, window_params = [{transform_indices = @transform_0, window_bounds = array<i64: 256, 256>}, {pipeline_mode = #tpu.pipeline_mode<synchronous>, transform_indices = @transform_1, window_bounds = array<i64: 256, 256>}, {transform_indices = @transform_2, window_bounds = array<i64: 256, 256>}, {transform_indices = @transform_3, window_bounds = array<i64: 1, 1, 128>}]} {
    %c256_i32 = arith.constant 256 : i32
    %0 = arith.muli %arg1, %c256_i32 : i32
    %1 = tpu.assume_multiple %0, 256 : i32
    %2 = arith.index_cast %1 : i32 to index
    %c0 = arith.constant 0 : index
    %3 = vector.load %arg3[%2, %c0] : memref<256x256xbf16, #tpu.memory_space<vmem>>, vector<256x256xbf16>
    %c0_i32 = arith.constant 0 : i32
    %4 = arith.cmpi eq, %arg1, %c0_i32 : i32
    %5 = arith.extui %4 : i1 to i32
    %c0_i32_0 = arith.constant 0 : i32
    %6 = arith.cmpi ne, %5, %c0_i32_0 : i32
    scf.if %6 {
      %cst_9 = arith.constant 0.000000e+00 : f32
      %15 = vector.broadcast %cst_9 : f32 to vector<256x256xf32>
      %c0_10 = arith.constant 0 : index
      %c0_11 = arith.constant 0 : index
      %16 = vector.load %arg6[%c0_10, %c0_11] : memref<256x256xf32, #tpu.memory_space<vmem>>, vector<256x256xf32>
      tpu.vector_store %arg6[%c0_10, %c0_11], %15 {strides = array<i32>} : memref<256x256xf32, #tpu.memory_space<vmem>>, vector<256x256xf32>,
    } else {
    }
    %c0_1 = arith.constant 0 : index
    %c0_2 = arith.constant 0 : index
    %7 = vector.load %arg6[%c0_1, %c0_2] : memref<256x256xf32, #tpu.memory_space<vmem>>, vector<256x256xf32>
    %c0_3 = arith.constant 0 : index
    %c0_4 = arith.constant 0 : index
    %8 = vector.load %arg2[%c0_3, %c0_4] : memref<256x256xbf16, #tpu.memory_space<vmem>>, vector<256x256xbf16>
    %cst = arith.constant dense<0.000000e+00> : vector<256x256xf32>
    %9 = tpu.matmul %8, %3, %cst {dimension_numbers = #tpu.dot_dimension_numbers<[1], [0], [0], [1], [0, 0, 1, 1], [], []>} : vector<256x256xbf16>, vector<256x256xbf16>, vector<256x256xf32> -> vector<256x256xf32>
    %10 = arith.addf %7, %9 : vector<256x256xf32>
    %c0_5 = arith.constant 0 : index
    %c0_6 = arith.constant 0 : index
    %11 = vector.load %arg6[%c0_5, %c0_6] : memref<256x256xf32, #tpu.memory_space<vmem>>, vector<256x256xf32>
    tpu.vector_store %arg6[%c0_5, %c0_6], %10 {strides = array<i32>} : memref<256x256xf32, #tpu.memory_space<vmem>>, vector<256x256xf32>,
    %c0_i32_7 = arith.constant 0 : i32
    %12 = arith.cmpi eq, %arg1, %c0_i32_7 : i32
    %13 = arith.extui %12 : i1 to i32
    %c0_i32_8 = arith.constant 0 : i32
    %14 = arith.cmpi ne, %13, %c0_i32_8 : i32
    scf.if %14 {
      %c0_9 = arith.constant 0 : index
      %c0_10 = arith.constant 0 : index
      %15 = vector.load %arg6[%c0_9, %c0_10] : memref<256x256xf32, #tpu.memory_space<vmem>>, vector<256x256xf32>
      %16 = arith.truncf %15 : vector<256x256xf32> to vector<256x256xbf16>
      %c0_11 = arith.constant 0 : index
      %c0_12 = arith.constant 0 : index
      %17 = vector.load %arg4[%c0_11, %c0_12] : memref<256x256xbf16, #tpu.memory_space<vmem>>, vector<256x256xbf16>
      tpu.vector_store %arg4[%c0_11, %c0_12], %16 {strides = array<i32>} : memref<256x256xbf16, #tpu.memory_space<vmem>>, vector<256x256xbf16>,
      %c0_13 = arith.constant 0 : index
      %c0_14 = arith.constant 0 : index
      %18 = vector.load %arg6[%c0_13, %c0_14] : memref<256x256xf32, #tpu.memory_space<vmem>>, vector<256x128xf32>
      %cst_15 = arith.constant dense<0.000000e+00> : vector<128xf32>
      %19 = vector.multi_reduction <add>, %18, %cst_15 [0] : vector<256x128xf32> to vector<128xf32>
      %20 = vector.shape_cast %19 : vector<128xf32> to vector<1x128xf32>
      %21 = vector.shape_cast %20 : vector<1x128xf32> to vector<1x1x128xf32>
      %c0_16 = arith.constant 0 : index
      %c0_17 = arith.constant 0 : index
      %c0_18 = arith.constant 0 : index
      %22 = vector.load %arg5[%c0_16, %c0_17, %c0_18] : memref<1x1x128xf32, #tpu.memory_space<vmem>>, vector<1x1x128xf32>
      tpu.vector_store %arg5[%c0_16, %c0_17, %c0_18], %21 {strides = array<i32>} : memref<1x1x128xf32, #tpu.memory_space<vmem>>, vector<1x1x128xf32>,
    } else {
    }
    return
  }
  func.func @transform_0(%arg0: i32, %arg1: i32) -> (i32, i32) {
    %c0_i32 = arith.constant 0 : i32
    return %arg0, %arg1 : i32, i32
  }
  func.func @transform_1(%arg0: i32, %arg1: i32) -> (i32, i32) {
    %c0_i32 = arith.constant 0 : i32
    %c0_i32_0 = arith.constant 0 : i32
    %c0_i32_1 = arith.constant 0 : i32
    return %c0_i32, %c0_i32_0 : i32, i32
  }
  func.func @transform_2(%arg0: i32, %arg1: i32) -> (i32, i32) {
    %c0_i32 = arith.constant 0 : i32
    %c0_i32_0 = arith.constant 0 : i32
    return %arg0, %c0_i32 : i32, i32
  }
  func.func @transform_3(%arg0: i32, %arg1: i32) -> (i32, i32, i32) {
    %c0_i32 = arith.constant 0 : i32
    %c0_i32_0 = arith.constant 0 : i32
    %c0_i32_1 = arith.constant 0 : i32
    return %arg0, %c0_i32, %c0_i32_0 : i32, i32, i32
  }
}

module attributes {stable_mosaic.version = 11 : i64} {
  func.func @dgi_head_kernel(%arg0: i32, %arg1: memref<256x256xbf16, #tpu.memory_space<vmem>>, %arg2: memref<256x128xf32, #tpu.memory_space<vmem>>, %arg3: memref<1x1xf32, #tpu.memory_space<smem>>) attributes {dimension_semantics = [#tpu.dimension_semantics<arbitrary>], iteration_bounds = array<i64: 1>, scalar_prefetch = 0 : i64, scratch_operands = 0 : i64, tpu.core_type = #tpu.core_type<tc>, window_params = [{transform_indices = @transform_0, window_bounds = array<i64: 256, 256>}, {pipeline_mode = #tpu.pipeline_mode<synchronous>, transform_indices = @transform_1, window_bounds = array<i64: 256, 128>}, {transform_indices = @transform_2, window_bounds = array<i64: 1, 1>}]} {
    %c0_i32 = arith.constant 0 : i32
    %0 = arith.cmpi eq, %arg0, %c0_i32 : i32
    %1 = arith.extui %0 : i1 to i32
    %c0_i32_0 = arith.constant 0 : i32
    %2 = arith.cmpi ne, %1, %c0_i32_0 : i32
    scf.if %2 {
      %cst_12 = arith.constant 0.000000e+00 : f32
      %c0_13 = arith.constant 0 : index
      %c0_14 = arith.constant 0 : index
      %36 = memref.load %arg3[%c0_13, %c0_14] : memref<1x1xf32, #tpu.memory_space<smem>>
      memref.store %cst_12, %arg3[%c0_13, %c0_14] : memref<1x1xf32, #tpu.memory_space<smem>>
    } else {
    }
    %c0 = arith.constant 0 : index
    %c0_1 = arith.constant 0 : index
    %3 = vector.load %arg1[%c0, %c0_1] : memref<256x256xbf16, #tpu.memory_space<vmem>>, vector<256x256xbf16>
    %4 = arith.extf %3 : vector<256x256xbf16> to vector<256x256xf32>
    %c0_2 = arith.constant 0 : index
    %c0_3 = arith.constant 0 : index
    %5 = vector.load %arg2[%c0_2, %c0_3] : memref<256x128xf32, #tpu.memory_space<vmem>>, vector<256x128xf32>
    %cst = arith.constant dense<0.000000e+00> : vector<256x128xf32>
    %6 = tpu.matmul %4, %5, %cst {dimension_numbers = #tpu.dot_dimension_numbers<[1], [0], [0], [1], [0, 0, 1, 1], [], []>} : vector<256x256xf32>, vector<256x128xf32>, vector<256x128xf32> -> vector<256x128xf32>
    %cst_4 = arith.constant 0.000000e+00 : f32
    %7 = vector.broadcast %cst_4 : f32 to vector<256x128xf32>
    %8 = arith.maximumf %6, %7 : vector<256x128xf32>
    %9 = math.absf %6 : vector<256x128xf32>
    %cst_5 = arith.constant 0.000000e+00 : f32
    %10 = vector.broadcast %cst_5 : f32 to vector<256x128xf32>
    %11 = arith.subf %10, %9 : vector<256x128xf32>
    %12 = math.exp %11 : vector<256x128xf32>
    %13 = math.log1p %12 : vector<256x128xf32>
    %14 = arith.addf %8, %13 : vector<256x128xf32>
    %15 = tpu.iota {dimensions = array<i32: 1>} : vector<256x128xi32>
    %16 = tpu.iota {dimensions = array<i32: 0>} : vector<256x128xi32>
    %c256_i32 = arith.constant 256 : i32
    %17 = arith.muli %arg0, %c256_i32 : i32
    %18 = vector.broadcast %17 : i32 to vector<256x128xi32>
    %19 = arith.addi %16, %18 : vector<256x128xi32>
    %c2_i32 = arith.constant 2 : i32
    %20 = vector.broadcast %c2_i32 : i32 to vector<256x128xi32>
    %21 = arith.cmpi slt, %15, %20 : vector<256x128xi32>
    %c200_i32 = arith.constant 200 : i32
    %22 = vector.broadcast %c200_i32 : i32 to vector<256x128xi32>
    %23 = arith.cmpi slt, %19, %22 : vector<256x128xi32>
    %24 = arith.andi %21, %23 : vector<256x128xi1>
    %25 = arith.extui %24 : vector<256x128xi1> to vector<256x128xi32>
    %26 = arith.sitofp %25 : vector<256x128xi32> to vector<256x128xf32>
    %27 = arith.mulf %14, %26 : vector<256x128xf32>
    %28 = vector.shape_cast %27 : vector<256x128xf32> to vector<1x256x128xf32>
    %cst_6 = arith.constant dense<0.000000e+00> : vector<1xf32>
    %29 = vector.multi_reduction <add>, %28, %cst_6 [1, 2] : vector<1x256x128xf32> to vector<1xf32>
    %30 = vector.shape_cast %29 : vector<1xf32> to vector<1x1x1xf32>
    %31 = vector.extract %30[0, 0, 0] : f32 from vector<1x1x1xf32>
    %c0_7 = arith.constant 0 : index
    %c0_8 = arith.constant 0 : index
    %32 = memref.load %arg3[%c0_7, %c0_8] : memref<1x1xf32, #tpu.memory_space<smem>>
    %cst_9 = arith.constant 5.000000e-03 : f32
    %33 = arith.mulf %31, %cst_9 : f32
    %34 = arith.addf %32, %33 : f32
    %c0_10 = arith.constant 0 : index
    %c0_11 = arith.constant 0 : index
    %35 = memref.load %arg3[%c0_10, %c0_11] : memref<1x1xf32, #tpu.memory_space<smem>>
    memref.store %34, %arg3[%c0_10, %c0_11] : memref<1x1xf32, #tpu.memory_space<smem>>
    return
  }
  func.func @transform_0(%arg0: i32) -> (i32, i32) {
    %c0_i32 = arith.constant 0 : i32
    %c0_i32_0 = arith.constant 0 : i32
    return %arg0, %c0_i32 : i32, i32
  }
  func.func @transform_1(%arg0: i32) -> (i32, i32) {
    %c0_i32 = arith.constant 0 : i32
    %c0_i32_0 = arith.constant 0 : i32
    %c0_i32_1 = arith.constant 0 : i32
    return %c0_i32, %c0_i32_0 : i32, i32
  }
  func.func @transform_2(%arg0: i32) -> (i32, i32) {
    %c0_i32 = arith.constant 0 : i32
    %c0_i32_0 = arith.constant 0 : i32
    %c0_i32_1 = arith.constant 0 : i32
    return %c0_i32, %c0_i32_0 : i32, i32
  }
}

</mosaic_0001>

<llo_original>
// kernel: dgi_forward.4
$region0: #{dgi_forward.4}
  #allocation0 [shape = 'u32[]', space=smem, size = 0x4, offset = 0x4, fixed_abs, tag = 'smem constant byte address 0x4 - core index']
  #allocation1 [shape = 'u32[144,128]{1,0:T(1,128)}', space=vmem, size = 0x12000, scoped, tag = 'internal scratch']
  %s0 = inlined_call_operand.vmem [shape: bf16[256,64], index: 0, kind: input, shape index: {}]
  %s1 = inlined_call_operand.vmem [shape: bf16[256,64], index: 1, kind: input, shape index: {}]
  %s2 = inlined_call_operand.vmem [shape: bf16[64,128], index: 2, kind: input, shape index: {}]
  %s3 = inlined_call_operand.vmem [shape: bf16[256,256], index: 3, kind: output, shape index: {}]
  %s4 = sld [smem:[#allocation0]]
  $region22: #{dgi_forward.4} parent=0
    _
  %s6 = ssub.s32 1, %s4
  %s7 = scalar_select 0, %s6, %s4
  // Predicated region
  $region2: #{dgi_forward.4} parent=0 // pred_check
    _
  $region3: #{dgi_forward.4} parent=0 // pred_check_branch
    %9 = sbr.rel (0) target = $region5
  $region4: #{dgi_forward.4} parent=0 // pred_region
    _
  $region5: #{dgi_forward.4} parent=0 // pred_fallthru
    _
  // Predicated region
  $region6: #{dgi_forward.4} parent=0 // pred_check
    _
  $region7: #{dgi_forward.4} parent=0 // pred_check_branch
    %11 = sbr.rel (0) target = $region9
  $region8: #{dgi_forward.4} parent=0 // pred_region
    _
  $region9: #{dgi_forward.4} parent=0 // pred_fallthru
    _
  // Predicated region
  $region10: #{dgi_forward.4} parent=0 // pred_check
    _
  $region11: #{dgi_forward.4} parent=0 // pred_check_branch
    %13 = sbr.rel (0) target = $region13
  $region12: #{dgi_forward.4} parent=0 // pred_region
    _
  $region13: #{dgi_forward.4} parent=0 // pred_fallthru
    _
  %v15 = vld [vmem:[%s2] sm:$0xf]
  %v16 = vld [vmem:[%s2 + $0x4] sm:$0xf]
  %v17 = vld [vmem:[%s2 + $0x8] sm:$0xf]
  %v18 = vld [vmem:[%s2 + $0xc] sm:$0xf]
  %v19 = vld [vmem:[%s2 + $0x10] sm:$0xf]
  %v20 = vld [vmem:[%s2 + $0x14] sm:$0xf]
  %v21 = vld [vmem:[%s2 + $0x18] sm:$0xf]
  %v22 = vld [vmem:[%s2 + $0x1c] sm:$0xf]
  %v23 = vld [vmem:[%s0] sm:$0xf]
  %v24 = vld [vmem:[%s0 + $0x4] sm:$0xf]
  %v25 = vld [vmem:[%s0 + $0x8] sm:$0xf]
  %v26 = vld [vmem:[%s0 + $0xc] sm:$0xf]
  %v27 = vld [vmem:[%s0 + $0x10] sm:$0xf]
  %v28 = vld [vmem:[%s0 + $0x14] sm:$0xf]
  %v29 = vld [vmem:[%s0 + $0x18] sm:$0xf]
  %v30 = vld [vmem:[%s0 + $0x1c] sm:$0xf]
  %v31 = vld [vmem:[%s0 + $0x20] sm:$0xf]
  %v32 = vld [vmem:[%s0 + $0x24] sm:$0xf]
  %v33 = vld [vmem:[%s0 + $0x28] sm:$0xf]
  %v34 = vld [vmem:[%s0 + $0x2c] sm:$0xf]
  %v35 = vld [vmem:[%s0 + $0x30] sm:$0xf]
  %v36 = vld [vmem:[%s0 + $0x34] sm:$0xf]
  %v37 = vld [vmem:[%s0 + $0x38] sm:$0xf]
  %v38 = vld [vmem:[%s0 + $0x3c] sm:$0xf]
  %v39 = vld [vmem:[%s0 + $0x40] sm:$0xf]
  %v40 = vld [vmem:[%s0 + $0x44] sm:$0xf]
  %v41 = vld [vmem:[%s0 + $0x48] sm:$0xf]
  %v42 = vld [vmem:[%s0 + $0x4c] sm:$0xf]
  %v43 = vld [vmem:[%s0 + $0x50] sm:$0xf]
  %v44 = vld [vmem:[%s0 + $0x54] sm:$0xf]
  %v45 = vld [vmem:[%s0 + $0x58] sm:$0xf]
  %v46 = vld [vmem:[%s0 + $0x5c] sm:$0xf]
  %v47 = vld [vmem:[%s0 + $0x60] sm:$0xf]
  %v48 = vld [vmem:[%s0 + $0x64] sm:$0xf]
  %v49 = vld [vmem:[%s0 + $0x68] sm:$0xf]
  %v50 = vld [vmem:[%s0 + $0x6c] sm:$0xf]
  %v51 = vld [vmem:[%s0 + $0x70] sm:$0xf]
  %v52 = vld [vmem:[%s0 + $0x74] sm:$0xf]
  %v53 = vld [vmem:[%s0 + $0x78] sm:$0xf]
  %v54 = vld [vmem:[%s0 + $0x7c] sm:$0xf]
  %v87 = vunpack.c.l.b16 %v23
  %v88 = vunpack.c.l.b16 %v24
  %v89 = vunpack.c.l.b16 %v25
  %v90 = vunpack.c.l.b16 %v26
  %v91 = vunpack.c.l.b16 %v27
  %v92 = vunpack.c.l.b16 %v28
  %v93 = vunpack.c.l.b16 %v29
  %v94 = vunpack.c.l.b16 %v30
  %v95 = vunpack.c.l.b16 %v31
  %v96 = vunpack.c.l.b16 %v32
  %v97 = vunpack.c.l.b16 %v33
  %v98 = vunpack.c.l.b16 %v34
  %v99 = vunpack.c.l.b16 %v35
  %v100 = vunpack.c.l.b16 %v36
  %v101 = vunpack.c.l.b16 %v37
  %v102 = vunpack.c.l.b16 %v38
  %v103 = vunpack.c.l.b16 %v39
  %v104 = vunpack.c.l.b16 %v40
  %v105 = vunpack.c.l.b16 %v41
  %v106 = vunpack.c.l.b16 %v42
  %v107 = vunpack.c.l.b16 %v43
  %v108 = vunpack.c.l.b16 %v44
  %v109 = vunpack.c.l.b16 %v45
  %v110 = vunpack.c.l.b16 %v46
  %v111 = vunpack.c.l.b16 %v47
  %v112 = vunpack.c.l.b16 %v48
  %v113 = vunpack.c.l.b16 %v49
  %v114 = vunpack.c.l.b16 %v50
  %v115 = vunpack.c.l.b16 %v51
  %v116 = vunpack.c.l.b16 %v52
  %v117 = vunpack.c.l.b16 %v53
  %v118 = vunpack.c.l.b16 %v54
  %v119 = vpack.c.b16 %v88, %v87
  %v120 = vpack.c.b16 %v90, %v89
  %v121 = vpack.c.b16 %v92, %v91
  %v122 = vpack.c.b16 %v94, %v93
  %v123 = vpack.c.b16 %v96, %v95
  %v124 = vpack.c.b16 %v98, %v97
  %v125 = vpack.c.b16 %v100, %v99
  %v126 = vpack.c.b16 %v102, %v101
  %v127 = vpack.c.b16 %v104, %v103
  %v128 = vpack.c.b16 %v106, %v105
  %v129 = vpack.c.b16 %v108, %v107
  %v130 = vpack.c.b16 %v110, %v109
  %v131 = vpack.c.b16 %v112, %v111
  %v132 = vpack.c.b16 %v114, %v113
  %v133 = vpack.c.b16 %v116, %v115
  %v134 = vpack.c.b16 %v118, %v117
  %v143 = vunpack.c.l.b16 %v15
  %v144 = vunpack.c.l.b16 %v16
  %v145 = vunpack.c.l.b16 %v17
  %v146 = vunpack.c.l.b16 %v18
  %v147 = vunpack.c.l.b16 %v19
  %v148 = vunpack.c.l.b16 %v20
  %v149 = vunpack.c.l.b16 %v21
  %v150 = vunpack.c.l.b16 %v22
  %v151 = vpack.c.b16 %v144, %v143
  %v152 = vpack.c.b16 %v146, %v145
  %v153 = vpack.c.b16 %v148, %v147
  %v154 = vpack.c.b16 %v150, %v149
  %vm159 = vcmask 523264
  %v161 = vsel %vm159, %v119, 0
  %v164 = vsel %vm159, %v120, 0
  %v167 = vsel %vm159, %v121, 0
  %v170 = vsel %vm159, %v122, 0
  %v173 = vsel %vm159, %v123, 0
  %v176 = vsel %vm159, %v124, 0
  %v179 = vsel %vm159, %v125, 0
  %v182 = vsel %vm159, %v126, 0
  %v185 = vsel %vm159, %v127, 0
  %v188 = vsel %vm159, %v128, 0
  %v191 = vsel %vm159, %v129, 0
  %v194 = vsel %vm159, %v130, 0
  %v197 = vsel %vm159, %v131, 0
  %v200 = vsel %vm159, %v132, 0
  %v203 = vsel %vm159, %v133, 0
  %v206 = vsel %vm159, %v134, 0
  %208 = vmatprep.subr.bf16.mxu0 0
  %209 = vmatpush1.bf16.msra.mxu0 0
  %210 = vmatprep.subr.bf16.mxu0 0
  %211 = vmatpush1.bf16.msra.mxu0 0
  %212 = vmatprep.subr.bf16.mxu0 0
  %213 = vmatpush1.bf16.msra.mxu0 0
  %214 = vmatprep.subr.bf16.mxu0 0
  %215 = vmatpush1.bf16.msra.mxu0 0
  %216 = vmatprep.subr.bf16.mxu0 0
  %217 = vmatpush1.bf16.msra.mxu0 %v154
  %218 = vmatprep.subr.bf16.mxu0 0
  %219 = vmatpush1.bf16.msra.mxu0 %v153
  %220 = vmatprep.subr.bf16.mxu0 0
  %221 = vmatpush1.bf16.msra.mxu0 %v152
  %222 = vmatprep.subr.bf16.mxu0 0
  %223 = vmatpush1.bf16.msra.mxu0 %v151
  %224 = vmatprep.subr.bf16.mxu0 0
  %225 = vmatpush2.bf16.msra.mxu0 0
  %226 = vmatprep.subr.bf16.mxu0 0
  %227 = vmatpush2.bf16.msra.mxu0 0
  %228 = vmatprep.subr.bf16.mxu0 0
  %229 = vmatpush2.bf16.msra.mxu0 0
  %230 = vmatprep.subr.bf16.mxu0 0
  %231 = vmatpush2.bf16.msra.mxu0 0
  %232 = vmatprep.subr.bf16.mxu0 0
  %233 = vmatpush2.bf16.msra.mxu0 0
  %234 = vmatprep.subr.bf16.mxu0 0
  %235 = vmatpush2.bf16.msra.mxu0 0
  %236 = vmatprep.subr.bf16.mxu0 0
  %237 = vmatpush2.bf16.msra.mxu0 0
  %238 = vmatprep.subr.bf16.mxu0 0
  %239 = vmatpush2.bf16.msra.mxu0 0
  %240 = vmatprep.mubr.bf16.mxu0 0
  %241 = vmatmul.mubr.bf16.gmra.mxu0 %v161
  %v242 = vpop.f32.mrf.mxu0
  %v243 = vadd.f32 0.0, %v242
  %v244 = vpop.f32.mrf.mxu0
  %v245 = vpop.f32.mrf.mxu0
  %v246 = vadd.f32 0.0, %v245
  %v247 = vpop.f32.mrf.mxu0
  %248 = vmatprep.mubr.bf16.mxu0 0
  %249 = vmatmul.mubr.bf16.gmra.mxu0 %v164
  %v250 = vpop.f32.mrf.mxu0
  %v251 = vadd.f32 0.0, %v250
  %v252 = vpop.f32.mrf.mxu0
  %v253 = vpop.f32.mrf.mxu0
  %v254 = vadd.f32 0.0, %v253
  %v255 = vpop.f32.mrf.mxu0
  %256 = vmatprep.mubr.bf16.mxu0 0
  %257 = vmatmul.mubr.bf16.gmra.mxu0 %v167
  %v258 = vpop.f32.mrf.mxu0
  %v259 = vadd.f32 0.0, %v258
  %v260 = vpop.f32.mrf.mxu0
  %v261 = vpop.f32.mrf.mxu0
  %v262 = vadd.f32 0.0, %v261
  %v263 = vpop.f32.mrf.mxu0
  %264 = vmatprep.mubr.bf16.mxu0 0
  %265 = vmatmul.mubr.bf16.gmra.mxu0 %v170
  %v266 = vpop.f32.mrf.mxu0
  %v267 = vadd.f32 0.0, %v266
  %v268 = vpop.f32.mrf.mxu0
  %v269 = vpop.f32.mrf.mxu0
  %v270 = vadd.f32 0.0, %v269
  %v271 = vpop.f32.mrf.mxu0
  %272 = vmatprep.mubr.bf16.mxu0 0
  %273 = vmatmul.mubr.bf16.gmra.mxu0 %v173
  %v274 = vpop.f32.mrf.mxu0
  %v275 = vadd.f32 0.0, %v274
  %v276 = vpop.f32.mrf.mxu0
  %v277 = vpop.f32.mrf.mxu0
  %v278 = vadd.f32 0.0, %v277
  %v279 = vpop.f32.mrf.mxu0
  %280 = vmatprep.mubr.bf16.mxu0 0
  %281 = vmatmul.mubr.bf16.gmra.mxu0 %v176
  %v282 = vpop.f32.mrf.mxu0
  %v283 = vadd.f32 0.0, %v282
  %v284 = vpop.f32.mrf.mxu0
  %v285 = vpop.f32.mrf.mxu0
  %v286 = vadd.f32 0.0, %v285
  %v287 = vpop.f32.mrf.mxu0
  %288 = vmatprep.mubr.bf16.mxu0 0
  %289 = vmatmul.mubr.bf16.gmra.mxu0 %v179
  %v290 = vpop.f32.mrf.mxu0
  %v291 = vadd.f32 0.0, %v290
  %v292 = vpop.f32.mrf.mxu0
  %v293 = vpop.f32.mrf.mxu0
  %v294 = vadd.f32 0.0, %v293
  %v295 = vpop.f32.mrf.mxu0
  %296 = vmatprep.mubr.bf16.mxu0 0
  %297 = vmatmul.mubr.bf16.gmra.mxu0 %v182
  %v298 = vpop.f32.mrf.mxu0
  %v299 = vadd.f32 0.0, %v298
  %v300 = vpop.f32.mrf.mxu0
  %v301 = vpop.f32.mrf.mxu0
  %v302 = vadd.f32 0.0, %v301
  %v303 = vpop.f32.mrf.mxu0
  %304 = vmatprep.mubr.bf16.mxu0 0
  %305 = vmatmul.mubr.bf16.gmra.mxu0 %v185
  %v306 = vpop.f32.mrf.mxu0
  %v307 = vadd.f32 0.0, %v306
  %v308 = vpop.f32.mrf.mxu0
  %v309 = vpop.f32.mrf.mxu0
  %v310 = vadd.f32 0.0, %v309
  %v311 = vpop.f32.mrf.mxu0
  %312 = vmatprep.mubr.bf16.mxu0 0
  %313 = vmatmul.mubr.bf16.gmra.mxu0 %v188
  %v314 = vpop.f32.mrf.mxu0
  %v315 = vadd.f32 0.0, %v314
  %v316 = vpop.f32.mrf.mxu0
  %v317 = vpop.f32.mrf.mxu0
  %v318 = vadd.f32 0.0, %v317
  %v319 = vpop.f32.mrf.mxu0
  %320 = vmatprep.mubr.bf16.mxu0 0
  %321 = vmatmul.mubr.bf16.gmra.mxu0 %v191
  %v322 = vpop.f32.mrf.mxu0
  %v323 = vadd.f32 0.0, %v322
  %v324 = vpop.f32.mrf.mxu0
  %v325 = vpop.f32.mrf.mxu0
  %v326 = vadd.f32 0.0, %v325
  %v327 = vpop.f32.mrf.mxu0
  %328 = vmatprep.mubr.bf16.mxu0 0
  %329 = vmatmul.mubr.bf16.gmra.mxu0 %v194
  %v330 = vpop.f32.mrf.mxu0
  %v331 = vadd.f32 0.0, %v330
  %v332 = vpop.f32.mrf.mxu0
  %v333 = vpop.f32.mrf.mxu0
  %v334 = vadd.f32 0.0, %v333
  %v335 = vpop.f32.mrf.mxu0
  %336 = vmatprep.mubr.bf16.mxu0 0
  %337 = vmatmul.mubr.bf16.gmra.mxu0 %v197
  %v338 = vpop.f32.mrf.mxu0
  %v339 = vadd.f32 0.0, %v338
  %v340 = vpop.f32.mrf.mxu0
  %v341 = vpop.f32.mrf.mxu0
  %v342 = vadd.f32 0.0, %v341
  %v343 = vpop.f32.mrf.mxu0
  %344 = vmatprep.mubr.bf16.mxu0 0
  %345 = vmatmul.mubr.bf16.gmra.mxu0 %v200
  %v346 = vpop.f32.mrf.mxu0
  %v347 = vadd.f32 0.0, %v346
  %v348 = vpop.f32.mrf.mxu0
  %v349 = vpop.f32.mrf.mxu0
  %v350 = vadd.f32 0.0, %v349
  %v351 = vpop.f32.mrf.mxu0
  %352 = vmatprep.mubr.bf16.mxu0 0
  %353 = vmatmul.mubr.bf16.gmra.mxu0 %v203
  %v354 = vpop.f32.mrf.mxu0
  %v355 = vadd.f32 0.0, %v354
  %v356 = vpop.f32.mrf.mxu0
  %v357 = vpop.f32.mrf.mxu0
  %v358 = vadd.f32 0.0, %v357
  %v359 = vpop.f32.mrf.mxu0
  %360 = vmatprep.mubr.bf16.mxu0 0
  %361 = vmatmul.mubr.bf16.gmra.mxu0 %v206
  %v362 = vpop.f32.mrf.mxu0
  %v363 = vadd.f32 0.0, %v362
  %v364 = vpop.f32.mrf.mxu0
  %v365 = vpop.f32.mrf.mxu0
  %v366 = vadd.f32 0.0, %v365
  %v367 = vpop.f32.mrf.mxu0
  %368 = vdwg.mxu0
  %v369 = vpack.c.bf16 %v246, %v243
  %v370 = vpack.c.bf16 %v254, %v251
  %v371 = vpack.c.bf16 %v262, %v259
  %v372 = vpack.c.bf16 %v270, %v267
  %v373 = vpack.c.bf16 %v278, %v275
  %v374 = vpack.c.bf16 %v286, %v283
  %v375 = vpack.c.bf16 %v294, %v291
  %v376 = vpack.c.bf16 %v302, %v299
  %v377 = vpack.c.bf16 %v310, %v307
  %v378 = vpack.c.bf16 %v318, %v315
  %v379 = vpack.c.bf16 %v326, %v323
  %v380 = vpack.c.bf16 %v334, %v331
  %v381 = vpack.c.bf16 %v342, %v339
  %v382 = vpack.c.bf16 %v350, %v347
  %v383 = vpack.c.bf16 %v358, %v355
  %v384 = vpack.c.bf16 %v366, %v363
  %v401 = vunpack.c.l.b16 %v369
  %v402 = vunpack.c.h.b16 %v369
  %v403 = vunpack.c.l.b16 %v370
  %v404 = vunpack.c.h.b16 %v370
  %v405 = vunpack.c.l.b16 %v371
  %v406 = vunpack.c.h.b16 %v371
  %v407 = vunpack.c.l.b16 %v372
  %v408 = vunpack.c.h.b16 %v372
  %v409 = vunpack.c.l.b16 %v373
  %v410 = vunpack.c.h.b16 %v373
  %v411 = vunpack.c.l.b16 %v374
  %v412 = vunpack.c.h.b16 %v374
  %v413 = vunpack.c.l.b16 %v375
  %v414 = vunpack.c.h.b16 %v375
  %v415 = vunpack.c.l.b16 %v376
  %v416 = vunpack.c.h.b16 %v376
  %v417 = vunpack.c.l.b16 %v377
  %v418 = vunpack.c.h.b16 %v377
  %v419 = vunpack.c.l.b16 %v378
  %v420 = vunpack.c.h.b16 %v378
  %v421 = vunpack.c.l.b16 %v379
  %v422 = vunpack.c.h.b16 %v379
  %v423 = vunpack.c.l.b16 %v380
  %v424 = vunpack.c.h.b16 %v380
  %v425 = vunpack.c.l.b16 %v381
  %v426 = vunpack.c.h.b16 %v381
  %v427 = vunpack.c.l.b16 %v382
  %v428 = vunpack.c.h.b16 %v382
  %v429 = vunpack.c.l.b16 %v383
  %v430 = vunpack.c.h.b16 %v383
  %v431 = vunpack.c.l.b16 %v384
  %v432 = vunpack.c.h.b16 %v384
  %v433 = vpack.c.b16 %v401, %v401
  %v434 = vpack.c.b16 %v402, %v402
  %v435 = vpack.c.b16 %v403, %v403
  %v436 = vpack.c.b16 %v404, %v404
  %v437 = vpack.c.b16 %v405, %v405
  %v438 = vpack.c.b16 %v406, %v406
  %v439 = vpack.c.b16 %v407, %v407
  %v440 = vpack.c.b16 %v408, %v408
  %v441 = vpack.c.b16 %v409, %v409
  %v442 = vpack.c.b16 %v410, %v410
  %v443 = vpack.c.b16 %v411, %v411
  %v444 = vpack.c.b16 %v412, %v412
  %v445 = vpack.c.b16 %v413, %v413
  %v446 = vpack.c.b16 %v414, %v414
  %v447 = vpack.c.b16 %v415, %v415
  %v448 = vpack.c.b16 %v416, %v416
  %v449 = vpack.c.b16 %v417, %v417
  %v450 = vpack.c.b16 %v418, %v418
  %v451 = vpack.c.b16 %v419, %v419
  %v452 = vpack.c.b16 %v420, %v420
  %v453 = vpack.c.b16 %v421, %v421
  %v454 = vpack.c.b16 %v422, %v422
  %v455 = vpack.c.b16 %v423, %v423
  %v456 = vpack.c.b16 %v424, %v424
  %v457 = vpack.c.b16 %v425, %v425
  %v458 = vpack.c.b16 %v426, %v426
  %v459 = vpack.c.b16 %v427, %v427
  %v460 = vpack.c.b16 %v428, %v428
  %v461 = vpack.c.b16 %v429, %v429
  %v462 = vpack.c.b16 %v430, %v430
  %v463 = vpack.c.b16 %v431, %v431
  %v464 = vpack.c.b16 %v432, %v432
  %497 = vst [vmem:[%s3] sm:$0xf] %v433
  %498 = vst [vmem:[%s3 + $0x8] sm:$0xf] %v434
  %499 = vst [vmem:[%s3 + $0x10] sm:$0xf] %v435
  %500 = vst [vmem:[%s3 + $0x18] sm:$0xf] %v436
  %501 = vst [vmem:[%s3 + $0x20] sm:$0xf] %v437
  %502 = vst [vmem:[%s3 + $0x28] sm:$0xf] %v438
  %503 = vst [vmem:[%s3 + $0x30] sm:$0xf] %v439
  %504 = vst [vmem:[%s3 + $0x38] sm:$0xf] %v440
  %505 = vst [vmem:[%s3 + $0x40] sm:$0xf] %v441
  %506 = vst [vmem:[%s3 + $0x48] sm:$0xf] %v442
  %507 = vst [vmem:[%s3 + $0x50] sm:$0xf] %v443
  %508 = vst [vmem:[%s3 + $0x58] sm:$0xf] %v444
  %509 = vst [vmem:[%s3 + $0x60] sm:$0xf] %v445
  %510 = vst [vmem:[%s3 + $0x68] sm:$0xf] %v446
  %511 = vst [vmem:[%s3 + $0x70] sm:$0xf] %v447
  %512 = vst [vmem:[%s3 + $0x78] sm:$0xf] %v448
  %513 = vst [vmem:[%s3 + $0x80] sm:$0xf] %v449
  %514 = vst [vmem:[%s3 + $0x88] sm:$0xf] %v450
  %515 = vst [vmem:[%s3 + $0x90] sm:$0xf] %v451
  %516 = vst [vmem:[%s3 + $0x98] sm:$0xf] %v452
  %517 = vst [vmem:[%s3 + $0xa0] sm:$0xf] %v453
  %518 = vst [vmem:[%s3 + $0xa8] sm:$0xf] %v454
  %519 = vst [vmem:[%s3 + $0xb0] sm:$0xf] %v455
  %520 = vst [vmem:[%s3 + $0xb8] sm:$0xf] %v456
  %521 = vst [vmem:[%s3 + $0xc0] sm:$0xf] %v457
  %522 = vst [vmem:[%s3 + $0xc8] sm:$0xf] %v458
  %523 = vst [vmem:[%s3 + $0xd0] sm:$0xf] %v459
  %524 = vst [vmem:[%s3 + $0xd8] sm:$0xf] %v460
  %525 = vst [vmem:[%s3 + $0xe0] sm:$0xf] %v461
  %526 = vst [vmem:[%s3 + $0xe8] sm:$0xf] %v462
  %527 = vst [vmem:[%s3 + $0xf0] sm:$0xf] %v463
  %528 = vst [vmem:[%s3 + $0xf8] sm:$0xf] %v464
  %v529 = vld [vmem:[%s1] sm:$0xf]
  %v530 = vld [vmem:[%s1 + $0x4] sm:$0xf]
  %v531 = vld [vmem:[%s1 + $0x8] sm:$0xf]
  %v532 = vld [vmem:[%s1 + $0xc] sm:$0xf]
  %v533 = vld [vmem:[%s1 + $0x10] sm:$0xf]
  %v534 = vld [vmem:[%s1 + $0x14] sm:$0xf]
  %v535 = vld [vmem:[%s1 + $0x18] sm:$0xf]
  %v536 = vld [vmem:[%s1 + $0x1c] sm:$0xf]
  %v537 = vld [vmem:[%s1 + $0x20] sm:$0xf]
  %v538 = vld [vmem:[%s1 + $0x24] sm:$0xf]
  %v539 = vld [vmem:[%s1 + $0x28] sm:$0xf]
  %v540 = vld [vmem:[%s1 + $0x2c] sm:$0xf]
  %v541 = vld [vmem:[%s1 + $0x30] sm:$0xf]
  %v542 = vld [vmem:[%s1 + $0x34] sm:$0xf]
  %v543 = vld [vmem:[%s1 + $0x38] sm:$0xf]
  %v544 = vld [vmem:[%s1 + $0x3c] sm:$0xf]
  %v545 = vld [vmem:[%s1 + $0x40] sm:$0xf]
  %v546 = vld [vmem:[%s1 + $0x44] sm:$0xf]
  %v547 = vld [vmem:[%s1 + $0x48] sm:$0xf]
  %v548 = vld [vmem:[%s1 + $0x4c] sm:$0xf]
  %v549 = vld [vmem:[%s1 + $0x50] sm:$0xf]
  %v550 = vld [vmem:[%s1 + $0x54] sm:$0xf]
  %v551 = vld [vmem:[%s1 + $0x58] sm:$0xf]
  %v552 = vld [vmem:[%s1 + $0x5c] sm:$0xf]
  %v553 = vld [vmem:[%s1 + $0x60] sm:$0xf]
  %v554 = vld [vmem:[%s1 + $0x64] sm:$0xf]
  %v555 = vld [vmem:[%s1 + $0x68] sm:$0xf]
  %v556 = vld [vmem:[%s1 + $0x6c] sm:$0xf]
  %v557 = vld [vmem:[%s1 + $0x70] sm:$0xf]
  %v558 = vld [vmem:[%s1 + $0x74] sm:$0xf]
  %v559 = vld [vmem:[%s1 + $0x78] sm:$0xf]
  %v560 = vld [vmem:[%s1 + $0x7c] sm:$0xf]
  %v593 = vunpack.c.l.b16 %v529
  %v594 = vunpack.c.l.b16 %v530
  %v595 = vunpack.c.l.b16 %v531
  %v596 = vunpack.c.l.b16 %v532
  %v597 = vunpack.c.l.b16 %v533
  %v598 = vunpack.c.l.b16 %v534
  %v599 = vunpack.c.l.b16 %v535
  %v600 = vunpack.c.l.b16 %v536
  %v601 = vunpack.c.l.b16 %v537
  %v602 = vunpack.c.l.b16 %v538
  %v603 = vunpack.c.l.b16 %v539
  %v604 = vunpack.c.l.b16 %v540
  %v605 = vunpack.c.l.b16 %v541
  %v606 = vunpack.c.l.b16 %v542
  %v607 = vunpack.c.l.b16 %v543
  %v608 = vunpack.c.l.b16 %v544
  %v609 = vunpack.c.l.b16 %v545
  %v610 = vunpack.c.l.b16 %v546
  %v611 = vunpack.c.l.b16 %v547
  %v612 = vunpack.c.l.b16 %v548
  %v613 = vunpack.c.l.b16 %v549
  %v614 = vunpack.c.l.b16 %v550
  %v615 = vunpack.c.l.b16 %v551
  %v616 = vunpack.c.l.b16 %v552
  %v617 = vunpack.c.l.b16 %v553
  %v618 = vunpack.c.l.b16 %v554
  %v619 = vunpack.c.l.b16 %v555
  %v620 = vunpack.c.l.b16 %v556
  %v621 = vunpack.c.l.b16 %v557
  %v622 = vunpack.c.l.b16 %v558
  %v623 = vunpack.c.l.b16 %v559
  %v624 = vunpack.c.l.b16 %v560
  %v625 = vpack.c.b16 %v594, %v593
  %v626 = vpack.c.b16 %v596, %v595
  %v627 = vpack.c.b16 %v598, %v597
  %v628 = vpack.c.b16 %v600, %v599
  %v629 = vpack.c.b16 %v602, %v601
  %v630 = vpack.c.b16 %v604, %v603
  %v631 = vpack.c.b16 %v606, %v605
  %v632 = vpack.c.b16 %v608, %v607
  %v633 = vpack.c.b16 %v610, %v609
  %v634 = vpack.c.b16 %v612, %v611
  %v635 = vpack.c.b16 %v614, %v613
  %v636 = vpack.c.b16 %v616, %v615
  %v637 = vpack.c.b16 %v618, %v617
  %v638 = vpack.c.b16 %v620, %v619
  %v639 = vpack.c.b16 %v622, %v621
  %v640 = vpack.c.b16 %v624, %v623
  %v642 = vsel %vm159, %v625, 0
  %v645 = vsel %vm159, %v626, 0
  %v648 = vsel %vm159, %v627, 0
  %v651 = vsel %vm159, %v628, 0
  %v654 = vsel %vm159, %v629, 0
  %v657 = vsel %vm159, %v630, 0
  %v660 = vsel %vm159, %v631, 0
  %v663 = vsel %vm159, %v632, 0
  %v666 = vsel %vm159, %v633, 0
  %v669 = vsel %vm159, %v634, 0
  %v672 = vsel %vm159, %v635, 0
  %v675 = vsel %vm159, %v636, 0
  %v678 = vsel %vm159, %v637, 0
  %v681 = vsel %vm159, %v638, 0
  %v684 = vsel %vm159, %v639, 0
  %v687 = vsel %vm159, %v640, 0
  %689 = vmatprep.subr.bf16.mxu0 0
  %690 = vmatpush1.bf16.msra.mxu0 0
  %691 = vmatprep.subr.bf16.mxu0 0
  %692 = vmatpush1.bf16.msra.mxu0 0
  %693 = vmatprep.subr.bf16.mxu0 0
  %694 = vmatpush1.bf16.msra.mxu0 0
  %695 = vmatprep.subr.bf16.mxu0 0
  %696 = vmatpush1.bf16.msra.mxu0 0
  %697 = vmatprep.subr.bf16.mxu0 0
  %698 = vmatpush1.bf16.msra.mxu0 %v154
  %699 = vmatprep.subr.bf16.mxu0 0
  %700 = vmatpush1.bf16.msra.mxu0 %v153
  %701 = vmatprep.subr.bf16.mxu0 0
  %702 = vmatpush1.bf16.msra.mxu0 %v152
  %703 = vmatprep.subr.bf16.mxu0 0
  %704 = vmatpush1.bf16.msra.mxu0 %v151
  %705 = vmatprep.subr.bf16.mxu0 0
  %706 = vmatpush2.bf16.msra.mxu0 0
  %707 = vmatprep.subr.bf16.mxu0 0
  %708 = vmatpush2.bf16.msra.mxu0 0
  %709 = vmatprep.subr.bf16.mxu0 0
  %710 = vmatpush2.bf16.msra.mxu0 0
  %711 = vmatprep.subr.bf16.mxu0 0
  %712 = vmatpush2.bf16.msra.mxu0 0
  %713 = vmatprep.subr.bf16.mxu0 0
  %714 = vmatpush2.bf16.msra.mxu0 0
  %715 = vmatprep.subr.bf16.mxu0 0
  %716 = vmatpush2.bf16.msra.mxu0 0
  %717 = vmatprep.subr.bf16.mxu0 0
  %718 = vmatpush2.bf16.msra.mxu0 0
  %719 = vmatprep.subr.bf16.mxu0 0
  %720 = vmatpush2.bf16.msra.mxu0 0
  %721 = vmatprep.mubr.bf16.mxu0 0
  %722 = vmatmul.mubr.bf16.gmra.mxu0 %v642
  %v723 = vpop.f32.mrf.mxu0
  %v724 = vadd.f32 0.0, %v723
  %v725 = vpop.f32.mrf.mxu0
  %v726 = vpop.f32.mrf.mxu0
  %v727 = vadd.f32 0.0, %v726
  %v728 = vpop.f32.mrf.mxu0
  %729 = vmatprep.mubr.bf16.mxu0 0
  %730 = vmatmul.mubr.bf16.gmra.mxu0 %v645
  %v731 = vpop.f32.mrf.mxu0
  %v732 = vadd.f32 0.0, %v731
  %v733 = vpop.f32.mrf.mxu0
  %v734 = vpop.f32.mrf.mxu0
  %v735 = vadd.f32 0.0, %v734
  %v736 = vpop.f32.mrf.mxu0
  %737 = vmatprep.mubr.bf16.mxu0 0
  %738 = vmatmul.mubr.bf16.gmra.mxu0 %v648
  %v739 = vpop.f32.mrf.mxu0
  %v740 = vadd.f32 0.0, %v739
  %v741 = vpop.f32.mrf.mxu0
  %v742 = vpop.f32.mrf.mxu0
  %v743 = vadd.f32 0.0, %v742
  %v744 = vpop.f32.mrf.mxu0
  %745 = vmatprep.mubr.bf16.mxu0 0
  %746 = vmatmul.mubr.bf16.gmra.mxu0 %v651
  %v747 = vpop.f32.mrf.mxu0
  %v748 = vadd.f32 0.0, %v747
  %v749 = vpop.f32.mrf.mxu0
  %v750 = vpop.f32.mrf.mxu0
  %v751 = vadd.f32 0.0, %v750
  %v752 = vpop.f32.mrf.mxu0
  %753 = vmatprep.mubr.bf16.mxu0 0
  %754 = vmatmul.mubr.bf16.gmra.mxu0 %v654
  %v755 = vpop.f32.mrf.mxu0
  %v756 = vadd.f32 0.0, %v755
  %v757 = vpop.f32.mrf.mxu0
  %v758 = vpop.f32.mrf.mxu0
  %v759 = vadd.f32 0.0, %v758
  %v760 = vpop.f32.mrf.mxu0
  %761 = vmatprep.mubr.bf16.mxu0 0
  %762 = vmatmul.mubr.bf16.gmra.mxu0 %v657
  %v763 = vpop.f32.mrf.mxu0
  %v764 = vadd.f32 0.0, %v763
  %v765 = vpop.f32.mrf.mxu0
  %v766 = vpop.f32.mrf.mxu0
  %v767 = vadd.f32 0.0, %v766
  %v768 = vpop.f32.mrf.mxu0
  %769 = vmatprep.mubr.bf16.mxu0 0
  %770 = vmatmul.mubr.bf16.gmra.mxu0 %v660
  %v771 = vpop.f32.mrf.mxu0
  %v772 = vadd.f32 0.0, %v771
  %v773 = vpop.f32.mrf.mxu0
  %v774 = vpop.f32.mrf.mxu0
  %v775 = vadd.f32 0.0, %v774
  %v776 = vpop.f32.mrf.mxu0
  %777 = vmatprep.mubr.bf16.mxu0 0
  %778 = vmatmul.mubr.bf16.gmra.mxu0 %v663
  %v779 = vpop.f32.mrf.mxu0
  %v780 = vadd.f32 0.0, %v779
  %v781 = vpop.f32.mrf.mxu0
  %v782 = vpop.f32.mrf.mxu0
  %v783 = vadd.f32 0.0, %v782
  %v784 = vpop.f32.mrf.mxu0
  %785 = vmatprep.mubr.bf16.mxu0 0
  %786 = vmatmul.mubr.bf16.gmra.mxu0 %v666
  %v787 = vpop.f32.mrf.mxu0
  %v788 = vadd.f32 0.0, %v787
  %v789 = vpop.f32.mrf.mxu0
  %v790 = vpop.f32.mrf.mxu0
  %v791 = vadd.f32 0.0, %v790
  %v792 = vpop.f32.mrf.mxu0
  %793 = vmatprep.mubr.bf16.mxu0 0
  %794 = vmatmul.mubr.bf16.gmra.mxu0 %v669
  %v795 = vpop.f32.mrf.mxu0
  %v796 = vadd.f32 0.0, %v795
  %v797 = vpop.f32.mrf.mxu0
  %v798 = vpop.f32.mrf.mxu0
  %v799 = vadd.f32 0.0, %v798
  %v800 = vpop.f32.mrf.mxu0
  %801 = vmatprep.mubr.bf16.mxu0 0
  %802 = vmatmul.mubr.bf16.gmra.mxu0 %v672
  %v803 = vpop.f32.mrf.mxu0
  %v804 = vadd.f32 0.0, %v803
  %v805 = vpop.f32.mrf.mxu0
  %v806 = vpop.f32.mrf.mxu0
  %v807 = vadd.f32 0.0, %v806
  %v808 = vpop.f32.mrf.mxu0
  %809 = vmatprep.mubr.bf16.mxu0 0
  %810 = vmatmul.mubr.bf16.gmra.mxu0 %v675
  %v811 = vpop.f32.mrf.mxu0
  %v812 = vadd.f32 0.0, %v811
  %v813 = vpop.f32.mrf.mxu0
  %v814 = vpop.f32.mrf.mxu0
  %v815 = vadd.f32 0.0, %v814
  %v816 = vpop.f32.mrf.mxu0
  %817 = vmatprep.mubr.bf16.mxu0 0
  %818 = vmatmul.mubr.bf16.gmra.mxu0 %v678
  %v819 = vpop.f32.mrf.mxu0
  %v820 = vadd.f32 0.0, %v819
  %v821 = vpop.f32.mrf.mxu0
  %v822 = vpop.f32.mrf.mxu0
  %v823 = vadd.f32 0.0, %v822
  %v824 = vpop.f32.mrf.mxu0
  %825 = vmatprep.mubr.bf16.mxu0 0
  %826 = vmatmul.mubr.bf16.gmra.mxu0 %v681
  %v827 = vpop.f32.mrf.mxu0
  %v828 = vadd.f32 0.0, %v827
  %v829 = vpop.f32.mrf.mxu0
  %v830 = vpop.f32.mrf.mxu0
  %v831 = vadd.f32 0.0, %v830
  %v832 = vpop.f32.mrf.mxu0
  %833 = vmatprep.mubr.bf16.mxu0 0
  %834 = vmatmul.mubr.bf16.gmra.mxu0 %v684
  %v835 = vpop.f32.mrf.mxu0
  %v836 = vadd.f32 0.0, %v835
  %v837 = vpop.f32.mrf.mxu0
  %v838 = vpop.f32.mrf.mxu0
  %v839 = vadd.f32 0.0, %v838
  %v840 = vpop.f32.mrf.mxu0
  %841 = vmatprep.mubr.bf16.mxu0 0
  %842 = vmatmul.mubr.bf16.gmra.mxu0 %v687
  %v843 = vpop.f32.mrf.mxu0
  %v844 = vadd.f32 0.0, %v843
  %v845 = vpop.f32.mrf.mxu0
  %v846 = vpop.f32.mrf.mxu0
  %v847 = vadd.f32 0.0, %v846
  %v848 = vpop.f32.mrf.mxu0
  %849 = vdwg.mxu0
  %v850 = vpack.c.bf16 %v727, %v724
  %v851 = vpack.c.bf16 %v735, %v732
  %v852 = vpack.c.bf16 %v743, %v740
  %v853 = vpack.c.bf16 %v751, %v748
  %v854 = vpack.c.bf16 %v759, %v756
  %v855 = vpack.c.bf16 %v767, %v764
  %v856 = vpack.c.bf16 %v775, %v772
  %v857 = vpack.c.bf16 %v783, %v780
  %v858 = vpack.c.bf16 %v791, %v788
  %v859 = vpack.c.bf16 %v799, %v796
  %v860 = vpack.c.bf16 %v807, %v804
  %v861 = vpack.c.bf16 %v815, %v812
  %v862 = vpack.c.bf16 %v823, %v820
  %v863 = vpack.c.bf16 %v831, %v828
  %v864 = vpack.c.bf16 %v839, %v836
  %v865 = vpack.c.bf16 %v847, %v844
  %v882 = vunpack.c.l.b16 %v850
  %v883 = vunpack.c.h.b16 %v850
  %v884 = vunpack.c.l.b16 %v851
  %v885 = vunpack.c.h.b16 %v851
  %v886 = vunpack.c.l.b16 %v852
  %v887 = vunpack.c.h.b16 %v852
  %v888 = vunpack.c.l.b16 %v853
  %v889 = vunpack.c.h.b16 %v853
  %v890 = vunpack.c.l.b16 %v854
  %v891 = vunpack.c.h.b16 %v854
  %v892 = vunpack.c.l.b16 %v855
  %v893 = vunpack.c.h.b16 %v855
  %v894 = vunpack.c.l.b16 %v856
  %v895 = vunpack.c.h.b16 %v856
  %v896 = vunpack.c.l.b16 %v857
  %v897 = vunpack.c.h.b16 %v857
  %v898 = vunpack.c.l.b16 %v858
  %v899 = vunpack.c.h.b16 %v858
  %v900 = vunpack.c.l.b16 %v859
  %v901 = vunpack.c.h.b16 %v859
  %v902 = vunpack.c.l.b16 %v860
  %v903 = vunpack.c.h.b16 %v860
  %v904 = vunpack.c.l.b16 %v861
  %v905 = vunpack.c.h.b16 %v861
  %v906 = vunpack.c.l.b16 %v862
  %v907 = vunpack.c.h.b16 %v862
  %v908 = vunpack.c.l.b16 %v863
  %v909 = vunpack.c.h.b16 %v863
  %v910 = vunpack.c.l.b16 %v864
  %v911 = vunpack.c.h.b16 %v864
  %v912 = vunpack.c.l.b16 %v865
  %v913 = vunpack.c.h.b16 %v865
  %v914 = vpack.c.b16 %v882, %v882
  %v915 = vpack.c.b16 %v883, %v883
  %v916 = vpack.c.b16 %v884, %v884
  %v917 = vpack.c.b16 %v885, %v885
  %v918 = vpack.c.b16 %v886, %v886
  %v919 = vpack.c.b16 %v887, %v887
  %v920 = vpack.c.b16 %v888, %v888
  %v921 = vpack.c.b16 %v889, %v889
  %v922 = vpack.c.b16 %v890, %v890
  %v923 = vpack.c.b16 %v891, %v891
  %v924 = vpack.c.b16 %v892, %v892
  %v925 = vpack.c.b16 %v893, %v893
  %v926 = vpack.c.b16 %v894, %v894
  %v927 = vpack.c.b16 %v895, %v895
  %v928 = vpack.c.b16 %v896, %v896
  %v929 = vpack.c.b16 %v897, %v897
  %v930 = vpack.c.b16 %v898, %v898
  %v931 = vpack.c.b16 %v899, %v899
  %v932 = vpack.c.b16 %v900, %v900
  %v933 = vpack.c.b16 %v901, %v901
  %v934 = vpack.c.b16 %v902, %v902
  %v935 = vpack.c.b16 %v903, %v903
  %v936 = vpack.c.b16 %v904, %v904
  %v937 = vpack.c.b16 %v905, %v905
  %v938 = vpack.c.b16 %v906, %v906
  %v939 = vpack.c.b16 %v907, %v907
  %v940 = vpack.c.b16 %v908, %v908
  %v941 = vpack.c.b16 %v909, %v909
  %v942 = vpack.c.b16 %v910, %v910
  %v943 = vpack.c.b16 %v911, %v911
  %v944 = vpack.c.b16 %v912, %v912
  %v945 = vpack.c.b16 %v913, %v913
  %978 = vst [vmem:[%s3 + $0x4] sm:$0xf] %v914
  %979 = vst [vmem:[%s3 + $0xc] sm:$0xf] %v915
  %980 = vst [vmem:[%s3 + $0x14] sm:$0xf] %v916
  %981 = vst [vmem:[%s3 + $0x1c] sm:$0xf] %v917
  %982 = vst [vmem:[%s3 + $0x24] sm:$0xf] %v918
  %983 = vst [vmem:[%s3 + $0x2c] sm:$0xf] %v919
  %984 = vst [vmem:[%s3 + $0x34] sm:$0xf] %v920
  %985 = vst [vmem:[%s3 + $0x3c] sm:$0xf] %v921
  %986 = vst [vmem:[%s3 + $0x44] sm:$0xf] %v922
  %987 = vst [vmem:[%s3 + $0x4c] sm:$0xf] %v923
  %988 = vst [vmem:[%s3 + $0x54] sm:$0xf] %v924
  %989 = vst [vmem:[%s3 + $0x5c] sm:$0xf] %v925
  %990 = vst [vmem:[%s3 + $0x64] sm:$0xf] %v926
  %991 = vst [vmem:[%s3 + $0x6c] sm:$0xf] %v927
  %992 = vst [vmem:[%s3 + $0x74] sm:$0xf] %v928
  %993 = vst [vmem:[%s3 + $0x7c] sm:$0xf] %v929
  %994 = vst [vmem:[%s3 + $0x84] sm:$0xf] %v930
  %995 = vst [vmem:[%s3 + $0x8c] sm:$0xf] %v931
  %996 = vst [vmem:[%s3 + $0x94] sm:$0xf] %v932
  %997 = vst [vmem:[%s3 + $0x9c] sm:$0xf] %v933
  %998 = vst [vmem:[%s3 + $0xa4] sm:$0xf] %v934
  %999 = vst [vmem:[%s3 + $0xac] sm:$0xf] %v935
  %1000 = vst [vmem:[%s3 + $0xb4] sm:$0xf] %v936
  %1001 = vst [vmem:[%s3 + $0xbc] sm:$0xf] %v937
  %1002 = vst [vmem:[%s3 + $0xc4] sm:$0xf] %v938
  %1003 = vst [vmem:[%s3 + $0xcc] sm:$0xf] %v939
  %1004 = vst [vmem:[%s3 + $0xd4] sm:$0xf] %v940
  %1005 = vst [vmem:[%s3 + $0xdc] sm:$0xf] %v941
  %1006 = vst [vmem:[%s3 + $0xe4] sm:$0xf] %v942
  %1007 = vst [vmem:[%s3 + $0xec] sm:$0xf] %v943
  %1008 = vst [vmem:[%s3 + $0xf4] sm:$0xf] %v944
  %1009 = vst [vmem:[%s3 + $0xfc] sm:$0xf] %v945
  // Predicated region
  $region14: #{dgi_forward.4} parent=0 // pred_check
    _
  $region15: #{dgi_forward.4} parent=0 // pred_check_branch
    %1011 = sbr.rel (0) target = $region17
  $region16: #{dgi_forward.4} parent=0 // pred_region
    _
  $region17: #{dgi_forward.4} parent=0 // pred_fallthru
    _
  // Predicated region
  $region18: #{dgi_forward.4} parent=0 // pred_check
    _
  $region19: #{dgi_forward.4} parent=0 // pred_check_branch
    %1013 = sbr.rel (0) target = $region21
  $region20: #{dgi_forward.4} parent=0 // pred_region
    _
  $region21: #{dgi_forward.4} parent=0 // pred_fallthru
    _

// kernel: dgi_forward.6
$region0: #{dgi_forward.6}
  #allocation0 [shape = 'u32[]', space=smem, size = 0x4, offset = 0x4, fixed_abs, tag = 'smem constant byte address 0x4 - core index']
  #allocation1 [shape = 'u32[144,128]{1,0:T(1,128)}', space=vmem, size = 0x12000, scoped, tag = 'internal scratch']
  #allocation2 [shape = 'f32[256,256]{1,0:T(8,128)}', space=vmem, size = 0x40000, scoped, tag = 'scratch operand']
  %s0 = inlined_call_operand.vmem [shape: bf16[256,256], index: 0, kind: input, shape index: {}]
  %s1 = inlined_call_operand.vmem [shape: bf16[256,256], index: 1, kind: input, shape index: {}]
  %s2 = inlined_call_operand.vmem [shape: bf16[256,256], index: 2, kind: output, shape index: {0}]
  %s3 = inlined_call_operand.vmem [shape: f32[1,1,128], index: 3, kind: output, shape index: {1}]
  %4 = xla_tuple %s2, %s3
  %s5 = sld [smem:[#allocation0]]
  $region34: #{dgi_forward.6} parent=0
    _
  %s7 = ssub.s32 1, %s5
  %s8 = scalar_select 0, %s7, %s5
  // Predicated region
  $region2: #{dgi_forward.6} parent=0 // pred_check
    _
  $region3: #{dgi_forward.6} parent=0 // pred_check_branch
    %10 = sbr.rel (0) target = $region5
  $region4: #{dgi_forward.6} parent=0 // pred_region
    _
  $region5: #{dgi_forward.6} parent=0 // pred_fallthru
    _
  // Predicated region
  $region6: #{dgi_forward.6} parent=0 // pred_check
    _
  $region7: #{dgi_forward.6} parent=0 // pred_check_branch
    %12 = sbr.rel (0) target = $region9
  $region8: #{dgi_forward.6} parent=0 // pred_region
    _
  $region9: #{dgi_forward.6} parent=0 // pred_fallthru
    _
  %s13 = smul.u32 0, 256
  %s14 = sshra.s32 %s13, 3
  %s15 = sand.u32 %s13, 7
  %s16 = smul.u32 %s14, 2
  %s17 = smul.addr %s16, 4
  %s18 = scalar_lea.vmem %s1, %s17
  %v19 = vld [vmem:[%s18] sm:$0xff]
  %v20 = vld [vmem:[%s18 + $0x8] sm:$0xff]
  %v21 = vld [vmem:[%s18 + $0x10] sm:$0xff]
  %v22 = vld [vmem:[%s18 + $0x18] sm:$0xff]
  %v23 = vld [vmem:[%s18 + $0x20] sm:$0xff]
  %v24 = vld [vmem:[%s18 + $0x28] sm:$0xff]
  %v25 = vld [vmem:[%s18 + $0x30] sm:$0xff]
  %v26 = vld [vmem:[%s18 + $0x38] sm:$0xff]
  %v27 = vld [vmem:[%s18 + $0x40] sm:$0xff]
  %v28 = vld [vmem:[%s18 + $0x48] sm:$0xff]
  %v29 = vld [vmem:[%s18 + $0x50] sm:$0xff]
  %v30 = vld [vmem:[%s18 + $0x58] sm:$0xff]
  %v31 = vld [vmem:[%s18 + $0x60] sm:$0xff]
  %v32 = vld [vmem:[%s18 + $0x68] sm:$0xff]
  %v33 = vld [vmem:[%s18 + $0x70] sm:$0xff]
  %v34 = vld [vmem:[%s18 + $0x78] sm:$0xff]
  %v35 = vld [vmem:[%s18 + $0x80] sm:$0xff]
  %v36 = vld [vmem:[%s18 + $0x88] sm:$0xff]
  %v37 = vld [vmem:[%s18 + $0x90] sm:$0xff]
  %v38 = vld [vmem:[%s18 + $0x98] sm:$0xff]
  %v39 = vld [vmem:[%s18 + $0xa0] sm:$0xff]
  %v40 = vld [vmem:[%s18 + $0xa8] sm:$0xff]
  %v41 = vld [vmem:[%s18 + $0xb0] sm:$0xff]
  %v42 = vld [vmem:[%s18 + $0xb8] sm:$0xff]
  %v43 = vld [vmem:[%s18 + $0xc0] sm:$0xff]
  %v44 = vld [vmem:[%s18 + $0xc8] sm:$0xff]
  %v45 = vld [vmem:[%s18 + $0xd0] sm:$0xff]
  %v46 = vld [vmem:[%s18 + $0xd8] sm:$0xff]
  %v47 = vld [vmem:[%s18 + $0xe0] sm:$0xff]
  %v48 = vld [vmem:[%s18 + $0xe8] sm:$0xff]
  %v49 = vld [vmem:[%s18 + $0xf0] sm:$0xff]
  %v50 = vld [vmem:[%s18 + $0xf8] sm:$0xff]
  %p51 = scmp.eq.s32.totalorder 0, 0
  // Predicated region
  $region10: #{dgi_forward.6} parent=0 // pred_check
    %p52 = pneg %p51
  $region11: #{dgi_forward.6} parent=0 // pred_check_branch
    %54 = sbr.rel (%p52) target = $region13
  $region12: #{dgi_forward.6} parent=0 // pred_region
    %55 = vst [vmem:[#allocation2] sm:$0xff] 0.0
    %56 = vst [vmem:[#allocation2 + $0x8] sm:$0xff] 0.0
    %57 = vst [vmem:[#allocation2 + $0x10] sm:$0xff] 0.0
    %58 = vst [vmem:[#allocation2 + $0x18] sm:$0xff] 0.0
    %59 = vst [vmem:[#allocation2 + $0x20] sm:$0xff] 0.0
    %60 = vst [vmem:[#allocation2 + $0x28] sm:$0xff] 0.0
    %61 = vst [vmem:[#allocation2 + $0x30] sm:$0xff] 0.0
    %62 = vst [vmem:[#allocation2 + $0x38] sm:$0xff] 0.0
    %63 = vst [vmem:[#allocation2 + $0x40] sm:$0xff] 0.0
    %64 = vst [vmem:[#allocation2 + $0x48] sm:$0xff] 0.0
    %65 = vst [vmem:[#allocation2 + $0x50] sm:$0xff] 0.0
    %66 = vst [vmem:[#allocation2 + $0x58] sm:$0xff] 0.0
    %67 = vst [vmem:[#allocation2 + $0x60] sm:$0xff] 0.0
    %68 = vst [vmem:[#allocation2 + $0x68] sm:$0xff] 0.0
    %69 = vst [vmem:[#allocation2 + $0x70] sm:$0xff] 0.0
    %70 = vst [vmem:[#allocation2 + $0x78] sm:$0xff] 0.0
    %71 = vst [vmem:[#allocation2 + $0x80] sm:$0xff] 0.0
    %72 = vst [vmem:[#allocation2 + $0x88] sm:$0xff] 0.0
    %73 = vst [vmem:[#allocation2 + $0x90] sm:$0xff] 0.0
    %74 = vst [vmem:[#allocation2 + $0x98] sm:$0xff] 0.0
    %75 = vst [vmem:[#allocation2 + $0xa0] sm:$0xff] 0.0
    %76 = vst [vmem:[#allocation2 + $0xa8] sm:$0xff] 0.0
    %77 = vst [vmem:[#allocation2 + $0xb0] sm:$0xff] 0.0
    %78 = vst [vmem:[#allocation2 + $0xb8] sm:$0xff] 0.0
    %79 = vst [vmem:[#allocation2 + $0xc0] sm:$0xff] 0.0
    %80 = vst [vmem:[#allocation2 + $0xc8] sm:$0xff] 0.0
    %81 = vst [vmem:[#allocation2 + $0xd0] sm:$0xff] 0.0
    %82 = vst [vmem:[#allocation2 + $0xd8] sm:$0xff] 0.0
    %83 = vst [vmem:[#allocation2 + $0xe0] sm:$0xff] 0.0
    %84 = vst [vmem:[#allocation2 + $0xe8] sm:$0xff] 0.0
    %85 = vst [vmem:[#allocation2 + $0xf0] sm:$0xff] 0.0
    %86 = vst [vmem:[#allocation2 + $0xf8] sm:$0xff] 0.0
    %87 = vst [vmem:[#allocation2 + $0x100] sm:$0xff] 0.0
    %88 = vst [vmem:[#allocation2 + $0x108] sm:$0xff] 0.0
    %89 = vst [vmem:[#allocation2 + $0x110] sm:$0xff] 0.0
    %90 = vst [vmem:[#allocation2 + $0x118] sm:$0xff] 0.0
    %91 = vst [vmem:[#allocation2 + $0x120] sm:$0xff] 0.0
    %92 = vst [vmem:[#allocation2 + $0x128] sm:$0xff] 0.0
    %93 = vst [vmem:[#allocation2 + $0x130] sm:$0xff] 0.0
    %94 = vst [vmem:[#allocation2 + $0x138] sm:$0xff] 0.0
    %95 = vst [vmem:[#allocation2 + $0x140] sm:$0xff] 0.0
    %96 = vst [vmem:[#allocation2 + $0x148] sm:$0xff] 0.0
    %97 = vst [vmem:[#allocation2 + $0x150] sm:$0xff] 0.0
    %98 = vst [vmem:[#allocation2 + $0x158] sm:$0xff] 0.0
    %99 = vst [vmem:[#allocation2 + $0x160] sm:$0xff] 0.0
    %100 = vst [vmem:[#allocation2 + $0x168] sm:$0xff] 0.0
    %101 = vst [vmem:[#allocation2 + $0x170] sm:$0xff] 0.0
    %102 = vst [vmem:[#allocation2 + $0x178] sm:$0xff] 0.0
    %103 = vst [vmem:[#allocation2 + $0x180] sm:$0xff] 0.0
    %104 = vst [vmem:[#allocation2 + $0x188] sm:$0xff] 0.0
    %105 = vst [vmem:[#allocation2 + $0x190] sm:$0xff] 0.0
    %106 = vst [vmem:[#allocation2 + $0x198] sm:$0xff] 0.0
    %107 = vst [vmem:[#allocation2 + $0x1a0] sm:$0xff] 0.0
    %108 = vst [vmem:[#allocation2 + $0x1a8] sm:$0xff] 0.0
    %109 = vst [vmem:[#allocation2 + $0x1b0] sm:$0xff] 0.0
    %110 = vst [vmem:[#allocation2 + $0x1b8] sm:$0xff] 0.0
    %111 = vst [vmem:[#allocation2 + $0x1c0] sm:$0xff] 0.0
    %112 = vst [vmem:[#allocation2 + $0x1c8] sm:$0xff] 0.0
    %113 = vst [vmem:[#allocation2 + $0x1d0] sm:$0xff] 0.0
    %114 = vst [vmem:[#allocation2 + $0x1d8] sm:$0xff] 0.0
    %115 = vst [vmem:[#allocation2 + $0x1e0] sm:$0xff] 0.0
    %116 = vst [vmem:[#allocation2 + $0x1e8] sm:$0xff] 0.0
    %117 = vst [vmem:[#allocation2 + $0x1f0] sm:$0xff] 0.0
    %118 = vst [vmem:[#allocation2 + $0x1f8] sm:$0xff] 0.0
  $region13: #{dgi_forward.6} parent=0 // pred_fallthru
    _
  %v119 = vld [vmem:[#allocation2] sm:$0xff]
  %v120 = vld [vmem:[#allocation2 + $0x8] sm:$0xff]
  %v121 = vld [vmem:[#allocation2 + $0x10] sm:$0xff]
  %v122 = vld [vmem:[#allocation2 + $0x18] sm:$0xff]
  %v123 = vld [vmem:[#allocation2 + $0x20] sm:$0xff]
  %v124 = vld [vmem:[#allocation2 + $0x28] sm:$0xff]
  %v125 = vld [vmem:[#allocation2 + $0x30] sm:$0xff]
  %v126 = vld [vmem:[#allocation2 + $0x38] sm:$0xff]
  %v127 = vld [vmem:[#allocation2 + $0x40] sm:$0xff]
  %v128 = vld [vmem:[#allocation2 + $0x48] sm:$0xff]
  %v129 = vld [vmem:[#allocation2 + $0x50] sm:$0xff]
  %v130 = vld [vmem:[#allocation2 + $0x58] sm:$0xff]
  %v131 = vld [vmem:[#allocation2 + $0x60] sm:$0xff]
  %v132 = vld [vmem:[#allocation2 + $0x68] sm:$0xff]
  %v133 = vld [vmem:[#allocation2 + $0x70] sm:$0xff]
  %v134 = vld [vmem:[#allocation2 + $0x78] sm:$0xff]
  %v135 = vld [vmem:[#allocation2 + $0x80] sm:$0xff]
  %v136 = vld [vmem:[#allocation2 + $0x88] sm:$0xff]
  %v137 = vld [vmem:[#allocation2 + $0x90] sm:$0xff]
  %v138 = vld [vmem:[#allocation2 + $0x98] sm:$0xff]
  %v139 = vld [vmem:[#allocation2 + $0xa0] sm:$0xff]
  %v140 = vld [vmem:[#allocation2 + $0xa8] sm:$0xff]
  %v141 = vld [vmem:[#allocation2 + $0xb0] sm:$0xff]
  %v142 = vld [vmem:[#allocation2 + $0xb8] sm:$0xff]
  %v143 = vld [vmem:[#allocation2 + $0xc0] sm:$0xff]
  %v144 = vld [vmem:[#allocation2 + $0xc8] sm:$0xff]
  %v145 = vld [vmem:[#allocation2 + $0xd0] sm:$0xff]
  %v146 = vld [vmem:[#allocation2 + $0xd8] sm:$0xff]
  %v147 = vld [vmem:[#allocation2 + $0xe0] sm:$0xff]
  %v148 = vld [vmem:[#allocation2 + $0xe8] sm:$0xff]
  %v149 = vld [vmem:[#allocation2 + $0xf0] sm:$0xff]
  %v150 = vld [vmem:[#allocation2 + $0xf8] sm:$0xff]
  %v151 = vld [vmem:[#allocation2 + $0x100] sm:$0xff]
  %v152 = vld [vmem:[#allocation2 + $0x108] sm:$0xff]
  %v153 = vld [vmem:[#allocation2 + $0x110] sm:$0xff]
  %v154 = vld [vmem:[#allocation2 + $0x118] sm:$0xff]
  %v155 = vld [vmem:[#allocation2 + $0x120] sm:$0xff]
  %v156 = vld [vmem:[#allocation2 + $0x128] sm:$0xff]
  %v157 = vld [vmem:[#allocation2 + $0x130] sm:$0xff]
  %v158 = vld [vmem:[#allocation2 + $0x138] sm:$0xff]
  %v159 = vld [vmem:[#allocation2 + $0x140] sm:$0xff]
  %v160 = vld [vmem:[#allocation2 + $0x148] sm:$0xff]
  %v161 = vld [vmem:[#allocation2 + $0x150] sm:$0xff]
  %v162 = vld [vmem:[#allocation2 + $0x158] sm:$0xff]
  %v163 = vld [vmem:[#allocation2 + $0x160] sm:$0xff]
  %v164 = vld [vmem:[#allocation2 + $0x168] sm:$0xff]
  %v165 = vld [vmem:[#allocation2 + $0x170] sm:$0xff]
  %v166 = vld [vmem:[#allocation2 + $0x178] sm:$0xff]
  %v167 = vld [vmem:[#allocation2 + $0x180] sm:$0xff]
  %v168 = vld [vmem:[#allocation2 + $0x188] sm:$0xff]
  %v169 = vld [vmem:[#allocation2 + $0x190] sm:$0xff]
  %v170 = vld [vmem:[#allocation2 + $0x198] sm:$0xff]
  %v171 = vld [vmem:[#allocation2 + $0x1a0] sm:$0xff]
  %v172 = vld [vmem:[#allocation2 + $0x1a8] sm:$0xff]
  %v173 = vld [vmem:[#allocation2 + $0x1b0] sm:$0xff]
  %v174 = vld [vmem:[#allocation2 + $0x1b8] sm:$0xff]
  %v175 = vld [vmem:[#allocation2 + $0x1c0] sm:$0xff]
  %v176 = vld [vmem:[#allocation2 + $0x1c8] sm:$0xff]
  %v177 = vld [vmem:[#allocation2 + $0x1d0] sm:$0xff]
  %v178 = vld [vmem:[#allocation2 + $0x1d8] sm:$0xff]
  %v179 = vld [vmem:[#allocation2 + $0x1e0] sm:$0xff]
  %v180 = vld [vmem:[#allocation2 + $0x1e8] sm:$0xff]
  %v181 = vld [vmem:[#allocation2 + $0x1f0] sm:$0xff]
  %v182 = vld [vmem:[#allocation2 + $0x1f8] sm:$0xff]
  %v183 = vld [vmem:[%s0] sm:$0xff]
  %v184 = vld [vmem:[%s0 + $0x8] sm:$0xff]
  %v185 = vld [vmem:[%s0 + $0x10] sm:$0xff]
  %v186 = vld [vmem:[%s0 + $0x18] sm:$0xff]
  %v187 = vld [vmem:[%s0 + $0x20] sm:$0xff]
  %v188 = vld [vmem:[%s0 + $0x28] sm:$0xff]
  %v189 = vld [vmem:[%s0 + $0x30] sm:$0xff]
  %v190 = vld [vmem:[%s0 + $0x38] sm:$0xff]
  %v191 = vld [vmem:[%s0 + $0x40] sm:$0xff]
  %v192 = vld [vmem:[%s0 + $0x48] sm:$0xff]
  %v193 = vld [vmem:[%s0 + $0x50] sm:$0xff]
  %v194 = vld [vmem:[%s0 + $0x58] sm:$0xff]
  %v195 = vld [vmem:[%s0 + $0x60] sm:$0xff]
  %v196 = vld [vmem:[%s0 + $0x68] sm:$0xff]
  %v197 = vld [vmem:[%s0 + $0x70] sm:$0xff]
  %v198 = vld [vmem:[%s0 + $0x78] sm:$0xff]
  %v199 = vld [vmem:[%s0 + $0x80] sm:$0xff]
  %v200 = vld [vmem:[%s0 + $0x88] sm:$0xff]
  %v201 = vld [vmem:[%s0 + $0x90] sm:$0xff]
  %v202 = vld [vmem:[%s0 + $0x98] sm:$0xff]
  %v203 = vld [vmem:[%s0 + $0xa0] sm:$0xff]
  %v204 = vld [vmem:[%s0 + $0xa8] sm:$0xff]
  %v205 = vld [vmem:[%s0 + $0xb0] sm:$0xff]
  %v206 = vld [vmem:[%s0 + $0xb8] sm:$0xff]
  %v207 = vld [vmem:[%s0 + $0xc0] sm:$0xff]
  %v208 = vld [vmem:[%s0 + $0xc8] sm:$0xff]
  %v209 = vld [vmem:[%s0 + $0xd0] sm:$0xff]
  %v210 = vld [vmem:[%s0 + $0xd8] sm:$0xff]
  %v211 = vld [vmem:[%s0 + $0xe0] sm:$0xff]
  %v212 = vld [vmem:[%s0 + $0xe8] sm:$0xff]
  %v213 = vld [vmem:[%s0 + $0xf0] sm:$0xff]
  %v214 = vld [vmem:[%s0 + $0xf8] sm:$0xff]
  %v247 = vunpack.c.l.b16 %v183
  %v248 = vunpack.c.h.b16 %v183
  %v249 = vunpack.c.l.b16 %v184
  %v250 = vunpack.c.h.b16 %v184
  %v251 = vunpack.c.l.b16 %v185
  %v252 = vunpack.c.h.b16 %v185
  %v253 = vunpack.c.l.b16 %v186
  %v254 = vunpack.c.h.b16 %v186
  %v255 = vunpack.c.l.b16 %v187
  %v256 = vunpack.c.h.b16 %v187
  %v257 = vunpack.c.l.b16 %v188
  %v258 = vunpack.c.h.b16 %v188
  %v259 = vunpack.c.l.b16 %v189
  %v260 = vunpack.c.h.b16 %v189
  %v261 = vunpack.c.l.b16 %v190
  %v262 = vunpack.c.h.b16 %v190
  %v263 = vunpack.c.l.b16 %v191
  %v264 = vunpack.c.h.b16 %v191
  %v265 = vunpack.c.l.b16 %v192
  %v266 = vunpack.c.h.b16 %v192
  %v267 = vunpack.c.l.b16 %v193
  %v268 = vunpack.c.h.b16 %v193
  %v269 = vunpack.c.l.b16 %v194
  %v270 = vunpack.c.h.b16 %v194
  %v271 = vunpack.c.l.b16 %v195
  %v272 = vunpack.c.h.b16 %v195
  %v273 = vunpack.c.l.b16 %v196
  %v274 = vunpack.c.h.b16 %v196
  %v275 = vunpack.c.l.b16 %v197
  %v276 = vunpack.c.h.b16 %v197
  %v277 = vunpack.c.l.b16 %v198
  %v278 = vunpack.c.h.b16 %v198
  %v279 = vunpack.c.l.b16 %v199
  %v280 = vunpack.c.h.b16 %v199
  %v281 = vunpack.c.l.b16 %v200
  %v282 = vunpack.c.h.b16 %v200
  %v283 = vunpack.c.l.b16 %v201
  %v284 = vunpack.c.h.b16 %v201
  %v285 = vunpack.c.l.b16 %v202
  %v286 = vunpack.c.h.b16 %v202
  %v287 = vunpack.c.l.b16 %v203
  %v288 = vunpack.c.h.b16 %v203
  %v289 = vunpack.c.l.b16 %v204
  %v290 = vunpack.c.h.b16 %v204
  %v291 = vunpack.c.l.b16 %v205
  %v292 = vunpack.c.h.b16 %v205
  %v293 = vunpack.c.l.b16 %v206
  %v294 = vunpack.c.h.b16 %v206
  %v295 = vunpack.c.l.b16 %v207
  %v296 = vunpack.c.h.b16 %v207
  %v297 = vunpack.c.l.b16 %v208
  %v298 = vunpack.c.h.b16 %v208
  %v299 = vunpack.c.l.b16 %v209
  %v300 = vunpack.c.h.b16 %v209
  %v301 = vunpack.c.l.b16 %v210
  %v302 = vunpack.c.h.b16 %v210
  %v303 = vunpack.c.l.b16 %v211
  %v304 = vunpack.c.h.b16 %v211
  %v305 = vunpack.c.l.b16 %v212
  %v306 = vunpack.c.h.b16 %v212
  %v307 = vunpack.c.l.b16 %v213
  %v308 = vunpack.c.h.b16 %v213
  %v309 = vunpack.c.l.b16 %v214
  %v310 = vunpack.c.h.b16 %v214
  %v311 = vpack.c.b16 %v249, %v247
  %v312 = vpack.c.b16 %v250, %v248
  %v313 = vpack.c.b16 %v253, %v251
  %v314 = vpack.c.b16 %v254, %v252
  %v315 = vpack.c.b16 %v257, %v255
  %v316 = vpack.c.b16 %v258, %v256
  %v317 = vpack.c.b16 %v261, %v259
  %v318 = vpack.c.b16 %v262, %v260
  %v319 = vpack.c.b16 %v265, %v263
  %v320 = vpack.c.b16 %v266, %v264
  %v321 = vpack.c.b16 %v269, %v267
  %v322 = vpack.c.b16 %v270, %v268
  %v323 = vpack.c.b16 %v273, %v271
  %v324 = vpack.c.b16 %v274, %v272
  %v325 = vpack.c.b16 %v277, %v275
  %v326 = vpack.c.b16 %v278, %v276
  %v327 = vpack.c.b16 %v281, %v279
  %v328 = vpack.c.b16 %v282, %v280
  %v329 = vpack.c.b16 %v285, %v283
  %v330 = vpack.c.b16 %v286, %v284
  %v331 = vpack.c.b16 %v289, %v287
  %v332 = vpack.c.b16 %v290, %v288
  %v333 = vpack.c.b16 %v293, %v291
  %v334 = vpack.c.b16 %v294, %v292
  %v335 = vpack.c.b16 %v297, %v295
  %v336 = vpack.c.b16 %v298, %v296
  %v337 = vpack.c.b16 %v301, %v299
  %v338 = vpack.c.b16 %v302, %v300
  %v339 = vpack.c.b16 %v305, %v303
  %v340 = vpack.c.b16 %v306, %v304
  %v341 = vpack.c.b16 %v309, %v307
  %v342 = vpack.c.b16 %v310, %v308
  %v407 = vunpack.c.l.b16 %v19
  %v408 = vunpack.c.h.b16 %v19
  %v409 = vunpack.c.l.b16 %v20
  %v410 = vunpack.c.h.b16 %v20
  %v411 = vunpack.c.l.b16 %v21
  %v412 = vunpack.c.h.b16 %v21
  %v413 = vunpack.c.l.b16 %v22
  %v414 = vunpack.c.h.b16 %v22
  %v415 = vunpack.c.l.b16 %v23
  %v416 = vunpack.c.h.b16 %v23
  %v417 = vunpack.c.l.b16 %v24
  %v418 = vunpack.c.h.b16 %v24
  %v419 = vunpack.c.l.b16 %v25
  %v420 = vunpack.c.h.b16 %v25
  %v421 = vunpack.c.l.b16 %v26
  %v422 = vunpack.c.h.b16 %v26
  %v423 = vunpack.c.l.b16 %v27
  %v424 = vunpack.c.h.b16 %v27
  %v425 = vunpack.c.l.b16 %v28
  %v426 = vunpack.c.h.b16 %v28
  %v427 = vunpack.c.l.b16 %v29
  %v428 = vunpack.c.h.b16 %v29
  %v429 = vunpack.c.l.b16 %v30
  %v430 = vunpack.c.h.b16 %v30
  %v431 = vunpack.c.l.b16 %v31
  %v432 = vunpack.c.h.b16 %v31
  %v433 = vunpack.c.l.b16 %v32
  %v434 = vunpack.c.h.b16 %v32
  %v435 = vunpack.c.l.b16 %v33
  %v436 = vunpack.c.h.b16 %v33
  %v437 = vunpack.c.l.b16 %v34
  %v438 = vunpack.c.h.b16 %v34
  %v439 = vunpack.c.l.b16 %v35
  %v440 = vunpack.c.h.b16 %v35
  %v441 = vunpack.c.l.b16 %v36
  %v442 = vunpack.c.h.b16 %v36
  %v443 = vunpack.c.l.b16 %v37
  %v444 = vunpack.c.h.b16 %v37
  %v445 = vunpack.c.l.b16 %v38
  %v446 = vunpack.c.h.b16 %v38
  %v447 = vunpack.c.l.b16 %v39
  %v448 = vunpack.c.h.b16 %v39
  %v449 = vunpack.c.l.b16 %v40
  %v450 = vunpack.c.h.b16 %v40
  %v451 = vunpack.c.l.b16 %v41
  %v452 = vunpack.c.h.b16 %v41
  %v453 = vunpack.c.l.b16 %v42
  %v454 = vunpack.c.h.b16 %v42
  %v455 = vunpack.c.l.b16 %v43
  %v456 = vunpack.c.h.b16 %v43
  %v457 = vunpack.c.l.b16 %v44
  %v458 = vunpack.c.h.b16 %v44
  %v459 = vunpack.c.l.b16 %v45
  %v460 = vunpack.c.h.b16 %v45
  %v461 = vunpack.c.l.b16 %v46
  %v462 = vunpack.c.h.b16 %v46
  %v463 = vunpack.c.l.b16 %v47
  %v464 = vunpack.c.h.b16 %v47
  %v465 = vunpack.c.l.b16 %v48
  %v466 = vunpack.c.h.b16 %v48
  %v467 = vunpack.c.l.b16 %v49
  %v468 = vunpack.c.h.b16 %v49
  %v469 = vunpack.c.l.b16 %v50
  %v470 = vunpack.c.h.b16 %v50
  %v471 = vpack.c.b16 %v409, %v407
  %v472 = vpack.c.b16 %v410, %v408
  %v473 = vpack.c.b16 %v413, %v411
  %v474 = vpack.c.b16 %v414, %v412
  %v475 = vpack.c.b16 %v417, %v415
  %v476 = vpack.c.b16 %v418, %v416
  %v477 = vpack.c.b16 %v421, %v419
  %v478 = vpack.c.b16 %v422, %v420
  %v479 = vpack.c.b16 %v425, %v423
  %v480 = vpack.c.b16 %v426, %v424
  %v481 = vpack.c.b16 %v429, %v427
  %v482 = vpack.c.b16 %v430, %v428
  %v483 = vpack.c.b16 %v433, %v431
  %v484 = vpack.c.b16 %v434, %v432
  %v485 = vpack.c.b16 %v437, %v435
  %v486 = vpack.c.b16 %v438, %v436
  %v487 = vpack.c.b16 %v441, %v439
  %v488 = vpack.c.b16 %v442, %v440
  %v489 = vpack.c.b16 %v445, %v443
  %v490 = vpack.c.b16 %v446, %v444
  %v491 = vpack.c.b16 %v449, %v447
  %v492 = vpack.c.b16 %v450, %v448
  %v493 = vpack.c.b16 %v453, %v451
  %v494 = vpack.c.b16 %v454, %v452
  %v495 = vpack.c.b16 %v457, %v455
  %v496 = vpack.c.b16 %v458, %v456
  %v497 = vpack.c.b16 %v461, %v459
  %v498 = vpack.c.b16 %v462, %v460
  %v499 = vpack.c.b16 %v465, %v463
  %v500 = vpack.c.b16 %v466, %v464
  %v501 = vpack.c.b16 %v469, %v467
  %v502 = vpack.c.b16 %v470, %v468
  %535 = vmatprep.subr.bf16.mxu0 %v486
  %536 = vmatpush1.bf16.msra.mxu0 %v485
  %537 = vmatprep.subr.bf16.mxu0 %v484
  %538 = vmatpush1.bf16.msra.mxu0 %v483
  %539 = vmatprep.subr.bf16.mxu0 %v482
  %540 = vmatpush1.bf16.msra.mxu0 %v481
  %541 = vmatprep.subr.bf16.mxu0 %v480
  %542 = vmatpush1.bf16.msra.mxu0 %v479
  %543 = vmatprep.subr.bf16.mxu0 %v478
  %544 = vmatpush1.bf16.msra.mxu0 %v477
  %545 = vmatprep.subr.bf16.mxu0 %v476
  %546 = vmatpush1.bf16.msra.mxu0 %v475
  %547 = vmatprep.subr.bf16.mxu0 %v474
  %548 = vmatpush1.bf16.msra.mxu0 %v473
  %549 = vmatprep.subr.bf16.mxu0 %v472
  %550 = vmatpush1.bf16.msra.mxu0 %v471
  %551 = vmatprep.subr.bf16.mxu0 %v502
  %552 = vmatpush2.bf16.msra.mxu0 %v501
  %553 = vmatprep.subr.bf16.mxu0 %v500
  %554 = vmatpush2.bf16.msra.mxu0 %v499
  %555 = vmatprep.subr.bf16.mxu0 %v498
  %556 = vmatpush2.bf16.msra.mxu0 %v497
  %557 = vmatprep.subr.bf16.mxu0 %v496
  %558 = vmatpush2.bf16.msra.mxu0 %v495
  %559 = vmatprep.subr.bf16.mxu0 %v494
  %560 = vmatpush2.bf16.msra.mxu0 %v493
  %561 = vmatprep.subr.bf16.mxu0 %v492
  %562 = vmatpush2.bf16.msra.mxu0 %v491
  %563 = vmatprep.subr.bf16.mxu0 %v490
  %564 = vmatpush2.bf16.msra.mxu0 %v489
  %565 = vmatprep.subr.bf16.mxu0 %v488
  %566 = vmatpush2.bf16.msra.mxu0 %v487
  %567 = vmatprep.mubr.bf16.mxu0 %v312
  %568 = vmatmul.mubr.bf16.gmra.mxu0 %v311
  %v569 = vpop.f32.mrf.mxu0
  %v570 = vadd.f32 0.0, %v569
  %v571 = vpop.f32.mrf.mxu0
  %v572 = vadd.f32 0.0, %v571
  %v573 = vpop.f32.mrf.mxu0
  %v574 = vadd.f32 0.0, %v573
  %v575 = vpop.f32.mrf.mxu0
  %v576 = vadd.f32 0.0, %v575
  %577 = vmatprep.mubr.bf16.mxu0 %v314
  %578 = vmatmul.mubr.bf16.gmra.mxu0 %v313
  %v579 = vpop.f32.mrf.mxu0
  %v580 = vadd.f32 0.0, %v579
  %v581 = vpop.f32.mrf.mxu0
  %v582 = vadd.f32 0.0, %v581
  %v583 = vpop.f32.mrf.mxu0
  %v584 = vadd.f32 0.0, %v583
  %v585 = vpop.f32.mrf.mxu0
  %v586 = vadd.f32 0.0, %v585
  %587 = vmatprep.mubr.bf16.mxu0 %v316
  %588 = vmatmul.mubr.bf16.gmra.mxu0 %v315
  %v589 = vpop.f32.mrf.mxu0
  %v590 = vadd.f32 0.0, %v589
  %v591 = vpop.f32.mrf.mxu0
  %v592 = vadd.f32 0.0, %v591
  %v593 = vpop.f32.mrf.mxu0
  %v594 = vadd.f32 0.0, %v593
  %v595 = vpop.f32.mrf.mxu0
  %v596 = vadd.f32 0.0, %v595
  %597 = vmatprep.mubr.bf16.mxu0 %v318
  %598 = vmatmul.mubr.bf16.gmra.mxu0 %v317
  %v599 = vpop.f32.mrf.mxu0
  %v600 = vadd.f32 0.0, %v599
  %v601 = vpop.f32.mrf.mxu0
  %v602 = vadd.f32 0.0, %v601
  %v603 = vpop.f32.mrf.mxu0
  %v604 = vadd.f32 0.0, %v603
  %v605 = vpop.f32.mrf.mxu0
  %v606 = vadd.f32 0.0, %v605
  %607 = vmatprep.mubr.bf16.mxu0 %v320
  %608 = vmatmul.mubr.bf16.gmra.mxu0 %v319
  %v609 = vpop.f32.mrf.mxu0
  %v610 = vadd.f32 0.0, %v609
  %v611 = vpop.f32.mrf.mxu0
  %v612 = vadd.f32 0.0, %v611
  %v613 = vpop.f32.mrf.mxu0
  %v614 = vadd.f32 0.0, %v613
  %v615 = vpop.f32.mrf.mxu0
  %v616 = vadd.f32 0.0, %v615
  %617 = vmatprep.mubr.bf16.mxu0 %v322
  %618 = vmatmul.mubr.bf16.gmra.mxu0 %v321
  %v619 = vpop.f32.mrf.mxu0
  %v620 = vadd.f32 0.0, %v619
  %v621 = vpop.f32.mrf.mxu0
  %v622 = vadd.f32 0.0, %v621
  %v623 = vpop.f32.mrf.mxu0
  %v624 = vadd.f32 0.0, %v623
  %v625 = vpop.f32.mrf.mxu0
  %v626 = vadd.f32 0.0, %v625
  %627 = vmatprep.mubr.bf16.mxu0 %v324
  %628 = vmatmul.mubr.bf16.gmra.mxu0 %v323
  %v629 = vpop.f32.mrf.mxu0
  %v630 = vadd.f32 0.0, %v629
  %v631 = vpop.f32.mrf.mxu0
  %v632 = vadd.f32 0.0, %v631
  %v633 = vpop.f32.mrf.mxu0
  %v634 = vadd.f32 0.0, %v633
  %v635 = vpop.f32.mrf.mxu0
  %v636 = vadd.f32 0.0, %v635
  %637 = vmatprep.mubr.bf16.mxu0 %v326
  %638 = vmatmul.mubr.bf16.gmra.mxu0 %v325
  %v639 = vpop.f32.mrf.mxu0
  %v640 = vadd.f32 0.0, %v639
  %v641 = vpop.f32.mrf.mxu0
  %v642 = vadd.f32 0.0, %v641
  %v643 = vpop.f32.mrf.mxu0
  %v644 = vadd.f32 0.0, %v643
  %v645 = vpop.f32.mrf.mxu0
  %v646 = vadd.f32 0.0, %v645
  %647 = vmatprep.mubr.bf16.mxu0 %v328
  %648 = vmatmul.mubr.bf16.gmra.mxu0 %v327
  %v649 = vpop.f32.mrf.mxu0
  %v650 = vadd.f32 0.0, %v649
  %v651 = vpop.f32.mrf.mxu0
  %v652 = vadd.f32 0.0, %v651
  %v653 = vpop.f32.mrf.mxu0
  %v654 = vadd.f32 0.0, %v653
  %v655 = vpop.f32.mrf.mxu0
  %v656 = vadd.f32 0.0, %v655
  %657 = vmatprep.mubr.bf16.mxu0 %v330
  %658 = vmatmul.mubr.bf16.gmra.mxu0 %v329
  %v659 = vpop.f32.mrf.mxu0
  %v660 = vadd.f32 0.0, %v659
  %v661 = vpop.f32.mrf.mxu0
  %v662 = vadd.f32 0.0, %v661
  %v663 = vpop.f32.mrf.mxu0
  %v664 = vadd.f32 0.0, %v663
  %v665 = vpop.f32.mrf.mxu0
  %v666 = vadd.f32 0.0, %v665
  %667 = vmatprep.mubr.bf16.mxu0 %v332
  %668 = vmatmul.mubr.bf16.gmra.mxu0 %v331
  %v669 = vpop.f32.mrf.mxu0
  %v670 = vadd.f32 0.0, %v669
  %v671 = vpop.f32.mrf.mxu0
  %v672 = vadd.f32 0.0, %v671
  %v673 = vpop.f32.mrf.mxu0
  %v674 = vadd.f32 0.0, %v673
  %v675 = vpop.f32.mrf.mxu0
  %v676 = vadd.f32 0.0, %v675
  %677 = vmatprep.mubr.bf16.mxu0 %v334
  %678 = vmatmul.mubr.bf16.gmra.mxu0 %v333
  %v679 = vpop.f32.mrf.mxu0
  %v680 = vadd.f32 0.0, %v679
  %v681 = vpop.f32.mrf.mxu0
  %v682 = vadd.f32 0.0, %v681
  %v683 = vpop.f32.mrf.mxu0
  %v684 = vadd.f32 0.0, %v683
  %v685 = vpop.f32.mrf.mxu0
  %v686 = vadd.f32 0.0, %v685
  %687 = vmatprep.mubr.bf16.mxu0 %v336
  %688 = vmatmul.mubr.bf16.gmra.mxu0 %v335
  %v689 = vpop.f32.mrf.mxu0
  %v690 = vadd.f32 0.0, %v689
  %v691 = vpop.f32.mrf.mxu0
  %v692 = vadd.f32 0.0, %v691
  %v693 = vpop.f32.mrf.mxu0
  %v694 = vadd.f32 0.0, %v693
  %v695 = vpop.f32.mrf.mxu0
  %v696 = vadd.f32 0.0, %v695
  %697 = vmatprep.mubr.bf16.mxu0 %v338
  %698 = vmatmul.mubr.bf16.gmra.mxu0 %v337
  %v699 = vpop.f32.mrf.mxu0
  %v700 = vadd.f32 0.0, %v699
  %v701 = vpop.f32.mrf.mxu0
  %v702 = vadd.f32 0.0, %v701
  %v703 = vpop.f32.mrf.mxu0
  %v704 = vadd.f32 0.0, %v703
  %v705 = vpop.f32.mrf.mxu0
  %v706 = vadd.f32 0.0, %v705
  %707 = vmatprep.mubr.bf16.mxu0 %v340
  %708 = vmatmul.mubr.bf16.gmra.mxu0 %v339
  %v709 = vpop.f32.mrf.mxu0
  %v710 = vadd.f32 0.0, %v709
  %v711 = vpop.f32.mrf.mxu0
  %v712 = vadd.f32 0.0, %v711
  %v713 = vpop.f32.mrf.mxu0
  %v714 = vadd.f32 0.0, %v713
  %v715 = vpop.f32.mrf.mxu0
  %v716 = vadd.f32 0.0, %v715
  %717 = vmatprep.mubr.bf16.mxu0 %v342
  %718 = vmatmul.mubr.bf16.gmra.mxu0 %v341
  %v719 = vpop.f32.mrf.mxu0
  %v720 = vadd.f32 0.0, %v719
  %v721 = vpop.f32.mrf.mxu0
  %v722 = vadd.f32 0.0, %v721
  %v723 = vpop.f32.mrf.mxu0
  %v724 = vadd.f32 0.0, %v723
  %v725 = vpop.f32.mrf.mxu0
  %v726 = vadd.f32 0.0, %v725
  %727 = vdwg.mxu0
  %v728 = vadd.f32 %v119, %v570
  %v729 = vadd.f32 %v120, %v572
  %v730 = vadd.f32 %v121, %v574
  %v731 = vadd.f32 %v122, %v576
  %v732 = vadd.f32 %v123, %v580
  %v733 = vadd.f32 %v124, %v582
  %v734 = vadd.f32 %v125, %v584
  %v735 = vadd.f32 %v126, %v586
  %v736 = vadd.f32 %v127, %v590
  %v737 = vadd.f32 %v128, %v592
  %v738 = vadd.f32 %v129, %v594
  %v739 = vadd.f32 %v130, %v596
  %v740 = vadd.f32 %v131, %v600
  %v741 = vadd.f32 %v132, %v602
  %v742 = vadd.f32 %v133, %v604
  %v743 = vadd.f32 %v134, %v606
  %v744 = vadd.f32 %v135, %v610
  %v745 = vadd.f32 %v136, %v612
  %v746 = vadd.f32 %v137, %v614
  %v747 = vadd.f32 %v138, %v616
  %v748 = vadd.f32 %v139, %v620
  %v749 = vadd.f32 %v140, %v622
  %v750 = vadd.f32 %v141, %v624
  %v751 = vadd.f32 %v142, %v626
  %v752 = vadd.f32 %v143, %v630
  %v753 = vadd.f32 %v144, %v632
  %v754 = vadd.f32 %v145, %v634
  %v755 = vadd.f32 %v146, %v636
  %v756 = vadd.f32 %v147, %v640
  %v757 = vadd.f32 %v148, %v642
  %v758 = vadd.f32 %v149, %v644
  %v759 = vadd.f32 %v150, %v646
  %v760 = vadd.f32 %v151, %v650
  %v761 = vadd.f32 %v152, %v652
  %v762 = vadd.f32 %v153, %v654
  %v763 = vadd.f32 %v154, %v656
  %v764 = vadd.f32 %v155, %v660
  %v765 = vadd.f32 %v156, %v662
  %v766 = vadd.f32 %v157, %v664
  %v767 = vadd.f32 %v158, %v666
  %v768 = vadd.f32 %v159, %v670
  %v769 = vadd.f32 %v160, %v672
  %v770 = vadd.f32 %v161, %v674
  %v771 = vadd.f32 %v162, %v676
  %v772 = vadd.f32 %v163, %v680
  %v773 = vadd.f32 %v164, %v682
  %v774 = vadd.f32 %v165, %v684
  %v775 = vadd.f32 %v166, %v686
  %v776 = vadd.f32 %v167, %v690
  %v777 = vadd.f32 %v168, %v692
  %v778 = vadd.f32 %v169, %v694
  %v779 = vadd.f32 %v170, %v696
  %v780 = vadd.f32 %v171, %v700
  %v781 = vadd.f32 %v172, %v702
  %v782 = vadd.f32 %v173, %v704
  %v783 = vadd.f32 %v174, %v706
  %v784 = vadd.f32 %v175, %v710
  %v785 = vadd.f32 %v176, %v712
  %v786 = vadd.f32 %v177, %v714
  %v787 = vadd.f32 %v178, %v716
  %v788 = vadd.f32 %v179, %v720
  %v789 = vadd.f32 %v180, %v722
  %v790 = vadd.f32 %v181, %v724
  %v791 = vadd.f32 %v182, %v726
  %792 = vst [vmem:[#allocation2] sm:$0xff] %v728
  %793 = vst [vmem:[#allocation2 + $0x8] sm:$0xff] %v729
  %794 = vst [vmem:[#allocation2 + $0x10] sm:$0xff] %v730
  %795 = vst [vmem:[#allocation2 + $0x18] sm:$0xff] %v731
  %796 = vst [vmem:[#allocation2 + $0x20] sm:$0xff] %v732
  %797 = vst [vmem:[#allocation2 + $0x28] sm:$0xff] %v733
  %798 = vst [vmem:[#allocation2 + $0x30] sm:$0xff] %v734
  %799 = vst [vmem:[#allocation2 + $0x38] sm:$0xff] %v735
  %800 = vst [vmem:[#allocation2 + $0x40] sm:$0xff] %v736
  %801 = vst [vmem:[#allocation2 + $0x48] sm:$0xff] %v737
  %802 = vst [vmem:[#allocation2 + $0x50] sm:$0xff] %v738
  %803 = vst [vmem:[#allocation2 + $0x58] sm:$0xff] %v739
  %804 = vst [vmem:[#allocation2 + $0x60] sm:$0xff] %v740
  %805 = vst [vmem:[#allocation2 + $0x68] sm:$0xff] %v741
  %806 = vst [vmem:[#allocation2 + $0x70] sm:$0xff] %v742
  %807 = vst [vmem:[#allocation2 + $0x78] sm:$0xff] %v743
  %808 = vst [vmem:[#allocation2 + $0x80] sm:$0xff] %v744
  %809 = vst [vmem:[#allocation2 + $0x88] sm:$0xff] %v745
  %810 = vst [vmem:[#allocation2 + $0x90] sm:$0xff] %v746
  %811 = vst [vmem:[#allocation2 + $0x98] sm:$0xff] %v747
  %812 = vst [vmem:[#allocation2 + $0xa0] sm:$0xff] %v748
  %813 = vst [vmem:[#allocation2 + $0xa8] sm:$0xff] %v749
  %814 = vst [vmem:[#allocation2 + $0xb0] sm:$0xff] %v750
  %815 = vst [vmem:[#allocation2 + $0xb8] sm:$0xff] %v751
  %816 = vst [vmem:[#allocation2 + $0xc0] sm:$0xff] %v752
  %817 = vst [vmem:[#allocation2 + $0xc8] sm:$0xff] %v753
  %818 = vst [vmem:[#allocation2 + $0xd0] sm:$0xff] %v754
  %819 = vst [vmem:[#allocation2 + $0xd8] sm:$0xff] %v755
  %820 = vst [vmem:[#allocation2 + $0xe0] sm:$0xff] %v756
  %821 = vst [vmem:[#allocation2 + $0xe8] sm:$0xff] %v757
  %822 = vst [vmem:[#allocation2 + $0xf0] sm:$0xff] %v758
  %823 = vst [vmem:[#allocation2 + $0xf8] sm:$0xff] %v759
  %824 = vst [vmem:[#allocation2 + $0x100] sm:$0xff] %v760
  %825 = vst [vmem:[#allocation2 + $0x108] sm:$0xff] %v761
  %826 = vst [vmem:[#allocation2 + $0x110] sm:$0xff] %v762
  %827 = vst [vmem:[#allocation2 + $0x118] sm:$0xff] %v763
  %828 = vst [vmem:[#allocation2 + $0x120] sm:$0xff] %v764
  %829 = vst [vmem:[#allocation2 + $0x128] sm:$0xff] %v765
  %830 = vst [vmem:[#allocation2 + $0x130] sm:$0xff] %v766
  %831 = vst [vmem:[#allocation2 + $0x138] sm:$0xff] %v767
  %832 = vst [vmem:[#allocation2 + $0x140] sm:$0xff] %v768
  %833 = vst [vmem:[#allocation2 + $0x148] sm:$0xff] %v769
  %834 = vst [vmem:[#allocation2 + $0x150] sm:$0xff] %v770
  %835 = vst [vmem:[#allocation2 + $0x158] sm:$0xff] %v771
  %836 = vst [vmem:[#allocation2 + $0x160] sm:$0xff] %v772
  %837 = vst [vmem:[#allocation2 + $0x168] sm:$0xff] %v773
  %838 = vst [vmem:[#allocation2 + $0x170] sm:$0xff] %v774
  %839 = vst [vmem:[#allocation2 + $0x178] sm:$0xff] %v775
  %840 = vst [vmem:[#allocation2 + $0x180] sm:$0xff] %v776
  %841 = vst [vmem:[#allocation2 + $0x188] sm:$0xff] %v777
  %842 = vst [vmem:[#allocation2 + $0x190] sm:$0xff] %v778
  %843 = vst [vmem:[#allocation2 + $0x198] sm:$0xff] %v779
  %844 = vst [vmem:[#allocation2 + $0x1a0] sm:$0xff] %v780
  %845 = vst [vmem:[#allocation2 + $0x1a8] sm:$0xff] %v781
  %846 = vst [vmem:[#allocation2 + $0x1b0] sm:$0xff] %v782
  %847 = vst [vmem:[#allocation2 + $0x1b8] sm:$0xff] %v783
  %848 = vst [vmem:[#allocation2 + $0x1c0] sm:$0xff] %v784
  %849 = vst [vmem:[#allocation2 + $0x1c8] sm:$0xff] %v785
  %850 = vst [vmem:[#allocation2 + $0x1d0] sm:$0xff] %v786
  %851 = vst [vmem:[#allocation2 + $0x1d8] sm:$0xff] %v787
  %852 = vst [vmem:[#allocation2 + $0x1e0] sm:$0xff] %v788
  %853 = vst [vmem:[#allocation2 + $0x1e8] sm:$0xff] %v789
  %854 = vst [vmem:[#allocation2 + $0x1f0] sm:$0xff] %v790
  %855 = vst [vmem:[#allocation2 + $0x1f8] sm:$0xff] %v791
  // Predicated region
  $region14: #{dgi_forward.6} parent=0 // pred_check
    %p856 = pneg %p51
  $region15: #{dgi_forward.6} parent=0 // pred_check_branch
    %858 = sbr.rel (%p856) target = $region17
  $region16: #{dgi_forward.6} parent=0 // pred_region
    %v859 = vld [vmem:[#allocation2] sm:$0xff]
    %v860 = vld [vmem:[#allocation2 + $0x8] sm:$0xff]
    %v861 = vld [vmem:[#allocation2 + $0x10] sm:$0xff]
    %v862 = vld [vmem:[#allocation2 + $0x18] sm:$0xff]
    %v863 = vld [vmem:[#allocation2 + $0x20] sm:$0xff]
    %v864 = vld [vmem:[#allocation2 + $0x28] sm:$0xff]
    %v865 = vld [vmem:[#allocation2 + $0x30] sm:$0xff]
    %v866 = vld [vmem:[#allocation2 + $0x38] sm:$0xff]
    %v867 = vld [vmem:[#allocation2 + $0x40] sm:$0xff]
    %v868 = vld [vmem:[#allocation2 + $0x48] sm:$0xff]
    %v869 = vld [vmem:[#allocation2 + $0x50] sm:$0xff]
    %v870 = vld [vmem:[#allocation2 + $0x58] sm:$0xff]
    %v871 = vld [vmem:[#allocation2 + $0x60] sm:$0xff]
    %v872 = vld [vmem:[#allocation2 + $0x68] sm:$0xff]
    %v873 = vld [vmem:[#allocation2 + $0x70] sm:$0xff]
    %v874 = vld [vmem:[#allocation2 + $0x78] sm:$0xff]
    %v875 = vld [vmem:[#allocation2 + $0x80] sm:$0xff]
    %v876 = vld [vmem:[#allocation2 + $0x88] sm:$0xff]
    %v877 = vld [vmem:[#allocation2 + $0x90] sm:$0xff]
    %v878 = vld [vmem:[#allocation2 + $0x98] sm:$0xff]
    %v879 = vld [vmem:[#allocation2 + $0xa0] sm:$0xff]
    %v880 = vld [vmem:[#allocation2 + $0xa8] sm:$0xff]
    %v881 = vld [vmem:[#allocation2 + $0xb0] sm:$0xff]
    %v882 = vld [vmem:[#allocation2 + $0xb8] sm:$0xff]
    %v883 = vld [vmem:[#allocation2 + $0xc0] sm:$0xff]
    %v884 = vld [vmem:[#allocation2 + $0xc8] sm:$0xff]
    %v885 = vld [vmem:[#allocation2 + $0xd0] sm:$0xff]
    %v886 = vld [vmem:[#allocation2 + $0xd8] sm:$0xff]
    %v887 = vld [vmem:[#allocation2 + $0xe0] sm:$0xff]
    %v888 = vld [vmem:[#allocation2 + $0xe8] sm:$0xff]
    %v889 = vld [vmem:[#allocation2 + $0xf0] sm:$0xff]
    %v890 = vld [vmem:[#allocation2 + $0xf8] sm:$0xff]
    %v891 = vld [vmem:[#allocation2 + $0x100] sm:$0xff]
    %v892 = vld [vmem:[#allocation2 + $0x108] sm:$0xff]
    %v893 = vld [vmem:[#allocation2 + $0x110] sm:$0xff]
    %v894 = vld [vmem:[#allocation2 + $0x118] sm:$0xff]
    %v895 = vld [vmem:[#allocation2 + $0x120] sm:$0xff]
    %v896 = vld [vmem:[#allocation2 + $0x128] sm:$0xff]
    %v897 = vld [vmem:[#allocation2 + $0x130] sm:$0xff]
    %v898 = vld [vmem:[#allocation2 + $0x138] sm:$0xff]
    %v899 = vld [vmem:[#allocation2 + $0x140] sm:$0xff]
    %v900 = vld [vmem:[#allocation2 + $0x148] sm:$0xff]
    %v901 = vld [vmem:[#allocation2 + $0x150] sm:$0xff]
    %v902 = vld [vmem:[#allocation2 + $0x158] sm:$0xff]
    %v903 = vld [vmem:[#allocation2 + $0x160] sm:$0xff]
    %v904 = vld [vmem:[#allocation2 + $0x168] sm:$0xff]
    %v905 = vld [vmem:[#allocation2 + $0x170] sm:$0xff]
    %v906 = vld [vmem:[#allocation2 + $0x178] sm:$0xff]
    %v907 = vld [vmem:[#allocation2 + $0x180] sm:$0xff]
    %v908 = vld [vmem:[#allocation2 + $0x188] sm:$0xff]
    %v909 = vld [vmem:[#allocation2 + $0x190] sm:$0xff]
    %v910 = vld [vmem:[#allocation2 + $0x198] sm:$0xff]
    %v911 = vld [vmem:[#allocation2 + $0x1a0] sm:$0xff]
    %v912 = vld [vmem:[#allocation2 + $0x1a8] sm:$0xff]
    %v913 = vld [vmem:[#allocation2 + $0x1b0] sm:$0xff]
    %v914 = vld [vmem:[#allocation2 + $0x1b8] sm:$0xff]
    %v915 = vld [vmem:[#allocation2 + $0x1c0] sm:$0xff]
    %v916 = vld [vmem:[#allocation2 + $0x1c8] sm:$0xff]
    %v917 = vld [vmem:[#allocation2 + $0x1d0] sm:$0xff]
    %v918 = vld [vmem:[#allocation2 + $0x1d8] sm:$0xff]
    %v919 = vld [vmem:[#allocation2 + $0x1e0] sm:$0xff]
    %v920 = vld [vmem:[#allocation2 + $0x1e8] sm:$0xff]
    %v921 = vld [vmem:[#allocation2 + $0x1f0] sm:$0xff]
    %v922 = vld [vmem:[#allocation2 + $0x1f8] sm:$0xff]
    %v923 = vpack.c.bf16 %v861, %v859
    %v924 = vpack.c.bf16 %v862, %v860
    %v925 = vpack.c.bf16 %v865, %v863
    %v926 = vpack.c.bf16 %v866, %v864
    %v927 = vpack.c.bf16 %v869, %v867
    %v928 = vpack.c.bf16 %v870, %v868
    %v929 = vpack.c.bf16 %v873, %v871
    %v930 = vpack.c.bf16 %v874, %v872
    %v931 = vpack.c.bf16 %v877, %v875
    %v932 = vpack.c.bf16 %v878, %v876
    %v933 = vpack.c.bf16 %v881, %v879
    %v934 = vpack.c.bf16 %v882, %v880
    %v935 = vpack.c.bf16 %v885, %v883
    %v936 = vpack.c.bf16 %v886, %v884
    %v937 = vpack.c.bf16 %v889, %v887
    %v938 = vpack.c.bf16 %v890, %v888
    %v939 = vpack.c.bf16 %v893, %v891
    %v940 = vpack.c.bf16 %v894, %v892
    %v941 = vpack.c.bf16 %v897, %v895
    %v942 = vpack.c.bf16 %v898, %v896
    %v943 = vpack.c.bf16 %v901, %v899
    %v944 = vpack.c.bf16 %v902, %v900
    %v945 = vpack.c.bf16 %v905, %v903
    %v946 = vpack.c.bf16 %v906, %v904
    %v947 = vpack.c.bf16 %v909, %v907
    %v948 = vpack.c.bf16 %v910, %v908
    %v949 = vpack.c.bf16 %v913, %v911
    %v950 = vpack.c.bf16 %v914, %v912
    %v951 = vpack.c.bf16 %v917, %v915
    %v952 = vpack.c.bf16 %v918, %v916
    %v953 = vpack.c.bf16 %v921, %v919
    %v954 = vpack.c.bf16 %v922, %v920
    %v987 = vunpack.c.l.b16 %v923
    %v988 = vunpack.c.l.b16 %v924
    %v989 = vunpack.c.h.b16 %v923
    %v990 = vunpack.c.h.b16 %v924
    %v991 = vunpack.c.l.b16 %v925
    %v992 = vunpack.c.l.b16 %v926
    %v993 = vunpack.c.h.b16 %v925
    %v994 = vunpack.c.h.b16 %v926
    %v995 = vunpack.c.l.b16 %v927
    %v996 = vunpack.c.l.b16 %v928
    %v997 = vunpack.c.h.b16 %v927
    %v998 = vunpack.c.h.b16 %v928
    %v999 = vunpack.c.l.b16 %v929
    %v1000 = vunpack.c.l.b16 %v930
    %v1001 = vunpack.c.h.b16 %v929
    %v1002 = vunpack.c.h.b16 %v930
    %v1003 = vunpack.c.l.b16 %v931
    %v1004 = vunpack.c.l.b16 %v932
    %v1005 = vunpack.c.h.b16 %v931
    %v1006 = vunpack.c.h.b16 %v932
    %v1007 = vunpack.c.l.b16 %v933
    %v1008 = vunpack.c.l.b16 %v934
    %v1009 = vunpack.c.h.b16 %v933
    %v1010 = vunpack.c.h.b16 %v934
    %v1011 = vunpack.c.l.b16 %v935
    %v1012 = vunpack.c.l.b16 %v936
    %v1013 = vunpack.c.h.b16 %v935
    %v1014 = vunpack.c.h.b16 %v936
    %v1015 = vunpack.c.l.b16 %v937
    %v1016 = vunpack.c.l.b16 %v938
    %v1017 = vunpack.c.h.b16 %v937
    %v1018 = vunpack.c.h.b16 %v938
    %v1019 = vunpack.c.l.b16 %v939
    %v1020 = vunpack.c.l.b16 %v940
    %v1021 = vunpack.c.h.b16 %v939
    %v1022 = vunpack.c.h.b16 %v940
    %v1023 = vunpack.c.l.b16 %v941
    %v1024 = vunpack.c.l.b16 %v942
    %v1025 = vunpack.c.h.b16 %v941
    %v1026 = vunpack.c.h.b16 %v942
    %v1027 = vunpack.c.l.b16 %v943
    %v1028 = vunpack.c.l.b16 %v944
    %v1029 = vunpack.c.h.b16 %v943
    %v1030 = vunpack.c.h.b16 %v944
    %v1031 = vunpack.c.l.b16 %v945
    %v1032 = vunpack.c.l.b16 %v946
    %v1033 = vunpack.c.h.b16 %v945
    %v1034 = vunpack.c.h.b16 %v946
    %v1035 = vunpack.c.l.b16 %v947
    %v1036 = vunpack.c.l.b16 %v948
    %v1037 = vunpack.c.h.b16 %v947
    %v1038 = vunpack.c.h.b16 %v948
    %v1039 = vunpack.c.l.b16 %v949
    %v1040 = vunpack.c.l.b16 %v950
    %v1041 = vunpack.c.h.b16 %v949
    %v1042 = vunpack.c.h.b16 %v950
    %v1043 = vunpack.c.l.b16 %v951
    %v1044 = vunpack.c.l.b16 %v952
    %v1045 = vunpack.c.h.b16 %v951
    %v1046 = vunpack.c.h.b16 %v952
    %v1047 = vunpack.c.l.b16 %v953
    %v1048 = vunpack.c.l.b16 %v954
    %v1049 = vunpack.c.h.b16 %v953
    %v1050 = vunpack.c.h.b16 %v954
    %v1051 = vpack.c.b16 %v988, %v987
    %v1052 = vpack.c.b16 %v990, %v989
    %v1053 = vpack.c.b16 %v992, %v991
    %v1054 = vpack.c.b16 %v994, %v993
    %v1055 = vpack.c.b16 %v996, %v995
    %v1056 = vpack.c.b16 %v998, %v997
    %v1057 = vpack.c.b16 %v1000, %v999
    %v1058 = vpack.c.b16 %v1002, %v1001
    %v1059 = vpack.c.b16 %v1004, %v1003
    %v1060 = vpack.c.b16 %v1006, %v1005
    %v1061 = vpack.c.b16 %v1008, %v1007
    %v1062 = vpack.c.b16 %v1010, %v1009
    %v1063 = vpack.c.b16 %v1012, %v1011
    %v1064 = vpack.c.b16 %v1014, %v1013
    %v1065 = vpack.c.b16 %v1016, %v1015
    %v1066 = vpack.c.b16 %v1018, %v1017
    %v1067 = vpack.c.b16 %v1020, %v1019
    %v1068 = vpack.c.b16 %v1022, %v1021
    %v1069 = vpack.c.b16 %v1024, %v1023
    %v1070 = vpack.c.b16 %v1026, %v1025
    %v1071 = vpack.c.b16 %v1028, %v1027
    %v1072 = vpack.c.b16 %v1030, %v1029
    %v1073 = vpack.c.b16 %v1032, %v1031
    %v1074 = vpack.c.b16 %v1034, %v1033
    %v1075 = vpack.c.b16 %v1036, %v1035
    %v1076 = vpack.c.b16 %v1038, %v1037
    %v1077 = vpack.c.b16 %v1040, %v1039
    %v1078 = vpack.c.b16 %v1042, %v1041
    %v1079 = vpack.c.b16 %v1044, %v1043
    %v1080 = vpack.c.b16 %v1046, %v1045
    %v1081 = vpack.c.b16 %v1048, %v1047
    %v1082 = vpack.c.b16 %v1050, %v1049
    %1115 = vst [vmem:[%s2] sm:$0xff] %v1051
    %1116 = vst [vmem:[%s2 + $0x8] sm:$0xff] %v1052
    %1117 = vst [vmem:[%s2 + $0x10] sm:$0xff] %v1053
    %1118 = vst [vmem:[%s2 + $0x18] sm:$0xff] %v1054
    %1119 = vst [vmem:[%s2 + $0x20] sm:$0xff] %v1055
    %1120 = vst [vmem:[%s2 + $0x28] sm:$0xff] %v1056
    %1121 = vst [vmem:[%s2 + $0x30] sm:$0xff] %v1057
    %1122 = vst [vmem:[%s2 + $0x38] sm:$0xff] %v1058
    %1123 = vst [vmem:[%s2 + $0x40] sm:$0xff] %v1059
    %1124 = vst [vmem:[%s2 + $0x48] sm:$0xff] %v1060
    %1125 = vst [vmem:[%s2 + $0x50] sm:$0xff] %v1061
    %1126 = vst [vmem:[%s2 + $0x58] sm:$0xff] %v1062
    %1127 = vst [vmem:[%s2 + $0x60] sm:$0xff] %v1063
    %1128 = vst [vmem:[%s2 + $0x68] sm:$0xff] %v1064
    %1129 = vst [vmem:[%s2 + $0x70] sm:$0xff] %v1065
    %1130 = vst [vmem:[%s2 + $0x78] sm:$0xff] %v1066
    %1131 = vst [vmem:[%s2 + $0x80] sm:$0xff] %v1067
    %1132 = vst [vmem:[%s2 + $0x88] sm:$0xff] %v1068
    %1133 = vst [vmem:[%s2 + $0x90] sm:$0xff] %v1069
    %1134 = vst [vmem:[%s2 + $0x98] sm:$0xff] %v1070
    %1135 = vst [vmem:[%s2 + $0xa0] sm:$0xff] %v1071
    %1136 = vst [vmem:[%s2 + $0xa8] sm:$0xff] %v1072
    %1137 = vst [vmem:[%s2 + $0xb0] sm:$0xff] %v1073
    %1138 = vst [vmem:[%s2 + $0xb8] sm:$0xff] %v1074
    %1139 = vst [vmem:[%s2 + $0xc0] sm:$0xff] %v1075
    %1140 = vst [vmem:[%s2 + $0xc8] sm:$0xff] %v1076
    %1141 = vst [vmem:[%s2 + $0xd0] sm:$0xff] %v1077
    %1142 = vst [vmem:[%s2 + $0xd8] sm:$0xff] %v1078
    %1143 = vst [vmem:[%s2 + $0xe0] sm:$0xff] %v1079
    %1144 = vst [vmem:[%s2 + $0xe8] sm:$0xff] %v1080
    %1145 = vst [vmem:[%s2 + $0xf0] sm:$0xff] %v1081
    %1146 = vst [vmem:[%s2 + $0xf8] sm:$0xff] %v1082
    %v1147 = vld [vmem:[#allocation2] sm:$0xff]
    %v1148 = vld [vmem:[#allocation2 + $0x10] sm:$0xff]
    %v1149 = vld [vmem:[#allocation2 + $0x20] sm:$0xff]
    %v1150 = vld [vmem:[#allocation2 + $0x30] sm:$0xff]
    %v1151 = vld [vmem:[#allocation2 + $0x40] sm:$0xff]
    %v1152 = vld [vmem:[#allocation2 + $0x50] sm:$0xff]
    %v1153 = vld [vmem:[#allocation2 + $0x60] sm:$0xff]
    %v1154 = vld [vmem:[#allocation2 + $0x70] sm:$0xff]
    %v1155 = vld [vmem:[#allocation2 + $0x80] sm:$0xff]
    %v1156 = vld [vmem:[#allocation2 + $0x90] sm:$0xff]
    %v1157 = vld [vmem:[#allocation2 + $0xa0] sm:$0xff]
    %v1158 = vld [vmem:[#allocation2 + $0xb0] sm:$0xff]
    %v1159 = vld [vmem:[#allocation2 + $0xc0] sm:$0xff]
    %v1160 = vld [vmem:[#allocation2 + $0xd0] sm:$0xff]
    %v1161 = vld [vmem:[#allocation2 + $0xe0] sm:$0xff]
    %v1162 = vld [vmem:[#allocation2 + $0xf0] sm:$0xff]
    %v1163 = vld [vmem:[#allocation2 + $0x100] sm:$0xff]
    %v1164 = vld [vmem:[#allocation2 + $0x110] sm:$0xff]
    %v1165 = vld [vmem:[#allocation2 + $0x120] sm:$0xff]
    %v1166 = vld [vmem:[#allocation2 + $0x130] sm:$0xff]
    %v1167 = vld [vmem:[#allocation2 + $0x140] sm:$0xff]
    %v1168 = vld [vmem:[#allocation2 + $0x150] sm:$0xff]
    %v1169 = vld [vmem:[#allocation2 + $0x160] sm:$0xff]
    %v1170 = vld [vmem:[#allocation2 + $0x170] sm:$0xff]
    %v1171 = vld [vmem:[#allocation2 + $0x180] sm:$0xff]
    %v1172 = vld [vmem:[#allocation2 + $0x190] sm:$0xff]
    %v1173 = vld [vmem:[#allocation2 + $0x1a0] sm:$0xff]
    %v1174 = vld [vmem:[#allocation2 + $0x1b0] sm:$0xff]
    %v1175 = vld [vmem:[#allocation2 + $0x1c0] sm:$0xff]
    %v1176 = vld [vmem:[#allocation2 + $0x1d0] sm:$0xff]
    %v1177 = vld [vmem:[#allocation2 + $0x1e0] sm:$0xff]
    %v1178 = vld [vmem:[#allocation2 + $0x1f0] sm:$0xff]
    %v1179 = vadd.f32 %v1147, %v1148
    %v1180 = vadd.f32 %v1179, %v1149
    %v1181 = vadd.f32 %v1180, %v1150
    %v1182 = vadd.f32 %v1181, %v1151
    %v1183 = vadd.f32 %v1182, %v1152
    %v1184 = vadd.f32 %v1183, %v1153
    %v1185 = vadd.f32 %v1184, %v1154
    %v1186 = vadd.f32 %v1185, %v1155
    %v1187 = vadd.f32 %v1186, %v1156
    %v1188 = vadd.f32 %v1187, %v1157
    %v1189 = vadd.f32 %v1188, %v1158
    %v1190 = vadd.f32 %v1189, %v1159
    %v1191 = vadd.f32 %v1190, %v1160
    %v1192 = vadd.f32 %v1191, %v1161
    %v1193 = vadd.f32 %v1192, %v1162
    %v1194 = vadd.f32 %v1193, %v1163
    %v1195 = vadd.f32 %v1194, %v1164
    %v1196 = vadd.f32 %v1195, %v1165
    %v1197 = vadd.f32 %v1196, %v1166
    %v1198 = vadd.f32 %v1197, %v1167
    %v1199 = vadd.f32 %v1198, %v1168
    %v1200 = vadd.f32 %v1199, %v1169
    %v1201 = vadd.f32 %v1200, %v1170
    %v1202 = vadd.f32 %v1201, %v1171
    %v1203 = vadd.f32 %v1202, %v1172
    %v1204 = vadd.f32 %v1203, %v1173
    %v1205 = vadd.f32 %v1204, %v1174
    %v1206 = vadd.f32 %v1205, %v1175
    %v1207 = vadd.f32 %v1206, %v1176
    %v1208 = vadd.f32 %v1207, %v1177
    %v1209 = vadd.f32 %v1208, %v1178
    %v1210 = vrot.slane %v1209, 4
    %v1211 = vadd.f32 %v1209, %v1210
    %v1212 = vrot.slane %v1211, 2
    %v1213 = vadd.f32 %v1211, %v1212
    %v1214 = vrot.slane %v1213, 1
    %v1215 = vadd.f32 %v1213, %v1214
    %1216 = vst [vmem:[%s3] sm:$0x1] %v1215
  $region17: #{dgi_forward.6} parent=0 // pred_fallthru
    _
  // Predicated region
  $region18: #{dgi_forward.6} parent=0 // pred_check
    _
  $region19: #{dgi_forward.6} parent=0 // pred_check_branch
    %1218 = sbr.rel (0) target = $region21
  $region20: #{dgi_forward.6} parent=0 // pred_region
    _
  $region21: #{dgi_forward.6} parent=0 // pred_fallthru
    _
  // Predicated region
  $region22: #{dgi_forward.6} parent=0 // pred_check
    _
  $region23: #{dgi_forward.6} parent=0 // pred_check_branch
    %1220 = sbr.rel (0) target = $region25
  $region24: #{dgi_forward.6} parent=0 // pred_region
    _
  $region25: #{dgi_forward.6} parent=0 // pred_fallthru
    _
  // Predicated region
  $region26: #{dgi_forward.6} parent=0 // pred_check
    _
  $region27: #{dgi_forward.6} parent=0 // pred_check_branch
    %1222 = sbr.rel (0) target = $region29
  $region28: #{dgi_forward.6} parent=0 // pred_region
    _
  $region29: #{dgi_forward.6} parent=0 // pred_fallthru
    _
  // Predicated region
  $region30: #{dgi_forward.6} parent=0 // pred_check
    _
  $region31: #{dgi_forward.6} parent=0 // pred_check_branch
    %1224 = sbr.rel (0) target = $region33
  $region32: #{dgi_forward.6} parent=0 // pred_region
    _
  $region33: #{dgi_forward.6} parent=0 // pred_fallthru
    _

// kernel: dgi_forward.5
$region0: #{dgi_forward.5}
  #allocation0 [shape = 'u32[]', space=smem, size = 0x4, offset = 0x4, fixed_abs, tag = 'smem constant byte address 0x4 - core index']
  #allocation1 [shape = 'u32[144,128]{1,0:T(1,128)}', space=vmem, size = 0x12000, scoped, tag = 'internal scratch']
  #allocation2 [shape = 'f32[256,256]{1,0:T(8,128)}', space=vmem, size = 0x40000, scoped, tag = 'scratch operand']
  %s0 = inlined_call_operand.vmem [shape: bf16[256,256], index: 0, kind: input, shape index: {}]
  %s1 = inlined_call_operand.vmem [shape: bf16[256,256], index: 1, kind: input, shape index: {}]
  %s2 = inlined_call_operand.vmem [shape: bf16[256,256], index: 2, kind: input, shape index: {}]
  %s3 = inlined_call_operand.vmem [shape: bf16[256,256], index: 3, kind: output, shape index: {}]
  %s4 = sld [smem:[#allocation0]]
  $region30: #{dgi_forward.5} parent=0
    _
  %s6 = ssub.s32 1, %s4
  %s7 = scalar_select 0, %s6, %s4
  // Predicated region
  $region2: #{dgi_forward.5} parent=0 // pred_check
    _
  $region3: #{dgi_forward.5} parent=0 // pred_check_branch
    %9 = sbr.rel (0) target = $region5
  $region4: #{dgi_forward.5} parent=0 // pred_region
    _
  $region5: #{dgi_forward.5} parent=0 // pred_fallthru
    _
  // Predicated region
  $region6: #{dgi_forward.5} parent=0 // pred_check
    _
  $region7: #{dgi_forward.5} parent=0 // pred_check_branch
    %11 = sbr.rel (0) target = $region9
  $region8: #{dgi_forward.5} parent=0 // pred_region
    _
  $region9: #{dgi_forward.5} parent=0 // pred_fallthru
    _
  // Predicated region
  $region10: #{dgi_forward.5} parent=0 // pred_check
    _
  $region11: #{dgi_forward.5} parent=0 // pred_check_branch
    %13 = sbr.rel (0) target = $region13
  $region12: #{dgi_forward.5} parent=0 // pred_region
    _
  $region13: #{dgi_forward.5} parent=0 // pred_fallthru
    _
  %s14 = smul.u32 0, 256
  %s15 = sshra.s32 %s14, 3
  %s16 = sand.u32 %s14, 7
  %s17 = smul.u32 %s15, 2
  %s18 = smul.addr %s17, 4
  %s19 = scalar_lea.vmem %s1, %s18
  %v20 = vld [vmem:[%s19] sm:$0xff]
  %v21 = vld [vmem:[%s19 + $0x8] sm:$0xff]
  %v22 = vld [vmem:[%s19 + $0x10] sm:$0xff]
  %v23 = vld [vmem:[%s19 + $0x18] sm:$0xff]
  %v24 = vld [vmem:[%s19 + $0x20] sm:$0xff]
  %v25 = vld [vmem:[%s19 + $0x28] sm:$0xff]
  %v26 = vld [vmem:[%s19 + $0x30] sm:$0xff]
  %v27 = vld [vmem:[%s19 + $0x38] sm:$0xff]
  %v28 = vld [vmem:[%s19 + $0x40] sm:$0xff]
  %v29 = vld [vmem:[%s19 + $0x48] sm:$0xff]
  %v30 = vld [vmem:[%s19 + $0x50] sm:$0xff]
  %v31 = vld [vmem:[%s19 + $0x58] sm:$0xff]
  %v32 = vld [vmem:[%s19 + $0x60] sm:$0xff]
  %v33 = vld [vmem:[%s19 + $0x68] sm:$0xff]
  %v34 = vld [vmem:[%s19 + $0x70] sm:$0xff]
  %v35 = vld [vmem:[%s19 + $0x78] sm:$0xff]
  %v36 = vld [vmem:[%s19 + $0x80] sm:$0xff]
  %v37 = vld [vmem:[%s19 + $0x88] sm:$0xff]
  %v38 = vld [vmem:[%s19 + $0x90] sm:$0xff]
  %v39 = vld [vmem:[%s19 + $0x98] sm:$0xff]
  %v40 = vld [vmem:[%s19 + $0xa0] sm:$0xff]
  %v41 = vld [vmem:[%s19 + $0xa8] sm:$0xff]
  %v42 = vld [vmem:[%s19 + $0xb0] sm:$0xff]
  %v43 = vld [vmem:[%s19 + $0xb8] sm:$0xff]
  %v44 = vld [vmem:[%s19 + $0xc0] sm:$0xff]
  %v45 = vld [vmem:[%s19 + $0xc8] sm:$0xff]
  %v46 = vld [vmem:[%s19 + $0xd0] sm:$0xff]
  %v47 = vld [vmem:[%s19 + $0xd8] sm:$0xff]
  %v48 = vld [vmem:[%s19 + $0xe0] sm:$0xff]
  %v49 = vld [vmem:[%s19 + $0xe8] sm:$0xff]
  %v50 = vld [vmem:[%s19 + $0xf0] sm:$0xff]
  %v51 = vld [vmem:[%s19 + $0xf8] sm:$0xff]
  %p52 = scmp.eq.s32.totalorder 0, 0
  // Predicated region
  $region14: #{dgi_forward.5} parent=0 // pred_check
    %p53 = pneg %p52
  $region15: #{dgi_forward.5} parent=0 // pred_check_branch
    %55 = sbr.rel (%p53) target = $region17
  $region16: #{dgi_forward.5} parent=0 // pred_region
    %56 = vst [vmem:[#allocation2] sm:$0xff] 0.0
    %57 = vst [vmem:[#allocation2 + $0x8] sm:$0xff] 0.0
    %58 = vst [vmem:[#allocation2 + $0x10] sm:$0xff] 0.0
    %59 = vst [vmem:[#allocation2 + $0x18] sm:$0xff] 0.0
    %60 = vst [vmem:[#allocation2 + $0x20] sm:$0xff] 0.0
    %61 = vst [vmem:[#allocation2 + $0x28] sm:$0xff] 0.0
    %62 = vst [vmem:[#allocation2 + $0x30] sm:$0xff] 0.0
    %63 = vst [vmem:[#allocation2 + $0x38] sm:$0xff] 0.0
    %64 = vst [vmem:[#allocation2 + $0x40] sm:$0xff] 0.0
    %65 = vst [vmem:[#allocation2 + $0x48] sm:$0xff] 0.0
    %66 = vst [vmem:[#allocation2 + $0x50] sm:$0xff] 0.0
    %67 = vst [vmem:[#allocation2 + $0x58] sm:$0xff] 0.0
    %68 = vst [vmem:[#allocation2 + $0x60] sm:$0xff] 0.0
    %69 = vst [vmem:[#allocation2 + $0x68] sm:$0xff] 0.0
    %70 = vst [vmem:[#allocation2 + $0x70] sm:$0xff] 0.0
    %71 = vst [vmem:[#allocation2 + $0x78] sm:$0xff] 0.0
    %72 = vst [vmem:[#allocation2 + $0x80] sm:$0xff] 0.0
    %73 = vst [vmem:[#allocation2 + $0x88] sm:$0xff] 0.0
    %74 = vst [vmem:[#allocation2 + $0x90] sm:$0xff] 0.0
    %75 = vst [vmem:[#allocation2 + $0x98] sm:$0xff] 0.0
    %76 = vst [vmem:[#allocation2 + $0xa0] sm:$0xff] 0.0
    %77 = vst [vmem:[#allocation2 + $0xa8] sm:$0xff] 0.0
    %78 = vst [vmem:[#allocation2 + $0xb0] sm:$0xff] 0.0
    %79 = vst [vmem:[#allocation2 + $0xb8] sm:$0xff] 0.0
    %80 = vst [vmem:[#allocation2 + $0xc0] sm:$0xff] 0.0
    %81 = vst [vmem:[#allocation2 + $0xc8] sm:$0xff] 0.0
    %82 = vst [vmem:[#allocation2 + $0xd0] sm:$0xff] 0.0
    %83 = vst [vmem:[#allocation2 + $0xd8] sm:$0xff] 0.0
    %84 = vst [vmem:[#allocation2 + $0xe0] sm:$0xff] 0.0
    %85 = vst [vmem:[#allocation2 + $0xe8] sm:$0xff] 0.0
    %86 = vst [vmem:[#allocation2 + $0xf0] sm:$0xff] 0.0
    %87 = vst [vmem:[#allocation2 + $0xf8] sm:$0xff] 0.0
    %88 = vst [vmem:[#allocation2 + $0x100] sm:$0xff] 0.0
    %89 = vst [vmem:[#allocation2 + $0x108] sm:$0xff] 0.0
    %90 = vst [vmem:[#allocation2 + $0x110] sm:$0xff] 0.0
    %91 = vst [vmem:[#allocation2 + $0x118] sm:$0xff] 0.0
    %92 = vst [vmem:[#allocation2 + $0x120] sm:$0xff] 0.0
    %93 = vst [vmem:[#allocation2 + $0x128] sm:$0xff] 0.0
    %94 = vst [vmem:[#allocation2 + $0x130] sm:$0xff] 0.0
    %95 = vst [vmem:[#allocation2 + $0x138] sm:$0xff] 0.0
    %96 = vst [vmem:[#allocation2 + $0x140] sm:$0xff] 0.0
    %97 = vst [vmem:[#allocation2 + $0x148] sm:$0xff] 0.0
    %98 = vst [vmem:[#allocation2 + $0x150] sm:$0xff] 0.0
    %99 = vst [vmem:[#allocation2 + $0x158] sm:$0xff] 0.0
    %100 = vst [vmem:[#allocation2 + $0x160] sm:$0xff] 0.0
    %101 = vst [vmem:[#allocation2 + $0x168] sm:$0xff] 0.0
    %102 = vst [vmem:[#allocation2 + $0x170] sm:$0xff] 0.0
    %103 = vst [vmem:[#allocation2 + $0x178] sm:$0xff] 0.0
    %104 = vst [vmem:[#allocation2 + $0x180] sm:$0xff] 0.0
    %105 = vst [vmem:[#allocation2 + $0x188] sm:$0xff] 0.0
    %106 = vst [vmem:[#allocation2 + $0x190] sm:$0xff] 0.0
    %107 = vst [vmem:[#allocation2 + $0x198] sm:$0xff] 0.0
    %108 = vst [vmem:[#allocation2 + $0x1a0] sm:$0xff] 0.0
    %109 = vst [vmem:[#allocation2 + $0x1a8] sm:$0xff] 0.0
    %110 = vst [vmem:[#allocation2 + $0x1b0] sm:$0xff] 0.0
    %111 = vst [vmem:[#allocation2 + $0x1b8] sm:$0xff] 0.0
    %112 = vst [vmem:[#allocation2 + $0x1c0] sm:$0xff] 0.0
    %113 = vst [vmem:[#allocation2 + $0x1c8] sm:$0xff] 0.0
    %114 = vst [vmem:[#allocation2 + $0x1d0] sm:$0xff] 0.0
    %115 = vst [vmem:[#allocation2 + $0x1d8] sm:$0xff] 0.0
    %116 = vst [vmem:[#allocation2 + $0x1e0] sm:$0xff] 0.0
    %117 = vst [vmem:[#allocation2 + $0x1e8] sm:$0xff] 0.0
    %118 = vst [vmem:[#allocation2 + $0x1f0] sm:$0xff] 0.0
    %119 = vst [vmem:[#allocation2 + $0x1f8] sm:$0xff] 0.0
  $region17: #{dgi_forward.5} parent=0 // pred_fallthru
    _
  %v120 = vld [vmem:[#allocation2] sm:$0xff]
  %v121 = vld [vmem:[#allocation2 + $0x8] sm:$0xff]
  %v122 = vld [vmem:[#allocation2 + $0x10] sm:$0xff]
  %v123 = vld [vmem:[#allocation2 + $0x18] sm:$0xff]
  %v124 = vld [vmem:[#allocation2 + $0x20] sm:$0xff]
  %v125 = vld [vmem:[#allocation2 + $0x28] sm:$0xff]
  %v126 = vld [vmem:[#allocation2 + $0x30] sm:$0xff]
  %v127 = vld [vmem:[#allocation2 + $0x38] sm:$0xff]
  %v128 = vld [vmem:[#allocation2 + $0x40] sm:$0xff]
  %v129 = vld [vmem:[#allocation2 + $0x48] sm:$0xff]
  %v130 = vld [vmem:[#allocation2 + $0x50] sm:$0xff]
  %v131 = vld [vmem:[#allocation2 + $0x58] sm:$0xff]
  %v132 = vld [vmem:[#allocation2 + $0x60] sm:$0xff]
  %v133 = vld [vmem:[#allocation2 + $0x68] sm:$0xff]
  %v134 = vld [vmem:[#allocation2 + $0x70] sm:$0xff]
  %v135 = vld [vmem:[#allocation2 + $0x78] sm:$0xff]
  %v136 = vld [vmem:[#allocation2 + $0x80] sm:$0xff]
  %v137 = vld [vmem:[#allocation2 + $0x88] sm:$0xff]
  %v138 = vld [vmem:[#allocation2 + $0x90] sm:$0xff]
  %v139 = vld [vmem:[#allocation2 + $0x98] sm:$0xff]
  %v140 = vld [vmem:[#allocation2 + $0xa0] sm:$0xff]
  %v141 = vld [vmem:[#allocation2 + $0xa8] sm:$0xff]
  %v142 = vld [vmem:[#allocation2 + $0xb0] sm:$0xff]
  %v143 = vld [vmem:[#allocation2 + $0xb8] sm:$0xff]
  %v144 = vld [vmem:[#allocation2 + $0xc0] sm:$0xff]
  %v145 = vld [vmem:[#allocation2 + $0xc8] sm:$0xff]
  %v146 = vld [vmem:[#allocation2 + $0xd0] sm:$0xff]
  %v147 = vld [vmem:[#allocation2 + $0xd8] sm:$0xff]
  %v148 = vld [vmem:[#allocation2 + $0xe0] sm:$0xff]
  %v149 = vld [vmem:[#allocation2 + $0xe8] sm:$0xff]
  %v150 = vld [vmem:[#allocation2 + $0xf0] sm:$0xff]
  %v151 = vld [vmem:[#allocation2 + $0xf8] sm:$0xff]
  %v152 = vld [vmem:[#allocation2 + $0x100] sm:$0xff]
  %v153 = vld [vmem:[#allocation2 + $0x108] sm:$0xff]
  %v154 = vld [vmem:[#allocation2 + $0x110] sm:$0xff]
  %v155 = vld [vmem:[#allocation2 + $0x118] sm:$0xff]
  %v156 = vld [vmem:[#allocation2 + $0x120] sm:$0xff]
  %v157 = vld [vmem:[#allocation2 + $0x128] sm:$0xff]
  %v158 = vld [vmem:[#allocation2 + $0x130] sm:$0xff]
  %v159 = vld [vmem:[#allocation2 + $0x138] sm:$0xff]
  %v160 = vld [vmem:[#allocation2 + $0x140] sm:$0xff]
  %v161 = vld [vmem:[#allocation2 + $0x148] sm:$0xff]
  %v162 = vld [vmem:[#allocation2 + $0x150] sm:$0xff]
  %v163 = vld [vmem:[#allocation2 + $0x158] sm:$0xff]
  %v164 = vld [vmem:[#allocation2 + $0x160] sm:$0xff]
  %v165 = vld [vmem:[#allocation2 + $0x168] sm:$0xff]
  %v166 = vld [vmem:[#allocation2 + $0x170] sm:$0xff]
  %v167 = vld [vmem:[#allocation2 + $0x178] sm:$0xff]
  %v168 = vld [vmem:[#allocation2 + $0x180] sm:$0xff]
  %v169 = vld [vmem:[#allocation2 + $0x188] sm:$0xff]
  %v170 = vld [vmem:[#allocation2 + $0x190] sm:$0xff]
  %v171 = vld [vmem:[#allocation2 + $0x198] sm:$0xff]
  %v172 = vld [vmem:[#allocation2 + $0x1a0] sm:$0xff]
  %v173 = vld [vmem:[#allocation2 + $0x1a8] sm:$0xff]
  %v174 = vld [vmem:[#allocation2 + $0x1b0] sm:$0xff]
  %v175 = vld [vmem:[#allocation2 + $0x1b8] sm:$0xff]
  %v176 = vld [vmem:[#allocation2 + $0x1c0] sm:$0xff]
  %v177 = vld [vmem:[#allocation2 + $0x1c8] sm:$0xff]
  %v178 = vld [vmem:[#allocation2 + $0x1d0] sm:$0xff]
  %v179 = vld [vmem:[#allocation2 + $0x1d8] sm:$0xff]
  %v180 = vld [vmem:[#allocation2 + $0x1e0] sm:$0xff]
  %v181 = vld [vmem:[#allocation2 + $0x1e8] sm:$0xff]
  %v182 = vld [vmem:[#allocation2 + $0x1f0] sm:$0xff]
  %v183 = vld [vmem:[#allocation2 + $0x1f8] sm:$0xff]
  %v184 = vld [vmem:[%s0] sm:$0xff]
  %v185 = vld [vmem:[%s0 + $0x8] sm:$0xff]
  %v186 = vld [vmem:[%s0 + $0x10] sm:$0xff]
  %v187 = vld [vmem:[%s0 + $0x18] sm:$0xff]
  %v188 = vld [vmem:[%s0 + $0x20] sm:$0xff]
  %v189 = vld [vmem:[%s0 + $0x28] sm:$0xff]
  %v190 = vld [vmem:[%s0 + $0x30] sm:$0xff]
  %v191 = vld [vmem:[%s0 + $0x38] sm:$0xff]
  %v192 = vld [vmem:[%s0 + $0x40] sm:$0xff]
  %v193 = vld [vmem:[%s0 + $0x48] sm:$0xff]
  %v194 = vld [vmem:[%s0 + $0x50] sm:$0xff]
  %v195 = vld [vmem:[%s0 + $0x58] sm:$0xff]
  %v196 = vld [vmem:[%s0 + $0x60] sm:$0xff]
  %v197 = vld [vmem:[%s0 + $0x68] sm:$0xff]
  %v198 = vld [vmem:[%s0 + $0x70] sm:$0xff]
  %v199 = vld [vmem:[%s0 + $0x78] sm:$0xff]
  %v200 = vld [vmem:[%s0 + $0x80] sm:$0xff]
  %v201 = vld [vmem:[%s0 + $0x88] sm:$0xff]
  %v202 = vld [vmem:[%s0 + $0x90] sm:$0xff]
  %v203 = vld [vmem:[%s0 + $0x98] sm:$0xff]
  %v204 = vld [vmem:[%s0 + $0xa0] sm:$0xff]
  %v205 = vld [vmem:[%s0 + $0xa8] sm:$0xff]
  %v206 = vld [vmem:[%s0 + $0xb0] sm:$0xff]
  %v207 = vld [vmem:[%s0 + $0xb8] sm:$0xff]
  %v208 = vld [vmem:[%s0 + $0xc0] sm:$0xff]
  %v209 = vld [vmem:[%s0 + $0xc8] sm:$0xff]
  %v210 = vld [vmem:[%s0 + $0xd0] sm:$0xff]
  %v211 = vld [vmem:[%s0 + $0xd8] sm:$0xff]
  %v212 = vld [vmem:[%s0 + $0xe0] sm:$0xff]
  %v213 = vld [vmem:[%s0 + $0xe8] sm:$0xff]
  %v214 = vld [vmem:[%s0 + $0xf0] sm:$0xff]
  %v215 = vld [vmem:[%s0 + $0xf8] sm:$0xff]
  %v248 = vunpack.c.l.b16 %v184
  %v249 = vunpack.c.h.b16 %v184
  %v250 = vunpack.c.l.b16 %v185
  %v251 = vunpack.c.h.b16 %v185
  %v252 = vunpack.c.l.b16 %v186
  %v253 = vunpack.c.h.b16 %v186
  %v254 = vunpack.c.l.b16 %v187
  %v255 = vunpack.c.h.b16 %v187
  %v256 = vunpack.c.l.b16 %v188
  %v257 = vunpack.c.h.b16 %v188
  %v258 = vunpack.c.l.b16 %v189
  %v259 = vunpack.c.h.b16 %v189
  %v260 = vunpack.c.l.b16 %v190
  %v261 = vunpack.c.h.b16 %v190
  %v262 = vunpack.c.l.b16 %v191
  %v263 = vunpack.c.h.b16 %v191
  %v264 = vunpack.c.l.b16 %v192
  %v265 = vunpack.c.h.b16 %v192
  %v266 = vunpack.c.l.b16 %v193
  %v267 = vunpack.c.h.b16 %v193
  %v268 = vunpack.c.l.b16 %v194
  %v269 = vunpack.c.h.b16 %v194
  %v270 = vunpack.c.l.b16 %v195
  %v271 = vunpack.c.h.b16 %v195
  %v272 = vunpack.c.l.b16 %v196
  %v273 = vunpack.c.h.b16 %v196
  %v274 = vunpack.c.l.b16 %v197
  %v275 = vunpack.c.h.b16 %v197
  %v276 = vunpack.c.l.b16 %v198
  %v277 = vunpack.c.h.b16 %v198
  %v278 = vunpack.c.l.b16 %v199
  %v279 = vunpack.c.h.b16 %v199
  %v280 = vunpack.c.l.b16 %v200
  %v281 = vunpack.c.h.b16 %v200
  %v282 = vunpack.c.l.b16 %v201
  %v283 = vunpack.c.h.b16 %v201
  %v284 = vunpack.c.l.b16 %v202
  %v285 = vunpack.c.h.b16 %v202
  %v286 = vunpack.c.l.b16 %v203
  %v287 = vunpack.c.h.b16 %v203
  %v288 = vunpack.c.l.b16 %v204
  %v289 = vunpack.c.h.b16 %v204
  %v290 = vunpack.c.l.b16 %v205
  %v291 = vunpack.c.h.b16 %v205
  %v292 = vunpack.c.l.b16 %v206
  %v293 = vunpack.c.h.b16 %v206
  %v294 = vunpack.c.l.b16 %v207
  %v295 = vunpack.c.h.b16 %v207
  %v296 = vunpack.c.l.b16 %v208
  %v297 = vunpack.c.h.b16 %v208
  %v298 = vunpack.c.l.b16 %v209
  %v299 = vunpack.c.h.b16 %v209
  %v300 = vunpack.c.l.b16 %v210
  %v301 = vunpack.c.h.b16 %v210
  %v302 = vunpack.c.l.b16 %v211
  %v303 = vunpack.c.h.b16 %v211
  %v304 = vunpack.c.l.b16 %v212
  %v305 = vunpack.c.h.b16 %v212
  %v306 = vunpack.c.l.b16 %v213
  %v307 = vunpack.c.h.b16 %v213
  %v308 = vunpack.c.l.b16 %v214
  %v309 = vunpack.c.h.b16 %v214
  %v310 = vunpack.c.l.b16 %v215
  %v311 = vunpack.c.h.b16 %v215
  %v312 = vpack.c.b16 %v250, %v248
  %v313 = vpack.c.b16 %v251, %v249
  %v314 = vpack.c.b16 %v254, %v252
  %v315 = vpack.c.b16 %v255, %v253
  %v316 = vpack.c.b16 %v258, %v256
  %v317 = vpack.c.b16 %v259, %v257
  %v318 = vpack.c.b16 %v262, %v260
  %v319 = vpack.c.b16 %v263, %v261
  %v320 = vpack.c.b16 %v266, %v264
  %v321 = vpack.c.b16 %v267, %v265
  %v322 = vpack.c.b16 %v270, %v268
  %v323 = vpack.c.b16 %v271, %v269
  %v324 = vpack.c.b16 %v274, %v272
  %v325 = vpack.c.b16 %v275, %v273
  %v326 = vpack.c.b16 %v278, %v276
  %v327 = vpack.c.b16 %v279, %v277
  %v328 = vpack.c.b16 %v282, %v280
  %v329 = vpack.c.b16 %v283, %v281
  %v330 = vpack.c.b16 %v286, %v284
  %v331 = vpack.c.b16 %v287, %v285
  %v332 = vpack.c.b16 %v290, %v288
  %v333 = vpack.c.b16 %v291, %v289
  %v334 = vpack.c.b16 %v294, %v292
  %v335 = vpack.c.b16 %v295, %v293
  %v336 = vpack.c.b16 %v298, %v296
  %v337 = vpack.c.b16 %v299, %v297
  %v338 = vpack.c.b16 %v302, %v300
  %v339 = vpack.c.b16 %v303, %v301
  %v340 = vpack.c.b16 %v306, %v304
  %v341 = vpack.c.b16 %v307, %v305
  %v342 = vpack.c.b16 %v310, %v308
  %v343 = vpack.c.b16 %v311, %v309
  %v408 = vunpack.c.l.b16 %v20
  %v409 = vunpack.c.h.b16 %v20
  %v410 = vunpack.c.l.b16 %v21
  %v411 = vunpack.c.h.b16 %v21
  %v412 = vunpack.c.l.b16 %v22
  %v413 = vunpack.c.h.b16 %v22
  %v414 = vunpack.c.l.b16 %v23
  %v415 = vunpack.c.h.b16 %v23
  %v416 = vunpack.c.l.b16 %v24
  %v417 = vunpack.c.h.b16 %v24
  %v418 = vunpack.c.l.b16 %v25
  %v419 = vunpack.c.h.b16 %v25
  %v420 = vunpack.c.l.b16 %v26
  %v421 = vunpack.c.h.b16 %v26
  %v422 = vunpack.c.l.b16 %v27
  %v423 = vunpack.c.h.b16 %v27
  %v424 = vunpack.c.l.b16 %v28
  %v425 = vunpack.c.h.b16 %v28
  %v426 = vunpack.c.l.b16 %v29
  %v427 = vunpack.c.h.b16 %v29
  %v428 = vunpack.c.l.b16 %v30
  %v429 = vunpack.c.h.b16 %v30
  %v430 = vunpack.c.l.b16 %v31
  %v431 = vunpack.c.h.b16 %v31
  %v432 = vunpack.c.l.b16 %v32
  %v433 = vunpack.c.h.b16 %v32
  %v434 = vunpack.c.l.b16 %v33
  %v435 = vunpack.c.h.b16 %v33
  %v436 = vunpack.c.l.b16 %v34
  %v437 = vunpack.c.h.b16 %v34
  %v438 = vunpack.c.l.b16 %v35
  %v439 = vunpack.c.h.b16 %v35
  %v440 = vunpack.c.l.b16 %v36
  %v441 = vunpack.c.h.b16 %v36
  %v442 = vunpack.c.l.b16 %v37
  %v443 = vunpack.c.h.b16 %v37
  %v444 = vunpack.c.l.b16 %v38
  %v445 = vunpack.c.h.b16 %v38
  %v446 = vunpack.c.l.b16 %v39
  %v447 = vunpack.c.h.b16 %v39
  %v448 = vunpack.c.l.b16 %v40
  %v449 = vunpack.c.h.b16 %v40
  %v450 = vunpack.c.l.b16 %v41
  %v451 = vunpack.c.h.b16 %v41
  %v452 = vunpack.c.l.b16 %v42
  %v453 = vunpack.c.h.b16 %v42
  %v454 = vunpack.c.l.b16 %v43
  %v455 = vunpack.c.h.b16 %v43
  %v456 = vunpack.c.l.b16 %v44
  %v457 = vunpack.c.h.b16 %v44
  %v458 = vunpack.c.l.b16 %v45
  %v459 = vunpack.c.h.b16 %v45
  %v460 = vunpack.c.l.b16 %v46
  %v461 = vunpack.c.h.b16 %v46
  %v462 = vunpack.c.l.b16 %v47
  %v463 = vunpack.c.h.b16 %v47
  %v464 = vunpack.c.l.b16 %v48
  %v465 = vunpack.c.h.b16 %v48
  %v466 = vunpack.c.l.b16 %v49
  %v467 = vunpack.c.h.b16 %v49
  %v468 = vunpack.c.l.b16 %v50
  %v469 = vunpack.c.h.b16 %v50
  %v470 = vunpack.c.l.b16 %v51
  %v471 = vunpack.c.h.b16 %v51
  %v472 = vpack.c.b16 %v410, %v408
  %v473 = vpack.c.b16 %v411, %v409
  %v474 = vpack.c.b16 %v414, %v412
  %v475 = vpack.c.b16 %v415, %v413
  %v476 = vpack.c.b16 %v418, %v416
  %v477 = vpack.c.b16 %v419, %v417
  %v478 = vpack.c.b16 %v422, %v420
  %v479 = vpack.c.b16 %v423, %v421
  %v480 = vpack.c.b16 %v426, %v424
  %v481 = vpack.c.b16 %v427, %v425
  %v482 = vpack.c.b16 %v430, %v428
  %v483 = vpack.c.b16 %v431, %v429
  %v484 = vpack.c.b16 %v434, %v432
  %v485 = vpack.c.b16 %v435, %v433
  %v486 = vpack.c.b16 %v438, %v436
  %v487 = vpack.c.b16 %v439, %v437
  %v488 = vpack.c.b16 %v442, %v440
  %v489 = vpack.c.b16 %v443, %v441
  %v490 = vpack.c.b16 %v446, %v444
  %v491 = vpack.c.b16 %v447, %v445
  %v492 = vpack.c.b16 %v450, %v448
  %v493 = vpack.c.b16 %v451, %v449
  %v494 = vpack.c.b16 %v454, %v452
  %v495 = vpack.c.b16 %v455, %v453
  %v496 = vpack.c.b16 %v458, %v456
  %v497 = vpack.c.b16 %v459, %v457
  %v498 = vpack.c.b16 %v462, %v460
  %v499 = vpack.c.b16 %v463, %v461
  %v500 = vpack.c.b16 %v466, %v464
  %v501 = vpack.c.b16 %v467, %v465
  %v502 = vpack.c.b16 %v470, %v468
  %v503 = vpack.c.b16 %v471, %v469
  %536 = vmatprep.subr.bf16.mxu0 %v487
  %537 = vmatpush1.bf16.msra.mxu0 %v486
  %538 = vmatprep.subr.bf16.mxu0 %v485
  %539 = vmatpush1.bf16.msra.mxu0 %v484
  %540 = vmatprep.subr.bf16.mxu0 %v483
  %541 = vmatpush1.bf16.msra.mxu0 %v482
  %542 = vmatprep.subr.bf16.mxu0 %v481
  %543 = vmatpush1.bf16.msra.mxu0 %v480
  %544 = vmatprep.subr.bf16.mxu0 %v479
  %545 = vmatpush1.bf16.msra.mxu0 %v478
  %546 = vmatprep.subr.bf16.mxu0 %v477
  %547 = vmatpush1.bf16.msra.mxu0 %v476
  %548 = vmatprep.subr.bf16.mxu0 %v475
  %549 = vmatpush1.bf16.msra.mxu0 %v474
  %550 = vmatprep.subr.bf16.mxu0 %v473
  %551 = vmatpush1.bf16.msra.mxu0 %v472
  %552 = vmatprep.subr.bf16.mxu0 %v503
  %553 = vmatpush2.bf16.msra.mxu0 %v502
  %554 = vmatprep.subr.bf16.mxu0 %v501
  %555 = vmatpush2.bf16.msra.mxu0 %v500
  %556 = vmatprep.subr.bf16.mxu0 %v499
  %557 = vmatpush2.bf16.msra.mxu0 %v498
  %558 = vmatprep.subr.bf16.mxu0 %v497
  %559 = vmatpush2.bf16.msra.mxu0 %v496
  %560 = vmatprep.subr.bf16.mxu0 %v495
  %561 = vmatpush2.bf16.msra.mxu0 %v494
  %562 = vmatprep.subr.bf16.mxu0 %v493
  %563 = vmatpush2.bf16.msra.mxu0 %v492
  %564 = vmatprep.subr.bf16.mxu0 %v491
  %565 = vmatpush2.bf16.msra.mxu0 %v490
  %566 = vmatprep.subr.bf16.mxu0 %v489
  %567 = vmatpush2.bf16.msra.mxu0 %v488
  %568 = vmatprep.mubr.bf16.mxu0 %v313
  %569 = vmatmul.mubr.bf16.gmra.mxu0 %v312
  %v570 = vpop.f32.mrf.mxu0
  %v571 = vadd.f32 0.0, %v570
  %v572 = vpop.f32.mrf.mxu0
  %v573 = vadd.f32 0.0, %v572
  %v574 = vpop.f32.mrf.mxu0
  %v575 = vadd.f32 0.0, %v574
  %v576 = vpop.f32.mrf.mxu0
  %v577 = vadd.f32 0.0, %v576
  %578 = vmatprep.mubr.bf16.mxu0 %v315
  %579 = vmatmul.mubr.bf16.gmra.mxu0 %v314
  %v580 = vpop.f32.mrf.mxu0
  %v581 = vadd.f32 0.0, %v580
  %v582 = vpop.f32.mrf.mxu0
  %v583 = vadd.f32 0.0, %v582
  %v584 = vpop.f32.mrf.mxu0
  %v585 = vadd.f32 0.0, %v584
  %v586 = vpop.f32.mrf.mxu0
  %v587 = vadd.f32 0.0, %v586
  %588 = vmatprep.mubr.bf16.mxu0 %v317
  %589 = vmatmul.mubr.bf16.gmra.mxu0 %v316
  %v590 = vpop.f32.mrf.mxu0
  %v591 = vadd.f32 0.0, %v590
  %v592 = vpop.f32.mrf.mxu0
  %v593 = vadd.f32 0.0, %v592
  %v594 = vpop.f32.mrf.mxu0
  %v595 = vadd.f32 0.0, %v594
  %v596 = vpop.f32.mrf.mxu0
  %v597 = vadd.f32 0.0, %v596
  %598 = vmatprep.mubr.bf16.mxu0 %v319
  %599 = vmatmul.mubr.bf16.gmra.mxu0 %v318
  %v600 = vpop.f32.mrf.mxu0
  %v601 = vadd.f32 0.0, %v600
  %v602 = vpop.f32.mrf.mxu0
  %v603 = vadd.f32 0.0, %v602
  %v604 = vpop.f32.mrf.mxu0
  %v605 = vadd.f32 0.0, %v604
  %v606 = vpop.f32.mrf.mxu0
  %v607 = vadd.f32 0.0, %v606
  %608 = vmatprep.mubr.bf16.mxu0 %v321
  %609 = vmatmul.mubr.bf16.gmra.mxu0 %v320
  %v610 = vpop.f32.mrf.mxu0
  %v611 = vadd.f32 0.0, %v610
  %v612 = vpop.f32.mrf.mxu0
  %v613 = vadd.f32 0.0, %v612
  %v614 = vpop.f32.mrf.mxu0
  %v615 = vadd.f32 0.0, %v614
  %v616 = vpop.f32.mrf.mxu0
  %v617 = vadd.f32 0.0, %v616
  %618 = vmatprep.mubr.bf16.mxu0 %v323
  %619 = vmatmul.mubr.bf16.gmra.mxu0 %v322
  %v620 = vpop.f32.mrf.mxu0
  %v621 = vadd.f32 0.0, %v620
  %v622 = vpop.f32.mrf.mxu0
  %v623 = vadd.f32 0.0, %v622
  %v624 = vpop.f32.mrf.mxu0
  %v625 = vadd.f32 0.0, %v624
  %v626 = vpop.f32.mrf.mxu0
  %v627 = vadd.f32 0.0, %v626
  %628 = vmatprep.mubr.bf16.mxu0 %v325
  %629 = vmatmul.mubr.bf16.gmra.mxu0 %v324
  %v630 = vpop.f32.mrf.mxu0
  %v631 = vadd.f32 0.0, %v630
  %v632 = vpop.f32.mrf.mxu0
  %v633 = vadd.f32 0.0, %v632
  %v634 = vpop.f32.mrf.mxu0
  %v635 = vadd.f32 0.0, %v634
  %v636 = vpop.f32.mrf.mxu0
  %v637 = vadd.f32 0.0, %v636
  %638 = vmatprep.mubr.bf16.mxu0 %v327
  %639 = vmatmul.mubr.bf16.gmra.mxu0 %v326
  %v640 = vpop.f32.mrf.mxu0
  %v641 = vadd.f32 0.0, %v640
  %v642 = vpop.f32.mrf.mxu0
  %v643 = vadd.f32 0.0, %v642
  %v644 = vpop.f32.mrf.mxu0
  %v645 = vadd.f32 0.0, %v644
  %v646 = vpop.f32.mrf.mxu0
  %v647 = vadd.f32 0.0, %v646
  %648 = vmatprep.mubr.bf16.mxu0 %v329
  %649 = vmatmul.mubr.bf16.gmra.mxu0 %v328
  %v650 = vpop.f32.mrf.mxu0
  %v651 = vadd.f32 0.0, %v650
  %v652 = vpop.f32.mrf.mxu0
  %v653 = vadd.f32 0.0, %v652
  %v654 = vpop.f32.mrf.mxu0
  %v655 = vadd.f32 0.0, %v654
  %v656 = vpop.f32.mrf.mxu0
  %v657 = vadd.f32 0.0, %v656
  %658 = vmatprep.mubr.bf16.mxu0 %v331
  %659 = vmatmul.mubr.bf16.gmra.mxu0 %v330
  %v660 = vpop.f32.mrf.mxu0
  %v661 = vadd.f32 0.0, %v660
  %v662 = vpop.f32.mrf.mxu0
  %v663 = vadd.f32 0.0, %v662
  %v664 = vpop.f32.mrf.mxu0
  %v665 = vadd.f32 0.0, %v664
  %v666 = vpop.f32.mrf.mxu0
  %v667 = vadd.f32 0.0, %v666
  %668 = vmatprep.mubr.bf16.mxu0 %v333
  %669 = vmatmul.mubr.bf16.gmra.mxu0 %v332
  %v670 = vpop.f32.mrf.mxu0
  %v671 = vadd.f32 0.0, %v670
  %v672 = vpop.f32.mrf.mxu0
  %v673 = vadd.f32 0.0, %v672
  %v674 = vpop.f32.mrf.mxu0
  %v675 = vadd.f32 0.0, %v674
  %v676 = vpop.f32.mrf.mxu0
  %v677 = vadd.f32 0.0, %v676
  %678 = vmatprep.mubr.bf16.mxu0 %v335
  %679 = vmatmul.mubr.bf16.gmra.mxu0 %v334
  %v680 = vpop.f32.mrf.mxu0
  %v681 = vadd.f32 0.0, %v680
  %v682 = vpop.f32.mrf.mxu0
  %v683 = vadd.f32 0.0, %v682
  %v684 = vpop.f32.mrf.mxu0
  %v685 = vadd.f32 0.0, %v684
  %v686 = vpop.f32.mrf.mxu0
  %v687 = vadd.f32 0.0, %v686
  %688 = vmatprep.mubr.bf16.mxu0 %v337
  %689 = vmatmul.mubr.bf16.gmra.mxu0 %v336
  %v690 = vpop.f32.mrf.mxu0
  %v691 = vadd.f32 0.0, %v690
  %v692 = vpop.f32.mrf.mxu0
  %v693 = vadd.f32 0.0, %v692
  %v694 = vpop.f32.mrf.mxu0
  %v695 = vadd.f32 0.0, %v694
  %v696 = vpop.f32.mrf.mxu0
  %v697 = vadd.f32 0.0, %v696
  %698 = vmatprep.mubr.bf16.mxu0 %v339
  %699 = vmatmul.mubr.bf16.gmra.mxu0 %v338
  %v700 = vpop.f32.mrf.mxu0
  %v701 = vadd.f32 0.0, %v700
  %v702 = vpop.f32.mrf.mxu0
  %v703 = vadd.f32 0.0, %v702
  %v704 = vpop.f32.mrf.mxu0
  %v705 = vadd.f32 0.0, %v704
  %v706 = vpop.f32.mrf.mxu0
  %v707 = vadd.f32 0.0, %v706
  %708 = vmatprep.mubr.bf16.mxu0 %v341
  %709 = vmatmul.mubr.bf16.gmra.mxu0 %v340
  %v710 = vpop.f32.mrf.mxu0
  %v711 = vadd.f32 0.0, %v710
  %v712 = vpop.f32.mrf.mxu0
  %v713 = vadd.f32 0.0, %v712
  %v714 = vpop.f32.mrf.mxu0
  %v715 = vadd.f32 0.0, %v714
  %v716 = vpop.f32.mrf.mxu0
  %v717 = vadd.f32 0.0, %v716
  %718 = vmatprep.mubr.bf16.mxu0 %v343
  %719 = vmatmul.mubr.bf16.gmra.mxu0 %v342
  %v720 = vpop.f32.mrf.mxu0
  %v721 = vadd.f32 0.0, %v720
  %v722 = vpop.f32.mrf.mxu0
  %v723 = vadd.f32 0.0, %v722
  %v724 = vpop.f32.mrf.mxu0
  %v725 = vadd.f32 0.0, %v724
  %v726 = vpop.f32.mrf.mxu0
  %v727 = vadd.f32 0.0, %v726
  %728 = vdwg.mxu0
  %v729 = vadd.f32 %v120, %v571
  %v730 = vadd.f32 %v121, %v573
  %v731 = vadd.f32 %v122, %v575
  %v732 = vadd.f32 %v123, %v577
  %v733 = vadd.f32 %v124, %v581
  %v734 = vadd.f32 %v125, %v583
  %v735 = vadd.f32 %v126, %v585
  %v736 = vadd.f32 %v127, %v587
  %v737 = vadd.f32 %v128, %v591
  %v738 = vadd.f32 %v129, %v593
  %v739 = vadd.f32 %v130, %v595
  %v740 = vadd.f32 %v131, %v597
  %v741 = vadd.f32 %v132, %v601
  %v742 = vadd.f32 %v133, %v603
  %v743 = vadd.f32 %v134, %v605
  %v744 = vadd.f32 %v135, %v607
  %v745 = vadd.f32 %v136, %v611
  %v746 = vadd.f32 %v137, %v613
  %v747 = vadd.f32 %v138, %v615
  %v748 = vadd.f32 %v139, %v617
  %v749 = vadd.f32 %v140, %v621
  %v750 = vadd.f32 %v141, %v623
  %v751 = vadd.f32 %v142, %v625
  %v752 = vadd.f32 %v143, %v627
  %v753 = vadd.f32 %v144, %v631
  %v754 = vadd.f32 %v145, %v633
  %v755 = vadd.f32 %v146, %v635
  %v756 = vadd.f32 %v147, %v637
  %v757 = vadd.f32 %v148, %v641
  %v758 = vadd.f32 %v149, %v643
  %v759 = vadd.f32 %v150, %v645
  %v760 = vadd.f32 %v151, %v647
  %v761 = vadd.f32 %v152, %v651
  %v762 = vadd.f32 %v153, %v653
  %v763 = vadd.f32 %v154, %v655
  %v764 = vadd.f32 %v155, %v657
  %v765 = vadd.f32 %v156, %v661
  %v766 = vadd.f32 %v157, %v663
  %v767 = vadd.f32 %v158, %v665
  %v768 = vadd.f32 %v159, %v667
  %v769 = vadd.f32 %v160, %v671
  %v770 = vadd.f32 %v161, %v673
  %v771 = vadd.f32 %v162, %v675
  %v772 = vadd.f32 %v163, %v677
  %v773 = vadd.f32 %v164, %v681
  %v774 = vadd.f32 %v165, %v683
  %v775 = vadd.f32 %v166, %v685
  %v776 = vadd.f32 %v167, %v687
  %v777 = vadd.f32 %v168, %v691
  %v778 = vadd.f32 %v169, %v693
  %v779 = vadd.f32 %v170, %v695
  %v780 = vadd.f32 %v171, %v697
  %v781 = vadd.f32 %v172, %v701
  %v782 = vadd.f32 %v173, %v703
  %v783 = vadd.f32 %v174, %v705
  %v784 = vadd.f32 %v175, %v707
  %v785 = vadd.f32 %v176, %v711
  %v786 = vadd.f32 %v177, %v713
  %v787 = vadd.f32 %v178, %v715
  %v788 = vadd.f32 %v179, %v717
  %v789 = vadd.f32 %v180, %v721
  %v790 = vadd.f32 %v181, %v723
  %v791 = vadd.f32 %v182, %v725
  %v792 = vadd.f32 %v183, %v727
  %793 = vst [vmem:[#allocation2] sm:$0xff] %v729
  %794 = vst [vmem:[#allocation2 + $0x8] sm:$0xff] %v730
  %795 = vst [vmem:[#allocation2 + $0x10] sm:$0xff] %v731
  %796 = vst [vmem:[#allocation2 + $0x18] sm:$0xff] %v732
  %797 = vst [vmem:[#allocation2 + $0x20] sm:$0xff] %v733
  %798 = vst [vmem:[#allocation2 + $0x28] sm:$0xff] %v734
  %799 = vst [vmem:[#allocation2 + $0x30] sm:$0xff] %v735
  %800 = vst [vmem:[#allocation2 + $0x38] sm:$0xff] %v736
  %801 = vst [vmem:[#allocation2 + $0x40] sm:$0xff] %v737
  %802 = vst [vmem:[#allocation2 + $0x48] sm:$0xff] %v738
  %803 = vst [vmem:[#allocation2 + $0x50] sm:$0xff] %v739
  %804 = vst [vmem:[#allocation2 + $0x58] sm:$0xff] %v740
  %805 = vst [vmem:[#allocation2 + $0x60] sm:$0xff] %v741
  %806 = vst [vmem:[#allocation2 + $0x68] sm:$0xff] %v742
  %807 = vst [vmem:[#allocation2 + $0x70] sm:$0xff] %v743
  %808 = vst [vmem:[#allocation2 + $0x78] sm:$0xff] %v744
  %809 = vst [vmem:[#allocation2 + $0x80] sm:$0xff] %v745
  %810 = vst [vmem:[#allocation2 + $0x88] sm:$0xff] %v746
  %811 = vst [vmem:[#allocation2 + $0x90] sm:$0xff] %v747
  %812 = vst [vmem:[#allocation2 + $0x98] sm:$0xff] %v748
  %813 = vst [vmem:[#allocation2 + $0xa0] sm:$0xff] %v749
  %814 = vst [vmem:[#allocation2 + $0xa8] sm:$0xff] %v750
  %815 = vst [vmem:[#allocation2 + $0xb0] sm:$0xff] %v751
  %816 = vst [vmem:[#allocation2 + $0xb8] sm:$0xff] %v752
  %817 = vst [vmem:[#allocation2 + $0xc0] sm:$0xff] %v753
  %818 = vst [vmem:[#allocation2 + $0xc8] sm:$0xff] %v754
  %819 = vst [vmem:[#allocation2 + $0xd0] sm:$0xff] %v755
  %820 = vst [vmem:[#allocation2 + $0xd8] sm:$0xff] %v756
  %821 = vst [vmem:[#allocation2 + $0xe0] sm:$0xff] %v757
  %822 = vst [vmem:[#allocation2 + $0xe8] sm:$0xff] %v758
  %823 = vst [vmem:[#allocation2 + $0xf0] sm:$0xff] %v759
  %824 = vst [vmem:[#allocation2 + $0xf8] sm:$0xff] %v760
  %825 = vst [vmem:[#allocation2 + $0x100] sm:$0xff] %v761
  %826 = vst [vmem:[#allocation2 + $0x108] sm:$0xff] %v762
  %827 = vst [vmem:[#allocation2 + $0x110] sm:$0xff] %v763
  %828 = vst [vmem:[#allocation2 + $0x118] sm:$0xff] %v764
  %829 = vst [vmem:[#allocation2 + $0x120] sm:$0xff] %v765
  %830 = vst [vmem:[#allocation2 + $0x128] sm:$0xff] %v766
  %831 = vst [vmem:[#allocation2 + $0x130] sm:$0xff] %v767
  %832 = vst [vmem:[#allocation2 + $0x138] sm:$0xff] %v768
  %833 = vst [vmem:[#allocation2 + $0x140] sm:$0xff] %v769
  %834 = vst [vmem:[#allocation2 + $0x148] sm:$0xff] %v770
  %835 = vst [vmem:[#allocation2 + $0x150] sm:$0xff] %v771
  %836 = vst [vmem:[#allocation2 + $0x158] sm:$0xff] %v772
  %837 = vst [vmem:[#allocation2 + $0x160] sm:$0xff] %v773
  %838 = vst [vmem:[#allocation2 + $0x168] sm:$0xff] %v774
  %839 = vst [vmem:[#allocation2 + $0x170] sm:$0xff] %v775
  %840 = vst [vmem:[#allocation2 + $0x178] sm:$0xff] %v776
  %841 = vst [vmem:[#allocation2 + $0x180] sm:$0xff] %v777
  %842 = vst [vmem:[#allocation2 + $0x188] sm:$0xff] %v778
  %843 = vst [vmem:[#allocation2 + $0x190] sm:$0xff] %v779
  %844 = vst [vmem:[#allocation2 + $0x198] sm:$0xff] %v780
  %845 = vst [vmem:[#allocation2 + $0x1a0] sm:$0xff] %v781
  %846 = vst [vmem:[#allocation2 + $0x1a8] sm:$0xff] %v782
  %847 = vst [vmem:[#allocation2 + $0x1b0] sm:$0xff] %v783
  %848 = vst [vmem:[#allocation2 + $0x1b8] sm:$0xff] %v784
  %849 = vst [vmem:[#allocation2 + $0x1c0] sm:$0xff] %v785
  %850 = vst [vmem:[#allocation2 + $0x1c8] sm:$0xff] %v786
  %851 = vst [vmem:[#allocation2 + $0x1d0] sm:$0xff] %v787
  %852 = vst [vmem:[#allocation2 + $0x1d8] sm:$0xff] %v788
  %853 = vst [vmem:[#allocation2 + $0x1e0] sm:$0xff] %v789
  %854 = vst [vmem:[#allocation2 + $0x1e8] sm:$0xff] %v790
  %855 = vst [vmem:[#allocation2 + $0x1f0] sm:$0xff] %v791
  %856 = vst [vmem:[#allocation2 + $0x1f8] sm:$0xff] %v792
  // Predicated region
  $region18: #{dgi_forward.5} parent=0 // pred_check
    %p857 = pneg %p52
  $region19: #{dgi_forward.5} parent=0 // pred_check_branch
    %859 = sbr.rel (%p857) target = $region21
  $region20: #{dgi_forward.5} parent=0 // pred_region
    %v860 = vld [vmem:[#allocation2] sm:$0xff]
    %v861 = vld [vmem:[#allocation2 + $0x8] sm:$0xff]
    %v862 = vld [vmem:[#allocation2 + $0x10] sm:$0xff]
    %v863 = vld [vmem:[#allocation2 + $0x18] sm:$0xff]
    %v864 = vld [vmem:[#allocation2 + $0x20] sm:$0xff]
    %v865 = vld [vmem:[#allocation2 + $0x28] sm:$0xff]
    %v866 = vld [vmem:[#allocation2 + $0x30] sm:$0xff]
    %v867 = vld [vmem:[#allocation2 + $0x38] sm:$0xff]
    %v868 = vld [vmem:[#allocation2 + $0x40] sm:$0xff]
    %v869 = vld [vmem:[#allocation2 + $0x48] sm:$0xff]
    %v870 = vld [vmem:[#allocation2 + $0x50] sm:$0xff]
    %v871 = vld [vmem:[#allocation2 + $0x58] sm:$0xff]
    %v872 = vld [vmem:[#allocation2 + $0x60] sm:$0xff]
    %v873 = vld [vmem:[#allocation2 + $0x68] sm:$0xff]
    %v874 = vld [vmem:[#allocation2 + $0x70] sm:$0xff]
    %v875 = vld [vmem:[#allocation2 + $0x78] sm:$0xff]
    %v876 = vld [vmem:[#allocation2 + $0x80] sm:$0xff]
    %v877 = vld [vmem:[#allocation2 + $0x88] sm:$0xff]
    %v878 = vld [vmem:[#allocation2 + $0x90] sm:$0xff]
    %v879 = vld [vmem:[#allocation2 + $0x98] sm:$0xff]
    %v880 = vld [vmem:[#allocation2 + $0xa0] sm:$0xff]
    %v881 = vld [vmem:[#allocation2 + $0xa8] sm:$0xff]
    %v882 = vld [vmem:[#allocation2 + $0xb0] sm:$0xff]
    %v883 = vld [vmem:[#allocation2 + $0xb8] sm:$0xff]
    %v884 = vld [vmem:[#allocation2 + $0xc0] sm:$0xff]
    %v885 = vld [vmem:[#allocation2 + $0xc8] sm:$0xff]
    %v886 = vld [vmem:[#allocation2 + $0xd0] sm:$0xff]
    %v887 = vld [vmem:[#allocation2 + $0xd8] sm:$0xff]
    %v888 = vld [vmem:[#allocation2 + $0xe0] sm:$0xff]
    %v889 = vld [vmem:[#allocation2 + $0xe8] sm:$0xff]
    %v890 = vld [vmem:[#allocation2 + $0xf0] sm:$0xff]
    %v891 = vld [vmem:[#allocation2 + $0xf8] sm:$0xff]
    %v892 = vld [vmem:[#allocation2 + $0x100] sm:$0xff]
    %v893 = vld [vmem:[#allocation2 + $0x108] sm:$0xff]
    %v894 = vld [vmem:[#allocation2 + $0x110] sm:$0xff]
    %v895 = vld [vmem:[#allocation2 + $0x118] sm:$0xff]
    %v896 = vld [vmem:[#allocation2 + $0x120] sm:$0xff]
    %v897 = vld [vmem:[#allocation2 + $0x128] sm:$0xff]
    %v898 = vld [vmem:[#allocation2 + $0x130] sm:$0xff]
    %v899 = vld [vmem:[#allocation2 + $0x138] sm:$0xff]
    %v900 = vld [vmem:[#allocation2 + $0x140] sm:$0xff]
    %v901 = vld [vmem:[#allocation2 + $0x148] sm:$0xff]
    %v902 = vld [vmem:[#allocation2 + $0x150] sm:$0xff]
    %v903 = vld [vmem:[#allocation2 + $0x158] sm:$0xff]
    %v904 = vld [vmem:[#allocation2 + $0x160] sm:$0xff]
    %v905 = vld [vmem:[#allocation2 + $0x168] sm:$0xff]
    %v906 = vld [vmem:[#allocation2 + $0x170] sm:$0xff]
    %v907 = vld [vmem:[#allocation2 + $0x178] sm:$0xff]
    %v908 = vld [vmem:[#allocation2 + $0x180] sm:$0xff]
    %v909 = vld [vmem:[#allocation2 + $0x188] sm:$0xff]
    %v910 = vld [vmem:[#allocation2 + $0x190] sm:$0xff]
    %v911 = vld [vmem:[#allocation2 + $0x198] sm:$0xff]
    %v912 = vld [vmem:[#allocation2 + $0x1a0] sm:$0xff]
    %v913 = vld [vmem:[#allocation2 + $0x1a8] sm:$0xff]
    %v914 = vld [vmem:[#allocation2 + $0x1b0] sm:$0xff]
    %v915 = vld [vmem:[#allocation2 + $0x1b8] sm:$0xff]
    %v916 = vld [vmem:[#allocation2 + $0x1c0] sm:$0xff]
    %v917 = vld [vmem:[#allocation2 + $0x1c8] sm:$0xff]
    %v918 = vld [vmem:[#allocation2 + $0x1d0] sm:$0xff]
    %v919 = vld [vmem:[#allocation2 + $0x1d8] sm:$0xff]
    %v920 = vld [vmem:[#allocation2 + $0x1e0] sm:$0xff]
    %v921 = vld [vmem:[#allocation2 + $0x1e8] sm:$0xff]
    %v922 = vld [vmem:[#allocation2 + $0x1f0] sm:$0xff]
    %v923 = vld [vmem:[#allocation2 + $0x1f8] sm:$0xff]
    %v924 = vmax.f32 %v860, 0.0
    %v925 = vmax.f32 %v861, 0.0
    %v926 = vmax.f32 %v862, 0.0
    %v927 = vmax.f32 %v863, 0.0
    %v928 = vmax.f32 %v864, 0.0
    %v929 = vmax.f32 %v865, 0.0
    %v930 = vmax.f32 %v866, 0.0
    %v931 = vmax.f32 %v867, 0.0
    %v932 = vmax.f32 %v868, 0.0
    %v933 = vmax.f32 %v869, 0.0
    %v934 = vmax.f32 %v870, 0.0
    %v935 = vmax.f32 %v871, 0.0
    %v936 = vmax.f32 %v872, 0.0
    %v937 = vmax.f32 %v873, 0.0
    %v938 = vmax.f32 %v874, 0.0
    %v939 = vmax.f32 %v875, 0.0
    %v940 = vmax.f32 %v876, 0.0
    %v941 = vmax.f32 %v877, 0.0
    %v942 = vmax.f32 %v878, 0.0
    %v943 = vmax.f32 %v879, 0.0
    %v944 = vmax.f32 %v880, 0.0
    %v945 = vmax.f32 %v881, 0.0
    %v946 = vmax.f32 %v882, 0.0
    %v947 = vmax.f32 %v883, 0.0
    %v948 = vmax.f32 %v884, 0.0
    %v949 = vmax.f32 %v885, 0.0
    %v950 = vmax.f32 %v886, 0.0
    %v951 = vmax.f32 %v887, 0.0
    %v952 = vmax.f32 %v888, 0.0
    %v953 = vmax.f32 %v889, 0.0
    %v954 = vmax.f32 %v890, 0.0
    %v955 = vmax.f32 %v891, 0.0
    %v956 = vmax.f32 %v892, 0.0
    %v957 = vmax.f32 %v893, 0.0
    %v958 = vmax.f32 %v894, 0.0
    %v959 = vmax.f32 %v895, 0.0
    %v960 = vmax.f32 %v896, 0.0
    %v961 = vmax.f32 %v897, 0.0
    %v962 = vmax.f32 %v898, 0.0
    %v963 = vmax.f32 %v899, 0.0
    %v964 = vmax.f32 %v900, 0.0
    %v965 = vmax.f32 %v901, 0.0
    %v966 = vmax.f32 %v902, 0.0
    %v967 = vmax.f32 %v903, 0.0
    %v968 = vmax.f32 %v904, 0.0
    %v969 = vmax.f32 %v905, 0.0
    %v970 = vmax.f32 %v906, 0.0
    %v971 = vmax.f32 %v907, 0.0
    %v972 = vmax.f32 %v908, 0.0
    %v973 = vmax.f32 %v909, 0.0
    %v974 = vmax.f32 %v910, 0.0
    %v975 = vmax.f32 %v911, 0.0
    %v976 = vmax.f32 %v912, 0.0
    %v977 = vmax.f32 %v913, 0.0
    %v978 = vmax.f32 %v914, 0.0
    %v979 = vmax.f32 %v915, 0.0
    %v980 = vmax.f32 %v916, 0.0
    %v981 = vmax.f32 %v917, 0.0
    %v982 = vmax.f32 %v918, 0.0
    %v983 = vmax.f32 %v919, 0.0
    %v984 = vmax.f32 %v920, 0.0
    %v985 = vmax.f32 %v921, 0.0
    %v986 = vmax.f32 %v922, 0.0
    %v987 = vmax.f32 %v923, 0.0
    %v988 = vpack.c.bf16 %v926, %v924
    %v989 = vpack.c.bf16 %v927, %v925
    %v990 = vpack.c.bf16 %v930, %v928
    %v991 = vpack.c.bf16 %v931, %v929
    %v992 = vpack.c.bf16 %v934, %v932
    %v993 = vpack.c.bf16 %v935, %v933
    %v994 = vpack.c.bf16 %v938, %v936
    %v995 = vpack.c.bf16 %v939, %v937
    %v996 = vpack.c.bf16 %v942, %v940
    %v997 = vpack.c.bf16 %v943, %v941
    %v998 = vpack.c.bf16 %v946, %v944
    %v999 = vpack.c.bf16 %v947, %v945
    %v1000 = vpack.c.bf16 %v950, %v948
    %v1001 = vpack.c.bf16 %v951, %v949
    %v1002 = vpack.c.bf16 %v954, %v952
    %v1003 = vpack.c.bf16 %v955, %v953
    %v1004 = vpack.c.bf16 %v958, %v956
    %v1005 = vpack.c.bf16 %v959, %v957
    %v1006 = vpack.c.bf16 %v962, %v960
    %v1007 = vpack.c.bf16 %v963, %v961
    %v1008 = vpack.c.bf16 %v966, %v964
    %v1009 = vpack.c.bf16 %v967, %v965
    %v1010 = vpack.c.bf16 %v970, %v968
    %v1011 = vpack.c.bf16 %v971, %v969
    %v1012 = vpack.c.bf16 %v974, %v972
    %v1013 = vpack.c.bf16 %v975, %v973
    %v1014 = vpack.c.bf16 %v978, %v976
    %v1015 = vpack.c.bf16 %v979, %v977
    %v1016 = vpack.c.bf16 %v982, %v980
    %v1017 = vpack.c.bf16 %v983, %v981
    %v1018 = vpack.c.bf16 %v986, %v984
    %v1019 = vpack.c.bf16 %v987, %v985
    %v1020 = vld [vmem:[%s2] sm:$0xff]
    %v1021 = vld [vmem:[%s2 + $0x8] sm:$0xff]
    %v1022 = vld [vmem:[%s2 + $0x10] sm:$0xff]
    %v1023 = vld [vmem:[%s2 + $0x18] sm:$0xff]
    %v1024 = vld [vmem:[%s2 + $0x20] sm:$0xff]
    %v1025 = vld [vmem:[%s2 + $0x28] sm:$0xff]
    %v1026 = vld [vmem:[%s2 + $0x30] sm:$0xff]
    %v1027 = vld [vmem:[%s2 + $0x38] sm:$0xff]
    %v1028 = vld [vmem:[%s2 + $0x40] sm:$0xff]
    %v1029 = vld [vmem:[%s2 + $0x48] sm:$0xff]
    %v1030 = vld [vmem:[%s2 + $0x50] sm:$0xff]
    %v1031 = vld [vmem:[%s2 + $0x58] sm:$0xff]
    %v1032 = vld [vmem:[%s2 + $0x60] sm:$0xff]
    %v1033 = vld [vmem:[%s2 + $0x68] sm:$0xff]
    %v1034 = vld [vmem:[%s2 + $0x70] sm:$0xff]
    %v1035 = vld [vmem:[%s2 + $0x78] sm:$0xff]
    %v1036 = vld [vmem:[%s2 + $0x80] sm:$0xff]
    %v1037 = vld [vmem:[%s2 + $0x88] sm:$0xff]
    %v1038 = vld [vmem:[%s2 + $0x90] sm:$0xff]
    %v1039 = vld [vmem:[%s2 + $0x98] sm:$0xff]
    %v1040 = vld [vmem:[%s2 + $0xa0] sm:$0xff]
    %v1041 = vld [vmem:[%s2 + $0xa8] sm:$0xff]
    %v1042 = vld [vmem:[%s2 + $0xb0] sm:$0xff]
    %v1043 = vld [vmem:[%s2 + $0xb8] sm:$0xff]
    %v1044 = vld [vmem:[%s2 + $0xc0] sm:$0xff]
    %v1045 = vld [vmem:[%s2 + $0xc8] sm:$0xff]
    %v1046 = vld [vmem:[%s2 + $0xd0] sm:$0xff]
    %v1047 = vld [vmem:[%s2 + $0xd8] sm:$0xff]
    %v1048 = vld [vmem:[%s2 + $0xe0] sm:$0xff]
    %v1049 = vld [vmem:[%s2 + $0xe8] sm:$0xff]
    %v1050 = vld [vmem:[%s2 + $0xf0] sm:$0xff]
    %v1051 = vld [vmem:[%s2 + $0xf8] sm:$0xff]
    %v1084 = vunpack.c.l.b16 %v1020
    %v1085 = vunpack.c.h.b16 %v1020
    %v1086 = vunpack.c.l.b16 %v1021
    %v1087 = vunpack.c.h.b16 %v1021
    %v1088 = vunpack.c.l.b16 %v1022
    %v1089 = vunpack.c.h.b16 %v1022
    %v1090 = vunpack.c.l.b16 %v1023
    %v1091 = vunpack.c.h.b16 %v1023
    %v1092 = vunpack.c.l.b16 %v1024
    %v1093 = vunpack.c.h.b16 %v1024
    %v1094 = vunpack.c.l.b16 %v1025
    %v1095 = vunpack.c.h.b16 %v1025
    %v1096 = vunpack.c.l.b16 %v1026
    %v1097 = vunpack.c.h.b16 %v1026
    %v1098 = vunpack.c.l.b16 %v1027
    %v1099 = vunpack.c.h.b16 %v1027
    %v1100 = vunpack.c.l.b16 %v1028
    %v1101 = vunpack.c.h.b16 %v1028
    %v1102 = vunpack.c.l.b16 %v1029
    %v1103 = vunpack.c.h.b16 %v1029
    %v1104 = vunpack.c.l.b16 %v1030
    %v1105 = vunpack.c.h.b16 %v1030
    %v1106 = vunpack.c.l.b16 %v1031
    %v1107 = vunpack.c.h.b16 %v1031
    %v1108 = vunpack.c.l.b16 %v1032
    %v1109 = vunpack.c.h.b16 %v1032
    %v1110 = vunpack.c.l.b16 %v1033
    %v1111 = vunpack.c.h.b16 %v1033
    %v1112 = vunpack.c.l.b16 %v1034
    %v1113 = vunpack.c.h.b16 %v1034
    %v1114 = vunpack.c.l.b16 %v1035
    %v1115 = vunpack.c.h.b16 %v1035
    %v1116 = vunpack.c.l.b16 %v1036
    %v1117 = vunpack.c.h.b16 %v1036
    %v1118 = vunpack.c.l.b16 %v1037
    %v1119 = vunpack.c.h.b16 %v1037
    %v1120 = vunpack.c.l.b16 %v1038
    %v1121 = vunpack.c.h.b16 %v1038
    %v1122 = vunpack.c.l.b16 %v1039
    %v1123 = vunpack.c.h.b16 %v1039
    %v1124 = vunpack.c.l.b16 %v1040
    %v1125 = vunpack.c.h.b16 %v1040
    %v1126 = vunpack.c.l.b16 %v1041
    %v1127 = vunpack.c.h.b16 %v1041
    %v1128 = vunpack.c.l.b16 %v1042
    %v1129 = vunpack.c.h.b16 %v1042
    %v1130 = vunpack.c.l.b16 %v1043
    %v1131 = vunpack.c.h.b16 %v1043
    %v1132 = vunpack.c.l.b16 %v1044
    %v1133 = vunpack.c.h.b16 %v1044
    %v1134 = vunpack.c.l.b16 %v1045
    %v1135 = vunpack.c.h.b16 %v1045
    %v1136 = vunpack.c.l.b16 %v1046
    %v1137 = vunpack.c.h.b16 %v1046
    %v1138 = vunpack.c.l.b16 %v1047
    %v1139 = vunpack.c.h.b16 %v1047
    %v1140 = vunpack.c.l.b16 %v1048
    %v1141 = vunpack.c.h.b16 %v1048
    %v1142 = vunpack.c.l.b16 %v1049
    %v1143 = vunpack.c.h.b16 %v1049
    %v1144 = vunpack.c.l.b16 %v1050
    %v1145 = vunpack.c.h.b16 %v1050
    %v1146 = vunpack.c.l.b16 %v1051
    %v1147 = vunpack.c.h.b16 %v1051
    %v1148 = vpack.c.b16 %v1086, %v1084
    %v1149 = vpack.c.b16 %v1087, %v1085
    %v1150 = vpack.c.b16 %v1090, %v1088
    %v1151 = vpack.c.b16 %v1091, %v1089
    %v1152 = vpack.c.b16 %v1094, %v1092
    %v1153 = vpack.c.b16 %v1095, %v1093
    %v1154 = vpack.c.b16 %v1098, %v1096
    %v1155 = vpack.c.b16 %v1099, %v1097
    %v1156 = vpack.c.b16 %v1102, %v1100
    %v1157 = vpack.c.b16 %v1103, %v1101
    %v1158 = vpack.c.b16 %v1106, %v1104
    %v1159 = vpack.c.b16 %v1107, %v1105
    %v1160 = vpack.c.b16 %v1110, %v1108
    %v1161 = vpack.c.b16 %v1111, %v1109
    %v1162 = vpack.c.b16 %v1114, %v1112
    %v1163 = vpack.c.b16 %v1115, %v1113
    %v1164 = vpack.c.b16 %v1118, %v1116
    %v1165 = vpack.c.b16 %v1119, %v1117
    %v1166 = vpack.c.b16 %v1122, %v1120
    %v1167 = vpack.c.b16 %v1123, %v1121
    %v1168 = vpack.c.b16 %v1126, %v1124
    %v1169 = vpack.c.b16 %v1127, %v1125
    %v1170 = vpack.c.b16 %v1130, %v1128
    %v1171 = vpack.c.b16 %v1131, %v1129
    %v1172 = vpack.c.b16 %v1134, %v1132
    %v1173 = vpack.c.b16 %v1135, %v1133
    %v1174 = vpack.c.b16 %v1138, %v1136
    %v1175 = vpack.c.b16 %v1139, %v1137
    %v1176 = vpack.c.b16 %v1142, %v1140
    %v1177 = vpack.c.b16 %v1143, %v1141
    %v1178 = vpack.c.b16 %v1146, %v1144
    %v1179 = vpack.c.b16 %v1147, %v1145
    %1212 = vmatprep.subr.bf16.mxu0 %v1163
    %1213 = vmatpush1.bf16.msra.mxu0 %v1162
    %1214 = vmatprep.subr.bf16.mxu0 %v1161
    %1215 = vmatpush1.bf16.msra.mxu0 %v1160
    %1216 = vmatprep.subr.bf16.mxu0 %v1159
    %1217 = vmatpush1.bf16.msra.mxu0 %v1158
    %1218 = vmatprep.subr.bf16.mxu0 %v1157
    %1219 = vmatpush1.bf16.msra.mxu0 %v1156
    %1220 = vmatprep.subr.bf16.mxu0 %v1155
    %1221 = vmatpush1.bf16.msra.mxu0 %v1154
    %1222 = vmatprep.subr.bf16.mxu0 %v1153
    %1223 = vmatpush1.bf16.msra.mxu0 %v1152
    %1224 = vmatprep.subr.bf16.mxu0 %v1151
    %1225 = vmatpush1.bf16.msra.mxu0 %v1150
    %1226 = vmatprep.subr.bf16.mxu0 %v1149
    %1227 = vmatpush1.bf16.msra.mxu0 %v1148
    %1228 = vmatprep.subr.bf16.mxu0 %v1179
    %1229 = vmatpush2.bf16.msra.mxu0 %v1178
    %1230 = vmatprep.subr.bf16.mxu0 %v1177
    %1231 = vmatpush2.bf16.msra.mxu0 %v1176
    %1232 = vmatprep.subr.bf16.mxu0 %v1175
    %1233 = vmatpush2.bf16.msra.mxu0 %v1174
    %1234 = vmatprep.subr.bf16.mxu0 %v1173
    %1235 = vmatpush2.bf16.msra.mxu0 %v1172
    %1236 = vmatprep.subr.bf16.mxu0 %v1171
    %1237 = vmatpush2.bf16.msra.mxu0 %v1170
    %1238 = vmatprep.subr.bf16.mxu0 %v1169
    %1239 = vmatpush2.bf16.msra.mxu0 %v1168
    %1240 = vmatprep.subr.bf16.mxu0 %v1167
    %1241 = vmatpush2.bf16.msra.mxu0 %v1166
    %1242 = vmatprep.subr.bf16.mxu0 %v1165
    %1243 = vmatpush2.bf16.msra.mxu0 %v1164
    %1244 = vmatprep.mubr.bf16.mxu0 %v989
    %1245 = vmatmul.mubr.bf16.gmra.mxu0 %v988
    %v1246 = vpop.f32.mrf.mxu0
    %v1247 = vadd.f32 0.0, %v1246
    %v1248 = vpop.f32.mrf.mxu0
    %v1249 = vadd.f32 0.0, %v1248
    %v1250 = vpop.f32.mrf.mxu0
    %v1251 = vadd.f32 0.0, %v1250
    %v1252 = vpop.f32.mrf.mxu0
    %v1253 = vadd.f32 0.0, %v1252
    %1254 = vmatprep.mubr.bf16.mxu0 %v991
    %1255 = vmatmul.mubr.bf16.gmra.mxu0 %v990
    %v1256 = vpop.f32.mrf.mxu0
    %v1257 = vadd.f32 0.0, %v1256
    %v1258 = vpop.f32.mrf.mxu0
    %v1259 = vadd.f32 0.0, %v1258
    %v1260 = vpop.f32.mrf.mxu0
    %v1261 = vadd.f32 0.0, %v1260
    %v1262 = vpop.f32.mrf.mxu0
    %v1263 = vadd.f32 0.0, %v1262
    %1264 = vmatprep.mubr.bf16.mxu0 %v993
    %1265 = vmatmul.mubr.bf16.gmra.mxu0 %v992
    %v1266 = vpop.f32.mrf.mxu0
    %v1267 = vadd.f32 0.0, %v1266
    %v1268 = vpop.f32.mrf.mxu0
    %v1269 = vadd.f32 0.0, %v1268
    %v1270 = vpop.f32.mrf.mxu0
    %v1271 = vadd.f32 0.0, %v1270
    %v1272 = vpop.f32.mrf.mxu0
    %v1273 = vadd.f32 0.0, %v1272
    %1274 = vmatprep.mubr.bf16.mxu0 %v995
    %1275 = vmatmul.mubr.bf16.gmra.mxu0 %v994
    %v1276 = vpop.f32.mrf.mxu0
    %v1277 = vadd.f32 0.0, %v1276
    %v1278 = vpop.f32.mrf.mxu0
    %v1279 = vadd.f32 0.0, %v1278
    %v1280 = vpop.f32.mrf.mxu0
    %v1281 = vadd.f32 0.0, %v1280
    %v1282 = vpop.f32.mrf.mxu0
    %v1283 = vadd.f32 0.0, %v1282
    %1284 = vmatprep.mubr.bf16.mxu0 %v997
    %1285 = vmatmul.mubr.bf16.gmra.mxu0 %v996
    %v1286 = vpop.f32.mrf.mxu0
    %v1287 = vadd.f32 0.0, %v1286
    %v1288 = vpop.f32.mrf.mxu0
    %v1289 = vadd.f32 0.0, %v1288
    %v1290 = vpop.f32.mrf.mxu0
    %v1291 = vadd.f32 0.0, %v1290
    %v1292 = vpop.f32.mrf.mxu0
    %v1293 = vadd.f32 0.0, %v1292
    %1294 = vmatprep.mubr.bf16.mxu0 %v999
    %1295 = vmatmul.mubr.bf16.gmra.mxu0 %v998
    %v1296 = vpop.f32.mrf.mxu0
    %v1297 = vadd.f32 0.0, %v1296
    %v1298 = vpop.f32.mrf.mxu0
    %v1299 = vadd.f32 0.0, %v1298
    %v1300 = vpop.f32.mrf.mxu0
    %v1301 = vadd.f32 0.0, %v1300
    %v1302 = vpop.f32.mrf.mxu0
    %v1303 = vadd.f32 0.0, %v1302
    %1304 = vmatprep.mubr.bf16.mxu0 %v1001
    %1305 = vmatmul.mubr.bf16.gmra.mxu0 %v1000
    %v1306 = vpop.f32.mrf.mxu0
    %v1307 = vadd.f32 0.0, %v1306
    %v1308 = vpop.f32.mrf.mxu0
    %v1309 = vadd.f32 0.0, %v1308
    %v1310 = vpop.f32.mrf.mxu0
    %v1311 = vadd.f32 0.0, %v1310
    %v1312 = vpop.f32.mrf.mxu0
    %v1313 = vadd.f32 0.0, %v1312
    %1314 = vmatprep.mubr.bf16.mxu0 %v1003
    %1315 = vmatmul.mubr.bf16.gmra.mxu0 %v1002
    %v1316 = vpop.f32.mrf.mxu0
    %v1317 = vadd.f32 0.0, %v1316
    %v1318 = vpop.f32.mrf.mxu0
    %v1319 = vadd.f32 0.0, %v1318
    %v1320 = vpop.f32.mrf.mxu0
    %v1321 = vadd.f32 0.0, %v1320
    %v1322 = vpop.f32.mrf.mxu0
    %v1323 = vadd.f32 0.0, %v1322
    %1324 = vmatprep.mubr.bf16.mxu0 %v1005
    %1325 = vmatmul.mubr.bf16.gmra.mxu0 %v1004
    %v1326 = vpop.f32.mrf.mxu0
    %v1327 = vadd.f32 0.0, %v1326
    %v1328 = vpop.f32.mrf.mxu0
    %v1329 = vadd.f32 0.0, %v1328
    %v1330 = vpop.f32.mrf.mxu0
    %v1331 = vadd.f32 0.0, %v1330
    %v1332 = vpop.f32.mrf.mxu0
    %v1333 = vadd.f32 0.0, %v1332
    %1334 = vmatprep.mubr.bf16.mxu0 %v1007
    %1335 = vmatmul.mubr.bf16.gmra.mxu0 %v1006
    %v1336 = vpop.f32.mrf.mxu0
    %v1337 = vadd.f32 0.0, %v1336
    %v1338 = vpop.f32.mrf.mxu0
    %v1339 = vadd.f32 0.0, %v1338
    %v1340 = vpop.f32.mrf.mxu0
    %v1341 = vadd.f32 0.0, %v1340
    %v1342 = vpop.f32.mrf.mxu0
    %v1343 = vadd.f32 0.0, %v1342
    %1344 = vmatprep.mubr.bf16.mxu0 %v1009
    %1345 = vmatmul.mubr.bf16.gmra.mxu0 %v1008
    %v1346 = vpop.f32.mrf.mxu0
    %v1347 = vadd.f32 0.0, %v1346
    %v1348 = vpop.f32.mrf.mxu0
    %v1349 = vadd.f32 0.0, %v1348
    %v1350 = vpop.f32.mrf.mxu0
    %v1351 = vadd.f32 0.0, %v1350
    %v1352 = vpop.f32.mrf.mxu0
    %v1353 = vadd.f32 0.0, %v1352
    %1354 = vmatprep.mubr.bf16.mxu0 %v1011
    %1355 = vmatmul.mubr.bf16.gmra.mxu0 %v1010
    %v1356 = vpop.f32.mrf.mxu0
    %v1357 = vadd.f32 0.0, %v1356
    %v1358 = vpop.f32.mrf.mxu0
    %v1359 = vadd.f32 0.0, %v1358
    %v1360 = vpop.f32.mrf.mxu0
    %v1361 = vadd.f32 0.0, %v1360
    %v1362 = vpop.f32.mrf.mxu0
    %v1363 = vadd.f32 0.0, %v1362
    %1364 = vmatprep.mubr.bf16.mxu0 %v1013
    %1365 = vmatmul.mubr.bf16.gmra.mxu0 %v1012
    %v1366 = vpop.f32.mrf.mxu0
    %v1367 = vadd.f32 0.0, %v1366
    %v1368 = vpop.f32.mrf.mxu0
    %v1369 = vadd.f32 0.0, %v1368
    %v1370 = vpop.f32.mrf.mxu0
    %v1371 = vadd.f32 0.0, %v1370
    %v1372 = vpop.f32.mrf.mxu0
    %v1373 = vadd.f32 0.0, %v1372
    %1374 = vmatprep.mubr.bf16.mxu0 %v1015
    %1375 = vmatmul.mubr.bf16.gmra.mxu0 %v1014
    %v1376 = vpop.f32.mrf.mxu0
    %v1377 = vadd.f32 0.0, %v1376
    %v1378 = vpop.f32.mrf.mxu0
    %v1379 = vadd.f32 0.0, %v1378
    %v1380 = vpop.f32.mrf.mxu0
    %v1381 = vadd.f32 0.0, %v1380
    %v1382 = vpop.f32.mrf.mxu0
    %v1383 = vadd.f32 0.0, %v1382
    %1384 = vmatprep.mubr.bf16.mxu0 %v1017
    %1385 = vmatmul.mubr.bf16.gmra.mxu0 %v1016
    %v1386 = vpop.f32.mrf.mxu0
    %v1387 = vadd.f32 0.0, %v1386
    %v1388 = vpop.f32.mrf.mxu0
    %v1389 = vadd.f32 0.0, %v1388
    %v1390 = vpop.f32.mrf.mxu0
    %v1391 = vadd.f32 0.0, %v1390
    %v1392 = vpop.f32.mrf.mxu0
    %v1393 = vadd.f32 0.0, %v1392
    %1394 = vmatprep.mubr.bf16.mxu0 %v1019
    %1395 = vmatmul.mubr.bf16.gmra.mxu0 %v1018
    %v1396 = vpop.f32.mrf.mxu0
    %v1397 = vadd.f32 0.0, %v1396
    %v1398 = vpop.f32.mrf.mxu0
    %v1399 = vadd.f32 0.0, %v1398
    %v1400 = vpop.f32.mrf.mxu0
    %v1401 = vadd.f32 0.0, %v1400
    %v1402 = vpop.f32.mrf.mxu0
    %v1403 = vadd.f32 0.0, %v1402
    %1404 = vdwg.mxu0
    %v1405 = vpack.c.bf16 %v1251, %v1247
    %v1406 = vpack.c.bf16 %v1253, %v1249
    %v1407 = vpack.c.bf16 %v1261, %v1257
    %v1408 = vpack.c.bf16 %v1263, %v1259
    %v1409 = vpack.c.bf16 %v1271, %v1267
    %v1410 = vpack.c.bf16 %v1273, %v1269
    %v1411 = vpack.c.bf16 %v1281, %v1277
    %v1412 = vpack.c.bf16 %v1283, %v1279
    %v1413 = vpack.c.bf16 %v1291, %v1287
    %v1414 = vpack.c.bf16 %v1293, %v1289
    %v1415 = vpack.c.bf16 %v1301, %v1297
    %v1416 = vpack.c.bf16 %v1303, %v1299
    %v1417 = vpack.c.bf16 %v1311, %v1307
    %v1418 = vpack.c.bf16 %v1313, %v1309
    %v1419 = vpack.c.bf16 %v1321, %v1317
    %v1420 = vpack.c.bf16 %v1323, %v1319
    %v1421 = vpack.c.bf16 %v1331, %v1327
    %v1422 = vpack.c.bf16 %v1333, %v1329
    %v1423 = vpack.c.bf16 %v1341, %v1337
    %v1424 = vpack.c.bf16 %v1343, %v1339
    %v1425 = vpack.c.bf16 %v1351, %v1347
    %v1426 = vpack.c.bf16 %v1353, %v1349
    %v1427 = vpack.c.bf16 %v1361, %v1357
    %v1428 = vpack.c.bf16 %v1363, %v1359
    %v1429 = vpack.c.bf16 %v1371, %v1367
    %v1430 = vpack.c.bf16 %v1373, %v1369
    %v1431 = vpack.c.bf16 %v1381, %v1377
    %v1432 = vpack.c.bf16 %v1383, %v1379
    %v1433 = vpack.c.bf16 %v1391, %v1387
    %v1434 = vpack.c.bf16 %v1393, %v1389
    %v1435 = vpack.c.bf16 %v1401, %v1397
    %v1436 = vpack.c.bf16 %v1403, %v1399
    %v1469 = vunpack.c.l.b16 %v1405
    %v1470 = vunpack.c.l.b16 %v1406
    %v1471 = vunpack.c.h.b16 %v1405
    %v1472 = vunpack.c.h.b16 %v1406
    %v1473 = vunpack.c.l.b16 %v1407
    %v1474 = vunpack.c.l.b16 %v1408
    %v1475 = vunpack.c.h.b16 %v1407
    %v1476 = vunpack.c.h.b16 %v1408
    %v1477 = vunpack.c.l.b16 %v1409
    %v1478 = vunpack.c.l.b16 %v1410
    %v1479 = vunpack.c.h.b16 %v1409
    %v1480 = vunpack.c.h.b16 %v1410
    %v1481 = vunpack.c.l.b16 %v1411
    %v1482 = vunpack.c.l.b16 %v1412
    %v1483 = vunpack.c.h.b16 %v1411
    %v1484 = vunpack.c.h.b16 %v1412
    %v1485 = vunpack.c.l.b16 %v1413
    %v1486 = vunpack.c.l.b16 %v1414
    %v1487 = vunpack.c.h.b16 %v1413
    %v1488 = vunpack.c.h.b16 %v1414
    %v1489 = vunpack.c.l.b16 %v1415
    %v1490 = vunpack.c.l.b16 %v1416
    %v1491 = vunpack.c.h.b16 %v1415
    %v1492 = vunpack.c.h.b16 %v1416
    %v1493 = vunpack.c.l.b16 %v1417
    %v1494 = vunpack.c.l.b16 %v1418
    %v1495 = vunpack.c.h.b16 %v1417
    %v1496 = vunpack.c.h.b16 %v1418
    %v1497 = vunpack.c.l.b16 %v1419
    %v1498 = vunpack.c.l.b16 %v1420
    %v1499 = vunpack.c.h.b16 %v1419
    %v1500 = vunpack.c.h.b16 %v1420
    %v1501 = vunpack.c.l.b16 %v1421
    %v1502 = vunpack.c.l.b16 %v1422
    %v1503 = vunpack.c.h.b16 %v1421
    %v1504 = vunpack.c.h.b16 %v1422
    %v1505 = vunpack.c.l.b16 %v1423
    %v1506 = vunpack.c.l.b16 %v1424
    %v1507 = vunpack.c.h.b16 %v1423
    %v1508 = vunpack.c.h.b16 %v1424
    %v1509 = vunpack.c.l.b16 %v1425
    %v1510 = vunpack.c.l.b16 %v1426
    %v1511 = vunpack.c.h.b16 %v1425
    %v1512 = vunpack.c.h.b16 %v1426
    %v1513 = vunpack.c.l.b16 %v1427
    %v1514 = vunpack.c.l.b16 %v1428
    %v1515 = vunpack.c.h.b16 %v1427
    %v1516 = vunpack.c.h.b16 %v1428
    %v1517 = vunpack.c.l.b16 %v1429
    %v1518 = vunpack.c.l.b16 %v1430
    %v1519 = vunpack.c.h.b16 %v1429
    %v1520 = vunpack.c.h.b16 %v1430
    %v1521 = vunpack.c.l.b16 %v1431
    %v1522 = vunpack.c.l.b16 %v1432
    %v1523 = vunpack.c.h.b16 %v1431
    %v1524 = vunpack.c.h.b16 %v1432
    %v1525 = vunpack.c.l.b16 %v1433
    %v1526 = vunpack.c.l.b16 %v1434
    %v1527 = vunpack.c.h.b16 %v1433
    %v1528 = vunpack.c.h.b16 %v1434
    %v1529 = vunpack.c.l.b16 %v1435
    %v1530 = vunpack.c.l.b16 %v1436
    %v1531 = vunpack.c.h.b16 %v1435
    %v1532 = vunpack.c.h.b16 %v1436
    %v1533 = vpack.c.b16 %v1470, %v1469
    %v1534 = vpack.c.b16 %v1472, %v1471
    %v1535 = vpack.c.b16 %v1474, %v1473
    %v1536 = vpack.c.b16 %v1476, %v1475
    %v1537 = vpack.c.b16 %v1478, %v1477
    %v1538 = vpack.c.b16 %v1480, %v1479
    %v1539 = vpack.c.b16 %v1482, %v1481
    %v1540 = vpack.c.b16 %v1484, %v1483
    %v1541 = vpack.c.b16 %v1486, %v1485
    %v1542 = vpack.c.b16 %v1488, %v1487
    %v1543 = vpack.c.b16 %v1490, %v1489
    %v1544 = vpack.c.b16 %v1492, %v1491
    %v1545 = vpack.c.b16 %v1494, %v1493
    %v1546 = vpack.c.b16 %v1496, %v1495
    %v1547 = vpack.c.b16 %v1498, %v1497
    %v1548 = vpack.c.b16 %v1500, %v1499
    %v1549 = vpack.c.b16 %v1502, %v1501
    %v1550 = vpack.c.b16 %v1504, %v1503
    %v1551 = vpack.c.b16 %v1506, %v1505
    %v1552 = vpack.c.b16 %v1508, %v1507
    %v1553 = vpack.c.b16 %v1510, %v1509
    %v1554 = vpack.c.b16 %v1512, %v1511
    %v1555 = vpack.c.b16 %v1514, %v1513
    %v1556 = vpack.c.b16 %v1516, %v1515
    %v1557 = vpack.c.b16 %v1518, %v1517
    %v1558 = vpack.c.b16 %v1520, %v1519
    %v1559 = vpack.c.b16 %v1522, %v1521
    %v1560 = vpack.c.b16 %v1524, %v1523
    %v1561 = vpack.c.b16 %v1526, %v1525
    %v1562 = vpack.c.b16 %v1528, %v1527
    %v1563 = vpack.c.b16 %v1530, %v1529
    %v1564 = vpack.c.b16 %v1532, %v1531
    %1597 = vst [vmem:[%s3] sm:$0xff] %v1533
    %1598 = vst [vmem:[%s3 + $0x8] sm:$0xff] %v1534
    %1599 = vst [vmem:[%s3 + $0x10] sm:$0xff] %v1535
    %1600 = vst [vmem:[%s3 + $0x18] sm:$0xff] %v1536
    %1601 = vst [vmem:[%s3 + $0x20] sm:$0xff] %v1537
    %1602 = vst [vmem:[%s3 + $0x28] sm:$0xff] %v1538
    %1603 = vst [vmem:[%s3 + $0x30] sm:$0xff] %v1539
    %1604 = vst [vmem:[%s3 + $0x38] sm:$0xff] %v1540
    %1605 = vst [vmem:[%s3 + $0x40] sm:$0xff] %v1541
    %1606 = vst [vmem:[%s3 + $0x48] sm:$0xff] %v1542
    %1607 = vst [vmem:[%s3 + $0x50] sm:$0xff] %v1543
    %1608 = vst [vmem:[%s3 + $0x58] sm:$0xff] %v1544
    %1609 = vst [vmem:[%s3 + $0x60] sm:$0xff] %v1545
    %1610 = vst [vmem:[%s3 + $0x68] sm:$0xff] %v1546
    %1611 = vst [vmem:[%s3 + $0x70] sm:$0xff] %v1547
    %1612 = vst [vmem:[%s3 + $0x78] sm:$0xff] %v1548
    %1613 = vst [vmem:[%s3 + $0x80] sm:$0xff] %v1549
    %1614 = vst [vmem:[%s3 + $0x88] sm:$0xff] %v1550
    %1615 = vst [vmem:[%s3 + $0x90] sm:$0xff] %v1551
    %1616 = vst [vmem:[%s3 + $0x98] sm:$0xff] %v1552
    %1617 = vst [vmem:[%s3 + $0xa0] sm:$0xff] %v1553
    %1618 = vst [vmem:[%s3 + $0xa8] sm:$0xff] %v1554
    %1619 = vst [vmem:[%s3 + $0xb0] sm:$0xff] %v1555
    %1620 = vst [vmem:[%s3 + $0xb8] sm:$0xff] %v1556
    %1621 = vst [vmem:[%s3 + $0xc0] sm:$0xff] %v1557
    %1622 = vst [vmem:[%s3 + $0xc8] sm:$0xff] %v1558
    %1623 = vst [vmem:[%s3 + $0xd0] sm:$0xff] %v1559
    %1624 = vst [vmem:[%s3 + $0xd8] sm:$0xff] %v1560
    %1625 = vst [vmem:[%s3 + $0xe0] sm:$0xff] %v1561
    %1626 = vst [vmem:[%s3 + $0xe8] sm:$0xff] %v1562
    %1627 = vst [vmem:[%s3 + $0xf0] sm:$0xff] %v1563
    %1628 = vst [vmem:[%s3 + $0xf8] sm:$0xff] %v1564
  $region21: #{dgi_forward.5} parent=0 // pred_fallthru
    _
  // Predicated region
  $region22: #{dgi_forward.5} parent=0 // pred_check
    _
  $region23: #{dgi_forward.5} parent=0 // pred_check_branch
    %1630 = sbr.rel (0) target = $region25
  $region24: #{dgi_forward.5} parent=0 // pred_region
    _
  $region25: #{dgi_forward.5} parent=0 // pred_fallthru
    _
  // Predicated region
  $region26: #{dgi_forward.5} parent=0 // pred_check
    _
  $region27: #{dgi_forward.5} parent=0 // pred_check_branch
    %1632 = sbr.rel (0) target = $region29
  $region28: #{dgi_forward.5} parent=0 // pred_region
    _
  $region29: #{dgi_forward.5} parent=0 // pred_fallthru
    _

// kernel: dgi_forward.7
$region0: #{dgi_forward.7}
  #allocation0 [shape = 'u32[]', space=smem, size = 0x4, offset = 0x4, fixed_abs, tag = 'smem constant byte address 0x4 - core index']
  #allocation1 [shape = 'u32[144,128]{1,0:T(1,128)}', space=vmem, size = 0x12000, scoped, tag = 'internal scratch']
  %s0 = inlined_call_operand.vmem [shape: bf16[256,256], index: 0, kind: input, shape index: {}]
  %s1 = inlined_call_operand.vmem [shape: f32[256,128], index: 1, kind: input, shape index: {}]
  %s2 = inlined_call_operand.hbm [shape: f32[1,1], index: 2, kind: output, shape index: {}]
  %s3 = sld [smem:[#allocation0]]
  $region22: #{dgi_forward.7} parent=0
    _
  %s5 = ssub.s32 1, %s3
  %s6 = scalar_select 0, %s5, %s3
  $region1: #{dgi_forward.7} parent=0
    #allocation2 [shape = 'u8[512]{0}', space=smem, size = 0x200, scoped, tag = 'output window, operand 0, single buffered']
    #allocation3 [shape = 's32[1]{0}', space=sflag, size = 0x4, scoped, tag = 'scoped memory for dgi_forward.7']
    %7 = vsyncpa [#allocation3], 0
    // Predicated region
    $region2: #{dgi_forward.7} parent=1 // pred_check
      _
    $region3: #{dgi_forward.7} parent=1 // pred_check_branch
      %9 = sbr.rel (0) target = $region5
    $region4: #{dgi_forward.7} parent=1 // pred_region
      _
    $region5: #{dgi_forward.7} parent=1 // pred_fallthru
      _
    // Predicated region
    $region6: #{dgi_forward.7} parent=1 // pred_check
      _
    $region7: #{dgi_forward.7} parent=1 // pred_check_branch
      %11 = sbr.rel (0) target = $region9
    $region8: #{dgi_forward.7} parent=1 // pred_region
      _
    $region9: #{dgi_forward.7} parent=1 // pred_fallthru
      _
    %p12 = scmp.eq.s32.totalorder 0, 0
    // Predicated region
    $region10: #{dgi_forward.7} parent=1 // pred_check
      %p13 = pneg %p12
    $region11: #{dgi_forward.7} parent=1 // pred_check_branch
      %15 = sbr.rel (%p13) target = $region13
    $region12: #{dgi_forward.7} parent=1 // pred_region
      %s16 = scalar_lea.smem [#allocation2], 0
      %17 = sst [smem:[%s16]] 0.0
    $region13: #{dgi_forward.7} parent=1 // pred_fallthru
      _
    %v18 = vld [vmem:[%s0] sm:$0xff]
    %v19 = vld [vmem:[%s0 + $0x8] sm:$0xff]
    %v20 = vld [vmem:[%s0 + $0x10] sm:$0xff]
    %v21 = vld [vmem:[%s0 + $0x18] sm:$0xff]
    %v22 = vld [vmem:[%s0 + $0x20] sm:$0xff]
    %v23 = vld [vmem:[%s0 + $0x28] sm:$0xff]
    %v24 = vld [vmem:[%s0 + $0x30] sm:$0xff]
    %v25 = vld [vmem:[%s0 + $0x38] sm:$0xff]
    %v26 = vld [vmem:[%s0 + $0x40] sm:$0xff]
    %v27 = vld [vmem:[%s0 + $0x48] sm:$0xff]
    %v28 = vld [vmem:[%s0 + $0x50] sm:$0xff]
    %v29 = vld [vmem:[%s0 + $0x58] sm:$0xff]
    %v30 = vld [vmem:[%s0 + $0x60] sm:$0xff]
    %v31 = vld [vmem:[%s0 + $0x68] sm:$0xff]
    %v32 = vld [vmem:[%s0 + $0x70] sm:$0xff]
    %v33 = vld [vmem:[%s0 + $0x78] sm:$0xff]
    %v34 = vld [vmem:[%s0 + $0x80] sm:$0xff]
    %v35 = vld [vmem:[%s0 + $0x88] sm:$0xff]
    %v36 = vld [vmem:[%s0 + $0x90] sm:$0xff]
    %v37 = vld [vmem:[%s0 + $0x98] sm:$0xff]
    %v38 = vld [vmem:[%s0 + $0xa0] sm:$0xff]
    %v39 = vld [vmem:[%s0 + $0xa8] sm:$0xff]
    %v40 = vld [vmem:[%s0 + $0xb0] sm:$0xff]
    %v41 = vld [vmem:[%s0 + $0xb8] sm:$0xff]
    %v42 = vld [vmem:[%s0 + $0xc0] sm:$0xff]
    %v43 = vld [vmem:[%s0 + $0xc8] sm:$0xff]
    %v44 = vld [vmem:[%s0 + $0xd0] sm:$0xff]
    %v45 = vld [vmem:[%s0 + $0xd8] sm:$0xff]
    %v46 = vld [vmem:[%s0 + $0xe0] sm:$0xff]
    %v47 = vld [vmem:[%s0 + $0xe8] sm:$0xff]
    %v48 = vld [vmem:[%s0 + $0xf0] sm:$0xff]
    %v49 = vld [vmem:[%s0 + $0xf8] sm:$0xff]
    %v50 = vunpack.c.l.bf16 %v18
    %v51 = vunpack.c.h.bf16 %v18
    %v52 = vunpack.c.l.bf16 %v19
    %v53 = vunpack.c.h.bf16 %v19
    %v54 = vunpack.c.l.bf16 %v20
    %v55 = vunpack.c.h.bf16 %v20
    %v56 = vunpack.c.l.bf16 %v21
    %v57 = vunpack.c.h.bf16 %v21
    %v58 = vunpack.c.l.bf16 %v22
    %v59 = vunpack.c.h.bf16 %v22
    %v60 = vunpack.c.l.bf16 %v23
    %v61 = vunpack.c.h.bf16 %v23
    %v62 = vunpack.c.l.bf16 %v24
    %v63 = vunpack.c.h.bf16 %v24
    %v64 = vunpack.c.l.bf16 %v25
    %v65 = vunpack.c.h.bf16 %v25
    %v66 = vunpack.c.l.bf16 %v26
    %v67 = vunpack.c.h.bf16 %v26
    %v68 = vunpack.c.l.bf16 %v27
    %v69 = vunpack.c.h.bf16 %v27
    %v70 = vunpack.c.l.bf16 %v28
    %v71 = vunpack.c.h.bf16 %v28
    %v72 = vunpack.c.l.bf16 %v29
    %v73 = vunpack.c.h.bf16 %v29
    %v74 = vunpack.c.l.bf16 %v30
    %v75 = vunpack.c.h.bf16 %v30
    %v76 = vunpack.c.l.bf16 %v31
    %v77 = vunpack.c.h.bf16 %v31
    %v78 = vunpack.c.l.bf16 %v32
    %v79 = vunpack.c.h.bf16 %v32
    %v80 = vunpack.c.l.bf16 %v33
    %v81 = vunpack.c.h.bf16 %v33
    %v82 = vunpack.c.l.bf16 %v34
    %v83 = vunpack.c.h.bf16 %v34
    %v84 = vunpack.c.l.bf16 %v35
    %v85 = vunpack.c.h.bf16 %v35
    %v86 = vunpack.c.l.bf16 %v36
    %v87 = vunpack.c.h.bf16 %v36
    %v88 = vunpack.c.l.bf16 %v37
    %v89 = vunpack.c.h.bf16 %v37
    %v90 = vunpack.c.l.bf16 %v38
    %v91 = vunpack.c.h.bf16 %v38
    %v92 = vunpack.c.l.bf16 %v39
    %v93 = vunpack.c.h.bf16 %v39
    %v94 = vunpack.c.l.bf16 %v40
    %v95 = vunpack.c.h.bf16 %v40
    %v96 = vunpack.c.l.bf16 %v41
    %v97 = vunpack.c.h.bf16 %v41
    %v98 = vunpack.c.l.bf16 %v42
    %v99 = vunpack.c.h.bf16 %v42
    %v100 = vunpack.c.l.bf16 %v43
    %v101 = vunpack.c.h.bf16 %v43
    %v102 = vunpack.c.l.bf16 %v44
    %v103 = vunpack.c.h.bf16 %v44
    %v104 = vunpack.c.l.bf16 %v45
    %v105 = vunpack.c.h.bf16 %v45
    %v106 = vunpack.c.l.bf16 %v46
    %v107 = vunpack.c.h.bf16 %v46
    %v108 = vunpack.c.l.bf16 %v47
    %v109 = vunpack.c.h.bf16 %v47
    %v110 = vunpack.c.l.bf16 %v48
    %v111 = vunpack.c.h.bf16 %v48
    %v112 = vunpack.c.l.bf16 %v49
    %v113 = vunpack.c.h.bf16 %v49
    %v114 = vld [vmem:[%s1] sm:$0xff]
    %v115 = vld [vmem:[%s1 + $0x8] sm:$0xff]
    %v116 = vld [vmem:[%s1 + $0x10] sm:$0xff]
    %v117 = vld [vmem:[%s1 + $0x18] sm:$0xff]
    %v118 = vld [vmem:[%s1 + $0x20] sm:$0xff]
    %v119 = vld [vmem:[%s1 + $0x28] sm:$0xff]
    %v120 = vld [vmem:[%s1 + $0x30] sm:$0xff]
    %v121 = vld [vmem:[%s1 + $0x38] sm:$0xff]
    %v122 = vld [vmem:[%s1 + $0x40] sm:$0xff]
    %v123 = vld [vmem:[%s1 + $0x48] sm:$0xff]
    %v124 = vld [vmem:[%s1 + $0x50] sm:$0xff]
    %v125 = vld [vmem:[%s1 + $0x58] sm:$0xff]
    %v126 = vld [vmem:[%s1 + $0x60] sm:$0xff]
    %v127 = vld [vmem:[%s1 + $0x68] sm:$0xff]
    %v128 = vld [vmem:[%s1 + $0x70] sm:$0xff]
    %v129 = vld [vmem:[%s1 + $0x78] sm:$0xff]
    %v130 = vld [vmem:[%s1 + $0x80] sm:$0xff]
    %v131 = vld [vmem:[%s1 + $0x88] sm:$0xff]
    %v132 = vld [vmem:[%s1 + $0x90] sm:$0xff]
    %v133 = vld [vmem:[%s1 + $0x98] sm:$0xff]
    %v134 = vld [vmem:[%s1 + $0xa0] sm:$0xff]
    %v135 = vld [vmem:[%s1 + $0xa8] sm:$0xff]
    %v136 = vld [vmem:[%s1 + $0xb0] sm:$0xff]
    %v137 = vld [vmem:[%s1 + $0xb8] sm:$0xff]
    %v138 = vld [vmem:[%s1 + $0xc0] sm:$0xff]
    %v139 = vld [vmem:[%s1 + $0xc8] sm:$0xff]
    %v140 = vld [vmem:[%s1 + $0xd0] sm:$0xff]
    %v141 = vld [vmem:[%s1 + $0xd8] sm:$0xff]
    %v142 = vld [vmem:[%s1 + $0xe0] sm:$0xff]
    %v143 = vld [vmem:[%s1 + $0xe8] sm:$0xff]
    %v144 = vld [vmem:[%s1 + $0xf0] sm:$0xff]
    %v145 = vld [vmem:[%s1 + $0xf8] sm:$0xff]
    %146 = vmatprep.subr.mxu0 0.0
    %147 = vmatpush1.msra.mxu0 %v129
    %148 = vmatprep.subr.mxu0 0.0
    %149 = vmatpush1.msra.mxu0 %v128
    %150 = vmatprep.subr.mxu0 0.0
    %151 = vmatpush1.msra.mxu0 %v127
    %152 = vmatprep.subr.mxu0 0.0
    %153 = vmatpush1.msra.mxu0 %v126
    %154 = vmatprep.subr.mxu0 0.0
    %155 = vmatpush1.msra.mxu0 %v125
    %156 = vmatprep.subr.mxu0 0.0
    %157 = vmatpush1.msra.mxu0 %v124
    %158 = vmatprep.subr.mxu0 0.0
    %159 = vmatpush1.msra.mxu0 %v123
    %160 = vmatprep.subr.mxu0 0.0
    %161 = vmatpush1.msra.mxu0 %v122
    %162 = vmatprep.subr.mxu0 0.0
    %163 = vmatpush1.msra.mxu0 %v121
    %164 = vmatprep.subr.mxu0 0.0
    %165 = vmatpush1.msra.mxu0 %v120
    %166 = vmatprep.subr.mxu0 0.0
    %167 = vmatpush1.msra.mxu0 %v119
    %168 = vmatprep.subr.mxu0 0.0
    %169 = vmatpush1.msra.mxu0 %v118
    %170 = vmatprep.subr.mxu0 0.0
    %171 = vmatpush1.msra.mxu0 %v117
    %172 = vmatprep.subr.mxu0 0.0
    %173 = vmatpush1.msra.mxu0 %v116
    %174 = vmatprep.subr.mxu0 0.0
    %175 = vmatpush1.msra.mxu0 %v115
    %176 = vmatprep.subr.mxu0 0.0
    %177 = vmatpush1.msra.mxu0 %v114
    %178 = vmatprep.subr.mxu0 0.0
    %179 = vmatpush2.msra.mxu0 %v145
    %180 = vmatprep.subr.mxu0 0.0
    %181 = vmatpush2.msra.mxu0 %v144
    %182 = vmatprep.subr.mxu0 0.0
    %183 = vmatpush2.msra.mxu0 %v143
    %184 = vmatprep.subr.mxu0 0.0
    %185 = vmatpush2.msra.mxu0 %v142
    %186 = vmatprep.subr.mxu0 0.0
    %187 = vmatpush2.msra.mxu0 %v141
    %188 = vmatprep.subr.mxu0 0.0
    %189 = vmatpush2.msra.mxu0 %v140
    %190 = vmatprep.subr.mxu0 0.0
    %191 = vmatpush2.msra.mxu0 %v139
    %192 = vmatprep.subr.mxu0 0.0
    %193 = vmatpush2.msra.mxu0 %v138
    %194 = vmatprep.subr.mxu0 0.0
    %195 = vmatpush2.msra.mxu0 %v137
    %196 = vmatprep.subr.mxu0 0.0
    %197 = vmatpush2.msra.mxu0 %v136
    %198 = vmatprep.subr.mxu0 0.0
    %199 = vmatpush2.msra.mxu0 %v135
    %200 = vmatprep.subr.mxu0 0.0
    %201 = vmatpush2.msra.mxu0 %v134
    %202 = vmatprep.subr.mxu0 0.0
    %203 = vmatpush2.msra.mxu0 %v133
    %204 = vmatprep.subr.mxu0 0.0
    %205 = vmatpush2.msra.mxu0 %v132
    %206 = vmatprep.subr.mxu0 0.0
    %207 = vmatpush2.msra.mxu0 %v131
    %208 = vmatprep.subr.mxu0 0.0
    %209 = vmatpush2.msra.mxu0 %v130
    %210 = vmatprep.mubr.f32.mxu0 %v51
    %211 = vmatmul.mubr.f32.gmra.mxu0 %v50
    %v212 = vpop.f32.mrf.mxu0
    %v213 = vadd.f32 0.0, %v212
    %v214 = vpop.f32.mrf.mxu0
    %215 = vmatprep.mubr.f32.mxu0 %v53
    %216 = vmatmul.mubr.f32.gmra.mxu0 %v52
    %v217 = vpop.f32.mrf.mxu0
    %v218 = vadd.f32 0.0, %v217
    %v219 = vpop.f32.mrf.mxu0
    %220 = vmatprep.mubr.f32.mxu0 %v55
    %221 = vmatmul.mubr.f32.gmra.mxu0 %v54
    %v222 = vpop.f32.mrf.mxu0
    %v223 = vadd.f32 0.0, %v222
    %v224 = vpop.f32.mrf.mxu0
    %225 = vmatprep.mubr.f32.mxu0 %v57
    %226 = vmatmul.mubr.f32.gmra.mxu0 %v56
    %v227 = vpop.f32.mrf.mxu0
    %v228 = vadd.f32 0.0, %v227
    %v229 = vpop.f32.mrf.mxu0
    %230 = vmatprep.mubr.f32.mxu0 %v59
    %231 = vmatmul.mubr.f32.gmra.mxu0 %v58
    %v232 = vpop.f32.mrf.mxu0
    %v233 = vadd.f32 0.0, %v232
    %v234 = vpop.f32.mrf.mxu0
    %235 = vmatprep.mubr.f32.mxu0 %v61
    %236 = vmatmul.mubr.f32.gmra.mxu0 %v60
    %v237 = vpop.f32.mrf.mxu0
    %v238 = vadd.f32 0.0, %v237
    %v239 = vpop.f32.mrf.mxu0
    %240 = vmatprep.mubr.f32.mxu0 %v63
    %241 = vmatmul.mubr.f32.gmra.mxu0 %v62
    %v242 = vpop.f32.mrf.mxu0
    %v243 = vadd.f32 0.0, %v242
    %v244 = vpop.f32.mrf.mxu0
    %245 = vmatprep.mubr.f32.mxu0 %v65
    %246 = vmatmul.mubr.f32.gmra.mxu0 %v64
    %v247 = vpop.f32.mrf.mxu0
    %v248 = vadd.f32 0.0, %v247
    %v249 = vpop.f32.mrf.mxu0
    %250 = vmatprep.mubr.f32.mxu0 %v67
    %251 = vmatmul.mubr.f32.gmra.mxu0 %v66
    %v252 = vpop.f32.mrf.mxu0
    %v253 = vadd.f32 0.0, %v252
    %v254 = vpop.f32.mrf.mxu0
    %255 = vmatprep.mubr.f32.mxu0 %v69
    %256 = vmatmul.mubr.f32.gmra.mxu0 %v68
    %v257 = vpop.f32.mrf.mxu0
    %v258 = vadd.f32 0.0, %v257
    %v259 = vpop.f32.mrf.mxu0
    %260 = vmatprep.mubr.f32.mxu0 %v71
    %261 = vmatmul.mubr.f32.gmra.mxu0 %v70
    %v262 = vpop.f32.mrf.mxu0
    %v263 = vadd.f32 0.0, %v262
    %v264 = vpop.f32.mrf.mxu0
    %265 = vmatprep.mubr.f32.mxu0 %v73
    %266 = vmatmul.mubr.f32.gmra.mxu0 %v72
    %v267 = vpop.f32.mrf.mxu0
    %v268 = vadd.f32 0.0, %v267
    %v269 = vpop.f32.mrf.mxu0
    %270 = vmatprep.mubr.f32.mxu0 %v75
    %271 = vmatmul.mubr.f32.gmra.mxu0 %v74
    %v272 = vpop.f32.mrf.mxu0
    %v273 = vadd.f32 0.0, %v272
    %v274 = vpop.f32.mrf.mxu0
    %275 = vmatprep.mubr.f32.mxu0 %v77
    %276 = vmatmul.mubr.f32.gmra.mxu0 %v76
    %v277 = vpop.f32.mrf.mxu0
    %v278 = vadd.f32 0.0, %v277
    %v279 = vpop.f32.mrf.mxu0
    %280 = vmatprep.mubr.f32.mxu0 %v79
    %281 = vmatmul.mubr.f32.gmra.mxu0 %v78
    %v282 = vpop.f32.mrf.mxu0
    %v283 = vadd.f32 0.0, %v282
    %v284 = vpop.f32.mrf.mxu0
    %285 = vmatprep.mubr.f32.mxu0 %v81
    %286 = vmatmul.mubr.f32.gmra.mxu0 %v80
    %v287 = vpop.f32.mrf.mxu0
    %v288 = vadd.f32 0.0, %v287
    %v289 = vpop.f32.mrf.mxu0
    %290 = vmatprep.mubr.f32.mxu0 %v83
    %291 = vmatmul.mubr.f32.gmra.mxu0 %v82
    %v292 = vpop.f32.mrf.mxu0
    %v293 = vadd.f32 0.0, %v292
    %v294 = vpop.f32.mrf.mxu0
    %295 = vmatprep.mubr.f32.mxu0 %v85
    %296 = vmatmul.mubr.f32.gmra.mxu0 %v84
    %v297 = vpop.f32.mrf.mxu0
    %v298 = vadd.f32 0.0, %v297
    %v299 = vpop.f32.mrf.mxu0
    %300 = vmatprep.mubr.f32.mxu0 %v87
    %301 = vmatmul.mubr.f32.gmra.mxu0 %v86
    %v302 = vpop.f32.mrf.mxu0
    %v303 = vadd.f32 0.0, %v302
    %v304 = vpop.f32.mrf.mxu0
    %305 = vmatprep.mubr.f32.mxu0 %v89
    %306 = vmatmul.mubr.f32.gmra.mxu0 %v88
    %v307 = vpop.f32.mrf.mxu0
    %v308 = vadd.f32 0.0, %v307
    %v309 = vpop.f32.mrf.mxu0
    %310 = vmatprep.mubr.f32.mxu0 %v91
    %311 = vmatmul.mubr.f32.gmra.mxu0 %v90
    %v312 = vpop.f32.mrf.mxu0
    %v313 = vadd.f32 0.0, %v312
    %v314 = vpop.f32.mrf.mxu0
    %315 = vmatprep.mubr.f32.mxu0 %v93
    %316 = vmatmul.mubr.f32.gmra.mxu0 %v92
    %v317 = vpop.f32.mrf.mxu0
    %v318 = vadd.f32 0.0, %v317
    %v319 = vpop.f32.mrf.mxu0
    %320 = vmatprep.mubr.f32.mxu0 %v95
    %321 = vmatmul.mubr.f32.gmra.mxu0 %v94
    %v322 = vpop.f32.mrf.mxu0
    %v323 = vadd.f32 0.0, %v322
    %v324 = vpop.f32.mrf.mxu0
    %325 = vmatprep.mubr.f32.mxu0 %v97
    %326 = vmatmul.mubr.f32.gmra.mxu0 %v96
    %v327 = vpop.f32.mrf.mxu0
    %v328 = vadd.f32 0.0, %v327
    %v329 = vpop.f32.mrf.mxu0
    %330 = vmatprep.mubr.f32.mxu0 %v99
    %331 = vmatmul.mubr.f32.gmra.mxu0 %v98
    %v332 = vpop.f32.mrf.mxu0
    %v333 = vadd.f32 0.0, %v332
    %v334 = vpop.f32.mrf.mxu0
    %335 = vmatprep.mubr.f32.mxu0 %v101
    %336 = vmatmul.mubr.f32.gmra.mxu0 %v100
    %v337 = vpop.f32.mrf.mxu0
    %v338 = vadd.f32 0.0, %v337
    %v339 = vpop.f32.mrf.mxu0
    %340 = vmatprep.mubr.f32.mxu0 %v103
    %341 = vmatmul.mubr.f32.gmra.mxu0 %v102
    %v342 = vpop.f32.mrf.mxu0
    %v343 = vadd.f32 0.0, %v342
    %v344 = vpop.f32.mrf.mxu0
    %345 = vmatprep.mubr.f32.mxu0 %v105
    %346 = vmatmul.mubr.f32.gmra.mxu0 %v104
    %v347 = vpop.f32.mrf.mxu0
    %v348 = vadd.f32 0.0, %v347
    %v349 = vpop.f32.mrf.mxu0
    %350 = vmatprep.mubr.f32.mxu0 %v107
    %351 = vmatmul.mubr.f32.gmra.mxu0 %v106
    %v352 = vpop.f32.mrf.mxu0
    %v353 = vadd.f32 0.0, %v352
    %v354 = vpop.f32.mrf.mxu0
    %355 = vmatprep.mubr.f32.mxu0 %v109
    %356 = vmatmul.mubr.f32.gmra.mxu0 %v108
    %v357 = vpop.f32.mrf.mxu0
    %v358 = vadd.f32 0.0, %v357
    %v359 = vpop.f32.mrf.mxu0
    %360 = vmatprep.mubr.f32.mxu0 %v111
    %361 = vmatmul.mubr.f32.gmra.mxu0 %v110
    %v362 = vpop.f32.mrf.mxu0
    %v363 = vadd.f32 0.0, %v362
    %v364 = vpop.f32.mrf.mxu0
    %365 = vmatprep.mubr.f32.mxu0 %v113
    %366 = vmatmul.mubr.f32.gmra.mxu0 %v112
    %v367 = vpop.f32.mrf.mxu0
    %v368 = vadd.f32 0.0, %v367
    %v369 = vpop.f32.mrf.mxu0
    %370 = vdwg.mxu0
    %v371 = vmax.f32 %v213, 0.0
    %v372 = vmax.f32 %v218, 0.0
    %v373 = vmax.f32 %v223, 0.0
    %v374 = vmax.f32 %v228, 0.0
    %v375 = vmax.f32 %v233, 0.0
    %v376 = vmax.f32 %v238, 0.0
    %v377 = vmax.f32 %v243, 0.0
    %v378 = vmax.f32 %v248, 0.0
    %v379 = vmax.f32 %v253, 0.0
    %v380 = vmax.f32 %v258, 0.0
    %v381 = vmax.f32 %v263, 0.0
    %v382 = vmax.f32 %v268, 0.0
    %v383 = vmax.f32 %v273, 0.0
    %v384 = vmax.f32 %v278, 0.0
    %v385 = vmax.f32 %v283, 0.0
    %v386 = vmax.f32 %v288, 0.0
    %v387 = vmax.f32 %v293, 0.0
    %v388 = vmax.f32 %v298, 0.0
    %v389 = vmax.f32 %v303, 0.0
    %v390 = vmax.f32 %v308, 0.0
    %v391 = vmax.f32 %v313, 0.0
    %v392 = vmax.f32 %v318, 0.0
    %v393 = vmax.f32 %v323, 0.0
    %v394 = vmax.f32 %v328, 0.0
    %v395 = vmax.f32 %v333, 0.0
    %v396 = vmax.f32 %v338, 0.0
    %v397 = vmax.f32 %v343, 0.0
    %v398 = vmax.f32 %v348, 0.0
    %v399 = vmax.f32 %v353, 0.0
    %v400 = vmax.f32 %v358, 0.0
    %v401 = vmax.f32 %v363, 0.0
    %v402 = vmax.f32 %v368, 0.0
    %v403 = vand.u32 2147483647, %v213
    %v404 = vand.u32 2147483647, %v218
    %v405 = vand.u32 2147483647, %v223
    %v406 = vand.u32 2147483647, %v228
    %v407 = vand.u32 2147483647, %v233
    %v408 = vand.u32 2147483647, %v238
    %v409 = vand.u32 2147483647, %v243
    %v410 = vand.u32 2147483647, %v248
    %v411 = vand.u32 2147483647, %v253
    %v412 = vand.u32 2147483647, %v258
    %v413 = vand.u32 2147483647, %v263
    %v414 = vand.u32 2147483647, %v268
    %v415 = vand.u32 2147483647, %v273
    %v416 = vand.u32 2147483647, %v278
    %v417 = vand.u32 2147483647, %v283
    %v418 = vand.u32 2147483647, %v288
    %v419 = vand.u32 2147483647, %v293
    %v420 = vand.u32 2147483647, %v298
    %v421 = vand.u32 2147483647, %v303
    %v422 = vand.u32 2147483647, %v308
    %v423 = vand.u32 2147483647, %v313
    %v424 = vand.u32 2147483647, %v318
    %v425 = vand.u32 2147483647, %v323
    %v426 = vand.u32 2147483647, %v328
    %v427 = vand.u32 2147483647, %v333
    %v428 = vand.u32 2147483647, %v338
    %v429 = vand.u32 2147483647, %v343
    %v430 = vand.u32 2147483647, %v348
    %v431 = vand.u32 2147483647, %v353
    %v432 = vand.u32 2147483647, %v358
    %v433 = vand.u32 2147483647, %v363
    %v434 = vand.u32 2147483647, %v368
    %v435 = vsub.f32 0.0, %v403
    %v436 = vsub.f32 0.0, %v404
    %v437 = vsub.f32 0.0, %v405
    %v438 = vsub.f32 0.0, %v406
    %v439 = vsub.f32 0.0, %v407
    %v440 = vsub.f32 0.0, %v408
    %v441 = vsub.f32 0.0, %v409
    %v442 = vsub.f32 0.0, %v410
    %v443 = vsub.f32 0.0, %v411
    %v444 = vsub.f32 0.0, %v412
    %v445 = vsub.f32 0.0, %v413
    %v446 = vsub.f32 0.0, %v414
    %v447 = vsub.f32 0.0, %v415
    %v448 = vsub.f32 0.0, %v416
    %v449 = vsub.f32 0.0, %v417
    %v450 = vsub.f32 0.0, %v418
    %v451 = vsub.f32 0.0, %v419
    %v452 = vsub.f32 0.0, %v420
    %v453 = vsub.f32 0.0, %v421
    %v454 = vsub.f32 0.0, %v422
    %v455 = vsub.f32 0.0, %v423
    %v456 = vsub.f32 0.0, %v424
    %v457 = vsub.f32 0.0, %v425
    %v458 = vsub.f32 0.0, %v426
    %v459 = vsub.f32 0.0, %v427
    %v460 = vsub.f32 0.0, %v428
    %v461 = vsub.f32 0.0, %v429
    %v462 = vsub.f32 0.0, %v430
    %v463 = vsub.f32 0.0, %v431
    %v464 = vsub.f32 0.0, %v432
    %v465 = vsub.f32 0.0, %v433
    %v466 = vsub.f32 0.0, %v434
    %v467 = vmul.f32 %v435, 1.442695
    %v468 = vpow.pop %v467
    %v469 = vmul.f32 %v436, 1.442695
    %v470 = vpow.pop %v469
    %v471 = vmul.f32 %v437, 1.442695
    %v472 = vpow.pop %v471
    %v473 = vmul.f32 %v438, 1.442695
    %v474 = vpow.pop %v473
    %v475 = vmul.f32 %v439, 1.442695
    %v476 = vpow.pop %v475
    %v477 = vmul.f32 %v440, 1.442695
    %v478 = vpow.pop %v477
    %v479 = vmul.f32 %v441, 1.442695
    %v480 = vpow.pop %v479
    %v481 = vmul.f32 %v442, 1.442695
    %v482 = vpow.pop %v481
    %v483 = vmul.f32 %v443, 1.442695
    %v484 = vpow.pop %v483
    %v485 = vmul.f32 %v444, 1.442695
    %v486 = vpow.pop %v485
    %v487 = vmul.f32 %v445, 1.442695
    %v488 = vpow.pop %v487
    %v489 = vmul.f32 %v446, 1.442695
    %v490 = vpow.pop %v489
    %v491 = vmul.f32 %v447, 1.442695
    %v492 = vpow.pop %v491
    %v493 = vmul.f32 %v448, 1.442695
    %v494 = vpow.pop %v493
    %v495 = vmul.f32 %v449, 1.442695
    %v496 = vpow.pop %v495
    %v497 = vmul.f32 %v450, 1.442695
    %v498 = vpow.pop %v497
    %v499 = vmul.f32 %v451, 1.442695
    %v500 = vpow.pop %v499
    %v501 = vmul.f32 %v452, 1.442695
    %v502 = vpow.pop %v501
    %v503 = vmul.f32 %v453, 1.442695
    %v504 = vpow.pop %v503
    %v505 = vmul.f32 %v454, 1.442695
    %v506 = vpow.pop %v505
    %v507 = vmul.f32 %v455, 1.442695
    %v508 = vpow.pop %v507
    %v509 = vmul.f32 %v456, 1.442695
    %v510 = vpow.pop %v509
    %v511 = vmul.f32 %v457, 1.442695
    %v512 = vpow.pop %v511
    %v513 = vmul.f32 %v458, 1.442695
    %v514 = vpow.pop %v513
    %v515 = vmul.f32 %v459, 1.442695
    %v516 = vpow.pop %v515
    %v517 = vmul.f32 %v460, 1.442695
    %v518 = vpow.pop %v517
    %v519 = vmul.f32 %v461, 1.442695
    %v520 = vpow.pop %v519
    %v521 = vmul.f32 %v462, 1.442695
    %v522 = vpow.pop %v521
    %v523 = vmul.f32 %v463, 1.442695
    %v524 = vpow.pop %v523
    %v525 = vmul.f32 %v464, 1.442695
    %v526 = vpow.pop %v525
    %v527 = vmul.f32 %v465, 1.442695
    %v528 = vpow.pop %v527
    %v529 = vmul.f32 %v466, 1.442695
    %v530 = vpow.pop %v529
    %v531 = vadd.f32 %v468, 1.0
    %v532 = vlog2.pop %v531
    %v533 = vmul.f32 %v532, 0.6931472
    %v534 = vmul.f32 -0.5, %v468
    %v535 = vadd.f32 %v534, 1.0
    %v536 = vmul.f32 %v535, %v468
    %v537 = vand.u32 2147483647, %v468
    %vm538 = vcmp.lt.f32.partialorder %v537, 0.0004427343
    %v539 = vsel %vm538, %v536, %v533
    %v540 = vadd.f32 %v470, 1.0
    %v541 = vlog2.pop %v540
    %v542 = vmul.f32 %v541, 0.6931472
    %v543 = vmul.f32 -0.5, %v470
    %v544 = vadd.f32 %v543, 1.0
    %v545 = vmul.f32 %v544, %v470
    %v546 = vand.u32 2147483647, %v470
    %vm547 = vcmp.lt.f32.partialorder %v546, 0.0004427343
    %v548 = vsel %vm547, %v545, %v542
    %v549 = vadd.f32 %v472, 1.0
    %v550 = vlog2.pop %v549
    %v551 = vmul.f32 %v550, 0.6931472
    %v552 = vmul.f32 -0.5, %v472
    %v553 = vadd.f32 %v552, 1.0
    %v554 = vmul.f32 %v553, %v472
    %v555 = vand.u32 2147483647, %v472
    %vm556 = vcmp.lt.f32.partialorder %v555, 0.0004427343
    %v557 = vsel %vm556, %v554, %v551
    %v558 = vadd.f32 %v474, 1.0
    %v559 = vlog2.pop %v558
    %v560 = vmul.f32 %v559, 0.6931472
    %v561 = vmul.f32 -0.5, %v474
    %v562 = vadd.f32 %v561, 1.0
    %v563 = vmul.f32 %v562, %v474
    %v564 = vand.u32 2147483647, %v474
    %vm565 = vcmp.lt.f32.partialorder %v564, 0.0004427343
    %v566 = vsel %vm565, %v563, %v560
    %v567 = vadd.f32 %v476, 1.0
    %v568 = vlog2.pop %v567
    %v569 = vmul.f32 %v568, 0.6931472
    %v570 = vmul.f32 -0.5, %v476
    %v571 = vadd.f32 %v570, 1.0
    %v572 = vmul.f32 %v571, %v476
    %v573 = vand.u32 2147483647, %v476
    %vm574 = vcmp.lt.f32.partialorder %v573, 0.0004427343
    %v575 = vsel %vm574, %v572, %v569
    %v576 = vadd.f32 %v478, 1.0
    %v577 = vlog2.pop %v576
    %v578 = vmul.f32 %v577, 0.6931472
    %v579 = vmul.f32 -0.5, %v478
    %v580 = vadd.f32 %v579, 1.0
    %v581 = vmul.f32 %v580, %v478
    %v582 = vand.u32 2147483647, %v478
    %vm583 = vcmp.lt.f32.partialorder %v582, 0.0004427343
    %v584 = vsel %vm583, %v581, %v578
    %v585 = vadd.f32 %v480, 1.0
    %v586 = vlog2.pop %v585
    %v587 = vmul.f32 %v586, 0.6931472
    %v588 = vmul.f32 -0.5, %v480
    %v589 = vadd.f32 %v588, 1.0
    %v590 = vmul.f32 %v589, %v480
    %v591 = vand.u32 2147483647, %v480
    %vm592 = vcmp.lt.f32.partialorder %v591, 0.0004427343
    %v593 = vsel %vm592, %v590, %v587
    %v594 = vadd.f32 %v482, 1.0
    %v595 = vlog2.pop %v594
    %v596 = vmul.f32 %v595, 0.6931472
    %v597 = vmul.f32 -0.5, %v482
    %v598 = vadd.f32 %v597, 1.0
    %v599 = vmul.f32 %v598, %v482
    %v600 = vand.u32 2147483647, %v482
    %vm601 = vcmp.lt.f32.partialorder %v600, 0.0004427343
    %v602 = vsel %vm601, %v599, %v596
    %v603 = vadd.f32 %v484, 1.0
    %v604 = vlog2.pop %v603
    %v605 = vmul.f32 %v604, 0.6931472
    %v606 = vmul.f32 -0.5, %v484
    %v607 = vadd.f32 %v606, 1.0
    %v608 = vmul.f32 %v607, %v484
    %v609 = vand.u32 2147483647, %v484
    %vm610 = vcmp.lt.f32.partialorder %v609, 0.0004427343
    %v611 = vsel %vm610, %v608, %v605
    %v612 = vadd.f32 %v486, 1.0
    %v613 = vlog2.pop %v612
    %v614 = vmul.f32 %v613, 0.6931472
    %v615 = vmul.f32 -0.5, %v486
    %v616 = vadd.f32 %v615, 1.0
    %v617 = vmul.f32 %v616, %v486
    %v618 = vand.u32 2147483647, %v486
    %vm619 = vcmp.lt.f32.partialorder %v618, 0.0004427343
    %v620 = vsel %vm619, %v617, %v614
    %v621 = vadd.f32 %v488, 1.0
    %v622 = vlog2.pop %v621
    %v623 = vmul.f32 %v622, 0.6931472
    %v624 = vmul.f32 -0.5, %v488
    %v625 = vadd.f32 %v624, 1.0
    %v626 = vmul.f32 %v625, %v488
    %v627 = vand.u32 2147483647, %v488
    %vm628 = vcmp.lt.f32.partialorder %v627, 0.0004427343
    %v629 = vsel %vm628, %v626, %v623
    %v630 = vadd.f32 %v490, 1.0
    %v631 = vlog2.pop %v630
    %v632 = vmul.f32 %v631, 0.6931472
    %v633 = vmul.f32 -0.5, %v490
    %v634 = vadd.f32 %v633, 1.0
    %v635 = vmul.f32 %v634, %v490
    %v636 = vand.u32 2147483647, %v490
    %vm637 = vcmp.lt.f32.partialorder %v636, 0.0004427343
    %v638 = vsel %vm637, %v635, %v632
    %v639 = vadd.f32 %v492, 1.0
    %v640 = vlog2.pop %v639
    %v641 = vmul.f32 %v640, 0.6931472
    %v642 = vmul.f32 -0.5, %v492
    %v643 = vadd.f32 %v642, 1.0
    %v644 = vmul.f32 %v643, %v492
    %v645 = vand.u32 2147483647, %v492
    %vm646 = vcmp.lt.f32.partialorder %v645, 0.0004427343
    %v647 = vsel %vm646, %v644, %v641
    %v648 = vadd.f32 %v494, 1.0
    %v649 = vlog2.pop %v648
    %v650 = vmul.f32 %v649, 0.6931472
    %v651 = vmul.f32 -0.5, %v494
    %v652 = vadd.f32 %v651, 1.0
    %v653 = vmul.f32 %v652, %v494
    %v654 = vand.u32 2147483647, %v494
    %vm655 = vcmp.lt.f32.partialorder %v654, 0.0004427343
    %v656 = vsel %vm655, %v653, %v650
    %v657 = vadd.f32 %v496, 1.0
    %v658 = vlog2.pop %v657
    %v659 = vmul.f32 %v658, 0.6931472
    %v660 = vmul.f32 -0.5, %v496
    %v661 = vadd.f32 %v660, 1.0
    %v662 = vmul.f32 %v661, %v496
    %v663 = vand.u32 2147483647, %v496
    %vm664 = vcmp.lt.f32.partialorder %v663, 0.0004427343
    %v665 = vsel %vm664, %v662, %v659
    %v666 = vadd.f32 %v498, 1.0
    %v667 = vlog2.pop %v666
    %v668 = vmul.f32 %v667, 0.6931472
    %v669 = vmul.f32 -0.5, %v498
    %v670 = vadd.f32 %v669, 1.0
    %v671 = vmul.f32 %v670, %v498
    %v672 = vand.u32 2147483647, %v498
    %vm673 = vcmp.lt.f32.partialorder %v672, 0.0004427343
    %v674 = vsel %vm673, %v671, %v668
    %v675 = vadd.f32 %v500, 1.0
    %v676 = vlog2.pop %v675
    %v677 = vmul.f32 %v676, 0.6931472
    %v678 = vmul.f32 -0.5, %v500
    %v679 = vadd.f32 %v678, 1.0
    %v680 = vmul.f32 %v679, %v500
    %v681 = vand.u32 2147483647, %v500
    %vm682 = vcmp.lt.f32.partialorder %v681, 0.0004427343
    %v683 = vsel %vm682, %v680, %v677
    %v684 = vadd.f32 %v502, 1.0
    %v685 = vlog2.pop %v684
    %v686 = vmul.f32 %v685, 0.6931472
    %v687 = vmul.f32 -0.5, %v502
    %v688 = vadd.f32 %v687, 1.0
    %v689 = vmul.f32 %v688, %v502
    %v690 = vand.u32 2147483647, %v502
    %vm691 = vcmp.lt.f32.partialorder %v690, 0.0004427343
    %v692 = vsel %vm691, %v689, %v686
    %v693 = vadd.f32 %v504, 1.0
    %v694 = vlog2.pop %v693
    %v695 = vmul.f32 %v694, 0.6931472
    %v696 = vmul.f32 -0.5, %v504
    %v697 = vadd.f32 %v696, 1.0
    %v698 = vmul.f32 %v697, %v504
    %v699 = vand.u32 2147483647, %v504
    %vm700 = vcmp.lt.f32.partialorder %v699, 0.0004427343
    %v701 = vsel %vm700, %v698, %v695
    %v702 = vadd.f32 %v506, 1.0
    %v703 = vlog2.pop %v702
    %v704 = vmul.f32 %v703, 0.6931472
    %v705 = vmul.f32 -0.5, %v506
    %v706 = vadd.f32 %v705, 1.0
    %v707 = vmul.f32 %v706, %v506
    %v708 = vand.u32 2147483647, %v506
    %vm709 = vcmp.lt.f32.partialorder %v708, 0.0004427343
    %v710 = vsel %vm709, %v707, %v704
    %v711 = vadd.f32 %v508, 1.0
    %v712 = vlog2.pop %v711
    %v713 = vmul.f32 %v712, 0.6931472
    %v714 = vmul.f32 -0.5, %v508
    %v715 = vadd.f32 %v714, 1.0
    %v716 = vmul.f32 %v715, %v508
    %v717 = vand.u32 2147483647, %v508
    %vm718 = vcmp.lt.f32.partialorder %v717, 0.0004427343
    %v719 = vsel %vm718, %v716, %v713
    %v720 = vadd.f32 %v510, 1.0
    %v721 = vlog2.pop %v720
    %v722 = vmul.f32 %v721, 0.6931472
    %v723 = vmul.f32 -0.5, %v510
    %v724 = vadd.f32 %v723, 1.0
    %v725 = vmul.f32 %v724, %v510
    %v726 = vand.u32 2147483647, %v510
    %vm727 = vcmp.lt.f32.partialorder %v726, 0.0004427343
    %v728 = vsel %vm727, %v725, %v722
    %v729 = vadd.f32 %v512, 1.0
    %v730 = vlog2.pop %v729
    %v731 = vmul.f32 %v730, 0.6931472
    %v732 = vmul.f32 -0.5, %v512
    %v733 = vadd.f32 %v732, 1.0
    %v734 = vmul.f32 %v733, %v512
    %v735 = vand.u32 2147483647, %v512
    %vm736 = vcmp.lt.f32.partialorder %v735, 0.0004427343
    %v737 = vsel %vm736, %v734, %v731
    %v738 = vadd.f32 %v514, 1.0
    %v739 = vlog2.pop %v738
    %v740 = vmul.f32 %v739, 0.6931472
    %v741 = vmul.f32 -0.5, %v514
    %v742 = vadd.f32 %v741, 1.0
    %v743 = vmul.f32 %v742, %v514
    %v744 = vand.u32 2147483647, %v514
    %vm745 = vcmp.lt.f32.partialorder %v744, 0.0004427343
    %v746 = vsel %vm745, %v743, %v740
    %v747 = vadd.f32 %v516, 1.0
    %v748 = vlog2.pop %v747
    %v749 = vmul.f32 %v748, 0.6931472
    %v750 = vmul.f32 -0.5, %v516
    %v751 = vadd.f32 %v750, 1.0
    %v752 = vmul.f32 %v751, %v516
    %v753 = vand.u32 2147483647, %v516
    %vm754 = vcmp.lt.f32.partialorder %v753, 0.0004427343
    %v755 = vsel %vm754, %v752, %v749
    %v756 = vadd.f32 %v518, 1.0
    %v757 = vlog2.pop %v756
    %v758 = vmul.f32 %v757, 0.6931472
    %v759 = vmul.f32 -0.5, %v518
    %v760 = vadd.f32 %v759, 1.0
    %v761 = vmul.f32 %v760, %v518
    %v762 = vand.u32 2147483647, %v518
    %vm763 = vcmp.lt.f32.partialorder %v762, 0.0004427343
    %v764 = vsel %vm763, %v761, %v758
    %v765 = vadd.f32 %v520, 1.0
    %v766 = vlog2.pop %v765
    %v767 = vmul.f32 %v766, 0.6931472
    %v768 = vmul.f32 -0.5, %v520
    %v769 = vadd.f32 %v768, 1.0
    %v770 = vmul.f32 %v769, %v520
    %v771 = vand.u32 2147483647, %v520
    %vm772 = vcmp.lt.f32.partialorder %v771, 0.0004427343
    %v773 = vsel %vm772, %v770, %v767
    %v774 = vadd.f32 %v522, 1.0
    %v775 = vlog2.pop %v774
    %v776 = vmul.f32 %v775, 0.6931472
    %v777 = vmul.f32 -0.5, %v522
    %v778 = vadd.f32 %v777, 1.0
    %v779 = vmul.f32 %v778, %v522
    %v780 = vand.u32 2147483647, %v522
    %vm781 = vcmp.lt.f32.partialorder %v780, 0.0004427343
    %v782 = vsel %vm781, %v779, %v776
    %v783 = vadd.f32 %v524, 1.0
    %v784 = vlog2.pop %v783
    %v785 = vmul.f32 %v784, 0.6931472
    %v786 = vmul.f32 -0.5, %v524
    %v787 = vadd.f32 %v786, 1.0
    %v788 = vmul.f32 %v787, %v524
    %v789 = vand.u32 2147483647, %v524
    %vm790 = vcmp.lt.f32.partialorder %v789, 0.0004427343
    %v791 = vsel %vm790, %v788, %v785
    %v792 = vadd.f32 %v526, 1.0
    %v793 = vlog2.pop %v792
    %v794 = vmul.f32 %v793, 0.6931472
    %v795 = vmul.f32 -0.5, %v526
    %v796 = vadd.f32 %v795, 1.0
    %v797 = vmul.f32 %v796, %v526
    %v798 = vand.u32 2147483647, %v526
    %vm799 = vcmp.lt.f32.partialorder %v798, 0.0004427343
    %v800 = vsel %vm799, %v797, %v794
    %v801 = vadd.f32 %v528, 1.0
    %v802 = vlog2.pop %v801
    %v803 = vmul.f32 %v802, 0.6931472
    %v804 = vmul.f32 -0.5, %v528
    %v805 = vadd.f32 %v804, 1.0
    %v806 = vmul.f32 %v805, %v528
    %v807 = vand.u32 2147483647, %v528
    %vm808 = vcmp.lt.f32.partialorder %v807, 0.0004427343
    %v809 = vsel %vm808, %v806, %v803
    %v810 = vadd.f32 %v530, 1.0
    %v811 = vlog2.pop %v810
    %v812 = vmul.f32 %v811, 0.6931472
    %v813 = vmul.f32 -0.5, %v530
    %v814 = vadd.f32 %v813, 1.0
    %v815 = vmul.f32 %v814, %v530
    %v816 = vand.u32 2147483647, %v530
    %vm817 = vcmp.lt.f32.partialorder %v816, 0.0004427343
    %v818 = vsel %vm817, %v815, %v812
    %v819 = vadd.f32 %v371, %v539
    %v820 = vadd.f32 %v372, %v548
    %v821 = vadd.f32 %v373, %v557
    %v822 = vadd.f32 %v374, %v566
    %v823 = vadd.f32 %v375, %v575
    %v824 = vadd.f32 %v376, %v584
    %v825 = vadd.f32 %v377, %v593
    %v826 = vadd.f32 %v378, %v602
    %v827 = vadd.f32 %v379, %v611
    %v828 = vadd.f32 %v380, %v620
    %v829 = vadd.f32 %v381, %v629
    %v830 = vadd.f32 %v382, %v638
    %v831 = vadd.f32 %v383, %v647
    %v832 = vadd.f32 %v384, %v656
    %v833 = vadd.f32 %v385, %v665
    %v834 = vadd.f32 %v386, %v674
    %v835 = vadd.f32 %v387, %v683
    %v836 = vadd.f32 %v388, %v692
    %v837 = vadd.f32 %v389, %v701
    %v838 = vadd.f32 %v390, %v710
    %v839 = vadd.f32 %v391, %v719
    %v840 = vadd.f32 %v392, %v728
    %v841 = vadd.f32 %v393, %v737
    %v842 = vadd.f32 %v394, %v746
    %v843 = vadd.f32 %v395, %v755
    %v844 = vadd.f32 %v396, %v764
    %v845 = vadd.f32 %v397, %v773
    %v846 = vadd.f32 %v398, %v782
    %v847 = vadd.f32 %v399, %v791
    %v848 = vadd.f32 %v400, %v800
    %v849 = vadd.f32 %v401, %v809
    %v850 = vadd.f32 %v402, %v818
    %v851 = vlaneseq
    %v852 = vand.u32 %v851, 127
    %v853 = vlaneseq
    %v854 = vshrl.u32 %v853, 7
    %v855 = vadd.s32 %v854, 8
    %v856 = vadd.s32 %v854, 16
    %v857 = vadd.s32 %v854, 24
    %v858 = vadd.s32 %v854, 32
    %v859 = vadd.s32 %v854, 40
    %v860 = vadd.s32 %v854, 48
    %v861 = vadd.s32 %v854, 56
    %v862 = vadd.s32 %v854, 64
    %v863 = vadd.s32 %v854, 72
    %v864 = vadd.s32 %v854, 80
    %v865 = vadd.s32 %v854, 88
    %v866 = vadd.s32 %v854, 96
    %v867 = vadd.s32 %v854, 104
    %v868 = vadd.s32 %v854, 112
    %v869 = vadd.s32 %v854, 120
    %v870 = vadd.s32 %v854, 128
    %v871 = vadd.s32 %v854, 136
    %v872 = vadd.s32 %v854, 144
    %v873 = vadd.s32 %v854, 152
    %v874 = vadd.s32 %v854, 160
    %v875 = vadd.s32 %v854, 168
    %v876 = vadd.s32 %v854, 176
    %v877 = vadd.s32 %v854, 184
    %v878 = vadd.s32 %v854, 192
    %v879 = vadd.s32 %v854, 200
    %v880 = vadd.s32 %v854, 208
    %v881 = vadd.s32 %v854, 216
    %v882 = vadd.s32 %v854, 224
    %v883 = vadd.s32 %v854, 232
    %v884 = vadd.s32 %v854, 240
    %v885 = vadd.s32 %v854, 248
    %s886 = smul.u32 0, 256
    %v887 = vstv %s886
    %v888 = vadd.s32 %v854, %v887
    %v889 = vadd.s32 %v855, %v887
    %v890 = vadd.s32 %v856, %v887
    %v891 = vadd.s32 %v857, %v887
    %v892 = vadd.s32 %v858, %v887
    %v893 = vadd.s32 %v859, %v887
    %v894 = vadd.s32 %v860, %v887
    %v895 = vadd.s32 %v861, %v887
    %v896 = vadd.s32 %v862, %v887
    %v897 = vadd.s32 %v863, %v887
    %v898 = vadd.s32 %v864, %v887
    %v899 = vadd.s32 %v865, %v887
    %v900 = vadd.s32 %v866, %v887
    %v901 = vadd.s32 %v867, %v887
    %v902 = vadd.s32 %v868, %v887
    %v903 = vadd.s32 %v869, %v887
    %v904 = vadd.s32 %v870, %v887
    %v905 = vadd.s32 %v871, %v887
    %v906 = vadd.s32 %v872, %v887
    %v907 = vadd.s32 %v873, %v887
    %v908 = vadd.s32 %v874, %v887
    %v909 = vadd.s32 %v875, %v887
    %v910 = vadd.s32 %v876, %v887
    %v911 = vadd.s32 %v877, %v887
    %v912 = vadd.s32 %v878, %v887
    %v913 = vadd.s32 %v879, %v887
    %v914 = vadd.s32 %v880, %v887
    %v915 = vadd.s32 %v881, %v887
    %v916 = vadd.s32 %v882, %v887
    %v917 = vadd.s32 %v883, %v887
    %v918 = vadd.s32 %v884, %v887
    %v919 = vadd.s32 %v885, %v887
    %vm920 = vcmp.lt.s32.totalorder %v852, 2
    %vm921 = vcmp.lt.s32.totalorder %v888, 200
    %vm922 = vcmp.lt.s32.totalorder %v889, 200
    %vm923 = vcmp.lt.s32.totalorder %v890, 200
    %vm924 = vcmp.lt.s32.totalorder %v891, 200
    %vm925 = vcmp.lt.s32.totalorder %v892, 200
    %vm926 = vcmp.lt.s32.totalorder %v893, 200
    %vm927 = vcmp.lt.s32.totalorder %v894, 200
    %vm928 = vcmp.lt.s32.totalorder %v895, 200
    %vm929 = vcmp.lt.s32.totalorder %v896, 200
    %vm930 = vcmp.lt.s32.totalorder %v897, 200
    %vm931 = vcmp.lt.s32.totalorder %v898, 200
    %vm932 = vcmp.lt.s32.totalorder %v899, 200
    %vm933 = vcmp.lt.s32.totalorder %v900, 200
    %vm934 = vcmp.lt.s32.totalorder %v901, 200
    %vm935 = vcmp.lt.s32.totalorder %v902, 200
    %vm936 = vcmp.lt.s32.totalorder %v903, 200
    %vm937 = vcmp.lt.s32.totalorder %v904, 200
    %vm938 = vcmp.lt.s32.totalorder %v905, 200
    %vm939 = vcmp.lt.s32.totalorder %v906, 200
    %vm940 = vcmp.lt.s32.totalorder %v907, 200
    %vm941 = vcmp.lt.s32.totalorder %v908, 200
    %vm942 = vcmp.lt.s32.totalorder %v909, 200
    %vm943 = vcmp.lt.s32.totalorder %v910, 200
    %vm944 = vcmp.lt.s32.totalorder %v911, 200
    %vm945 = vcmp.lt.s32.totalorder %v912, 200
    %vm946 = vcmp.lt.s32.totalorder %v913, 200
    %vm947 = vcmp.lt.s32.totalorder %v914, 200
    %vm948 = vcmp.lt.s32.totalorder %v915, 200
    %vm949 = vcmp.lt.s32.totalorder %v916, 200
    %vm950 = vcmp.lt.s32.totalorder %v917, 200
    %vm951 = vcmp.lt.s32.totalorder %v918, 200
    %vm952 = vcmp.lt.s32.totalorder %v919, 200
    %vm953 = vmand %vm920, %vm921
    %vm954 = vmand %vm920, %vm922
    %vm955 = vmand %vm920, %vm923
    %vm956 = vmand %vm920, %vm924
    %vm957 = vmand %vm920, %vm925
    %vm958 = vmand %vm920, %vm926
    %vm959 = vmand %vm920, %vm927
    %vm960 = vmand %vm920, %vm928
    %vm961 = vmand %vm920, %vm929
    %vm962 = vmand %vm920, %vm930
    %vm963 = vmand %vm920, %vm931
    %vm964 = vmand %vm920, %vm932
    %vm965 = vmand %vm920, %vm933
    %vm966 = vmand %vm920, %vm934
    %vm967 = vmand %vm920, %vm935
    %vm968 = vmand %vm920, %vm936
    %vm969 = vmand %vm920, %vm937
    %vm970 = vmand %vm920, %vm938
    %vm971 = vmand %vm920, %vm939
    %vm972 = vmand %vm920, %vm940
    %vm973 = vmand %vm920, %vm941
    %vm974 = vmand %vm920, %vm942
    %vm975 = vmand %vm920, %vm943
    %vm976 = vmand %vm920, %vm944
    %vm977 = vmand %vm920, %vm945
    %vm978 = vmand %vm920, %vm946
    %vm979 = vmand %vm920, %vm947
    %vm980 = vmand %vm920, %vm948
    %vm981 = vmand %vm920, %vm949
    %vm982 = vmand %vm920, %vm950
    %vm983 = vmand %vm920, %vm951
    %vm984 = vmand %vm920, %vm952
    %v985 = vsel %vm953, 1, 0
    %v986 = vsel %vm954, 1, 0
    %v987 = vsel %vm955, 1, 0
    %v988 = vsel %vm956, 1, 0
    %v989 = vsel %vm957, 1, 0
    %v990 = vsel %vm958, 1, 0
    %v991 = vsel %vm959, 1, 0
    %v992 = vsel %vm960, 1, 0
    %v993 = vsel %vm961, 1, 0
    %v994 = vsel %vm962, 1, 0
    %v995 = vsel %vm963, 1, 0
    %v996 = vsel %vm964, 1, 0
    %v997 = vsel %vm965, 1, 0
    %v998 = vsel %vm966, 1, 0
    %v999 = vsel %vm967, 1, 0
    %v1000 = vsel %vm968, 1, 0
    %v1001 = vsel %vm969, 1, 0
    %v1002 = vsel %vm970, 1, 0
    %v1003 = vsel %vm971, 1, 0
    %v1004 = vsel %vm972, 1, 0
    %v1005 = vsel %vm973, 1, 0
    %v1006 = vsel %vm974, 1, 0
    %v1007 = vsel %vm975, 1, 0
    %v1008 = vsel %vm976, 1, 0
    %v1009 = vsel %vm977, 1, 0
    %v1010 = vsel %vm978, 1, 0
    %v1011 = vsel %vm979, 1, 0
    %v1012 = vsel %vm980, 1, 0
    %v1013 = vsel %vm981, 1, 0
    %v1014 = vsel %vm982, 1, 0
    %v1015 = vsel %vm983, 1, 0
    %v1016 = vsel %vm984, 1, 0
    %v1017 = vcvt.s32.f32 %v985
    %v1018 = vcvt.s32.f32 %v986
    %v1019 = vcvt.s32.f32 %v987
    %v1020 = vcvt.s32.f32 %v988
    %v1021 = vcvt.s32.f32 %v989
    %v1022 = vcvt.s32.f32 %v990
    %v1023 = vcvt.s32.f32 %v991
    %v1024 = vcvt.s32.f32 %v992
    %v1025 = vcvt.s32.f32 %v993
    %v1026 = vcvt.s32.f32 %v994
    %v1027 = vcvt.s32.f32 %v995
    %v1028 = vcvt.s32.f32 %v996
    %v1029 = vcvt.s32.f32 %v997
    %v1030 = vcvt.s32.f32 %v998
    %v1031 = vcvt.s32.f32 %v999
    %v1032 = vcvt.s32.f32 %v1000
    %v1033 = vcvt.s32.f32 %v1001
    %v1034 = vcvt.s32.f32 %v1002
    %v1035 = vcvt.s32.f32 %v1003
    %v1036 = vcvt.s32.f32 %v1004
    %v1037 = vcvt.s32.f32 %v1005
    %v1038 = vcvt.s32.f32 %v1006
    %v1039 = vcvt.s32.f32 %v1007
    %v1040 = vcvt.s32.f32 %v1008
    %v1041 = vcvt.s32.f32 %v1009
    %v1042 = vcvt.s32.f32 %v1010
    %v1043 = vcvt.s32.f32 %v1011
    %v1044 = vcvt.s32.f32 %v1012
    %v1045 = vcvt.s32.f32 %v1013
    %v1046 = vcvt.s32.f32 %v1014
    %v1047 = vcvt.s32.f32 %v1015
    %v1048 = vcvt.s32.f32 %v1016
    %v1049 = vmul.f32 %v819, %v1017
    %v1050 = vmul.f32 %v820, %v1018
    %v1051 = vmul.f32 %v821, %v1019
    %v1052 = vmul.f32 %v822, %v1020
    %v1053 = vmul.f32 %v823, %v1021
    %v1054 = vmul.f32 %v824, %v1022
    %v1055 = vmul.f32 %v825, %v1023
    %v1056 = vmul.f32 %v826, %v1024
    %v1057 = vmul.f32 %v827, %v1025
    %v1058 = vmul.f32 %v828, %v1026
    %v1059 = vmul.f32 %v829, %v1027
    %v1060 = vmul.f32 %v830, %v1028
    %v1061 = vmul.f32 %v831, %v1029
    %v1062 = vmul.f32 %v832, %v1030
    %v1063 = vmul.f32 %v833, %v1031
    %v1064 = vmul.f32 %v834, %v1032
    %v1065 = vmul.f32 %v835, %v1033
    %v1066 = vmul.f32 %v836, %v1034
    %v1067 = vmul.f32 %v837, %v1035
    %v1068 = vmul.f32 %v838, %v1036
    %v1069 = vmul.f32 %v839, %v1037
    %v1070 = vmul.f32 %v840, %v1038
    %v1071 = vmul.f32 %v841, %v1039
    %v1072 = vmul.f32 %v842, %v1040
    %v1073 = vmul.f32 %v843, %v1041
    %v1074 = vmul.f32 %v844, %v1042
    %v1075 = vmul.f32 %v845, %v1043
    %v1076 = vmul.f32 %v846, %v1044
    %v1077 = vmul.f32 %v847, %v1045
    %v1078 = vmul.f32 %v848, %v1046
    %v1079 = vmul.f32 %v849, %v1047
    %v1080 = vmul.f32 %v850, %v1048
    %v1081 = vadd.f32 %v1049, %v1050
    %v1082 = vadd.f32 %v1081, %v1051
    %v1083 = vadd.f32 %v1082, %v1052
    %v1084 = vadd.f32 %v1083, %v1053
    %v1085 = vadd.f32 %v1084, %v1054
    %v1086 = vadd.f32 %v1085, %v1055
    %v1087 = vadd.f32 %v1086, %v1056
    %v1088 = vadd.f32 %v1087, %v1057
    %v1089 = vadd.f32 %v1088, %v1058
    %v1090 = vadd.f32 %v1089, %v1059
    %v1091 = vadd.f32 %v1090, %v1060
    %v1092 = vadd.f32 %v1091, %v1061
    %v1093 = vadd.f32 %v1092, %v1062
    %v1094 = vadd.f32 %v1093, %v1063
    %v1095 = vadd.f32 %v1094, %v1064
    %v1096 = vadd.f32 %v1095, %v1065
    %v1097 = vadd.f32 %v1096, %v1066
    %v1098 = vadd.f32 %v1097, %v1067
    %v1099 = vadd.f32 %v1098, %v1068
    %v1100 = vadd.f32 %v1099, %v1069
    %v1101 = vadd.f32 %v1100, %v1070
    %v1102 = vadd.f32 %v1101, %v1071
    %v1103 = vadd.f32 %v1102, %v1072
    %v1104 = vadd.f32 %v1103, %v1073
    %v1105 = vadd.f32 %v1104, %v1074
    %v1106 = vadd.f32 %v1105, %v1075
    %v1107 = vadd.f32 %v1106, %v1076
    %v1108 = vadd.f32 %v1107, %v1077
    %v1109 = vadd.f32 %v1108, %v1078
    %v1110 = vadd.f32 %v1109, %v1079
    %v1111 = vadd.f32 %v1110, %v1080
    %1112 = vadd.xlane.f32.xlu0 %v1111
    %v1113 = vpop.xlane.xlu0 %1112
    %v1114 = vrot.slane %v1113, 4
    %v1115 = vadd.f32 %v1113, %v1114
    %v1116 = vrot.slane %v1115, 2
    %v1117 = vadd.f32 %v1115, %v1116
    %v1118 = vrot.slane %v1117, 1
    %v1119 = vadd.f32 %v1117, %v1118
    %s1120 = vtos %v1119
    %s1121 = sld [smem:[#allocation2]]
    %s1122 = smul.f32 %s1120, 0.005
    %s1123 = sadd.f32 %s1121, %s1122
    %s1124 = scalar_lea.smem [#allocation2], 0
    %1125 = sst [smem:[%s1124]] %s1123
    // Predicated region
    $region14: #{dgi_forward.7} parent=1 // pred_check
      _
    $region15: #{dgi_forward.7} parent=1 // pred_check_branch
      %1127 = sbr.rel (0) target = $region17
    $region16: #{dgi_forward.7} parent=1 // pred_region
      %s1129 = ssub.s32 16, 16
      %1130 = vsyncadd [#allocation3], %s1129
      %1133 = dma.smem_to_hbm [#allocation2], 16, %s2, [#allocation3]
    $region17: #{dgi_forward.7} parent=1 // pred_fallthru
      _
    // Predicated region
    $region18: #{dgi_forward.7} parent=1 // pred_check
      _
    $region19: #{dgi_forward.7} parent=1 // pred_check_branch
      %1135 = sbr.rel (0) target = $region21
    $region20: #{dgi_forward.7} parent=1 // pred_region
      %1136 = dma.done [#allocation3], 16
    $region21: #{dgi_forward.7} parent=1 // pred_fallthru
      _
    %1137 = sfence
    %1138 = vsyncpa [#allocation3], 1

</llo_original>
